<compile_context>
chip_gen: v5e
topology: v5e:2x2
jax: 0.10.0
libtpu: 0.0.40
codegen_flags: <defaults>
</compile_context>

<pallas_src>
from functools import partial

import numpy as np
import jax
import jax.numpy as jnp
from jax.experimental import pallas as pl
from jax.experimental.pallas import tpu as pltpu


# ------------------------------------------------------------------ helpers
def _ln_rows(x, g, b, eps=1e-5):
    """LayerNorm over the last (lane) axis; g/b are (1, C) rows."""
    mu = jnp.mean(x, axis=-1, keepdims=True)
    xc = x - mu
    var = jnp.mean(xc * xc, axis=-1, keepdims=True)
    return xc * jax.lax.rsqrt(var + eps) * g + b


def _ln_cols(x, g, b, eps=1e-5):
    """LayerNorm over the first (sublane) axis; g/b are (C, 1) columns."""
    mu = jnp.mean(x, axis=0, keepdims=True)
    xc = x - mu
    var = jnp.mean(xc * xc, axis=0, keepdims=True)
    return xc * jax.lax.rsqrt(var + eps) * g + b


def _gelu(x):
    # TODO(synk): PyTorch nn.GELU() is the exact erf form; the tanh approximation is
    # used here (max abs err ~1e-3) to stay on ops with guaranteed Mosaic lowering.
    return jax.nn.gelu(x, approximate=True)


# ------------------------------------------------------------------ fused kernel
def _context_aggregator_kernel(
        x_ref, posd_ref, wa_ref, ba_ref, pose_ref, lnr_ref, lnc_ref,
        wqkvT_ref, msel_ref, repT_ref, renc_ref, pmat_ref,
        woTe_ref, boe_ref, w1Te_ref, b1e_ref, w2Te_ref, b2e_ref,
        wq_expT_ref, wkv_expT_ref, wgoT_ref, bod_ref,
        w1d_ref, b1d_ref, w2d_ref, b2d_ref,
        o_ref, *, bblk):
    f32, bf16 = jnp.float32, jnp.bfloat16
    HW = posd_ref.shape[1]
    E, L = repT_ref.shape                     # E = heads * token_len (=32), L = token_len

    # LayerNorm params: rows for (L, C) tensors, columns for channel-major (C, N).
    lnr = lnr_ref[...]
    g1, b1 = lnr[0:1, :], lnr[1:2, :]
    g2, b2 = lnr[2:3, :], lnr[3:4, :]
    gdr, bdr = lnr[4:5, :], lnr[5:6, :]       # shared PreNorm2 LN (memory tokens)
    lnc = lnc_ref[...]
    gdc, bdc = lnc[:, 0:1], lnc[:, 1:2]       # shared PreNorm2 LN (query stream)
    gfc, bfc = lnc[:, 2:3], lnc[:, 3:4]       # decoder FF LN

    msel = msel_ref[...]                      # (E, inner_e): head-block column mask
    repT = repT_ref[...]                      # (E, L):       row-replication / %L selector
    renc = renc_ref[...]                      # (L, E):       row gather (p % L == i)
    pmat = pmat_ref[...]                      # (E, E):       same-head block mask / group-sum
    posd = posd_ref[...]                      # (C, HW)

    # -------- token_encoder for one sample: returns decoder k/v columns (E, 1)
    def encode(x_chw):
        xb = x_chw.astype(bf16)
        # conv1x1 -> spatial softmax -> token pooling
        sa = jnp.dot(wa_ref[...], xb, preferred_element_type=f32) + ba_ref[...]      # (L, HW)
        sa = jnp.exp(sa - jnp.max(sa, axis=-1, keepdims=True))
        sa = sa * pl.reciprocal(jnp.sum(sa, axis=-1, keepdims=True), approx=True)
        tokens = jax.lax.dot_general(sa.astype(bf16), xb, (((1,), (1,)), ((), ())),
                                     preferred_element_type=f32) + pose_ref[...]     # (L, C)

        # pre-norm MHSA, heads flattened to one (E, inner) problem (scale folded in Wq)
        t1 = _ln_rows(tokens, g1, b1)
        qkv = jnp.dot(t1.astype(bf16), wqkvT_ref[...], preferred_element_type=f32)   # (L, 3*inner)
        inner = qkv.shape[-1] // 3
        q, k, v = qkv[:, :inner], qkv[:, inner:2 * inner], qkv[:, 2 * inner:]
        qrep = jnp.dot(repT, q, preferred_element_type=f32) * msel                   # (E, inner)
        krep = jnp.dot(repT, k, preferred_element_type=f32)                          # (E, inner)
        dots = jax.lax.dot_general(qrep.astype(bf16), krep.astype(bf16),
                                   (((1,), (1,)), ((), ())),
                                   preferred_element_type=f32)                       # (E, E)
        e = jnp.exp(dots - jnp.max(dots, axis=-1, keepdims=True)) * pmat             # block mask
        attn = e * pl.reciprocal(jnp.sum(e, axis=-1, keepdims=True), approx=True)
        asml = jax.lax.dot_general(attn, renc, (((1,), (1,)), ((), ())),
                                   preferred_element_type=f32)                       # (E, L)
        orep = jnp.dot(asml, v, preferred_element_type=f32)                          # (E, inner)
        y = jnp.dot(renc, orep * msel, preferred_element_type=f32)                   # (L, inner)
        y = jnp.dot(y.astype(bf16), woTe_ref[...], preferred_element_type=f32) + boe_ref[...]
        tokens = tokens + y

        # pre-norm FF + residual
        t2 = _ln_rows(tokens, g2, b2)
        h = _gelu(jnp.dot(t2.astype(bf16), w1Te_ref[...],
                          preferred_element_type=f32) + b1e_ref[...])
        tokens = tokens + jnp.dot(h.astype(bf16), w2Te_ref[...],
                                  preferred_element_type=f32) + b2e_ref[...]

        # decoder memory: shared PreNorm2 LN, flattened per-(head, token) k/v columns
        mn = _ln_rows(tokens, gdr, bdr)                                              # (L, C)
        kvT = jax.lax.dot_general(wkv_expT_ref[...], mn.astype(bf16),
                                  (((1,), (1,)), ((), ())),
                                  preferred_element_type=f32)                        # (2E, L)
        kflat = jnp.sum(kvT[:E] * repT, axis=-1, keepdims=True)                      # (E, 1)
        vflat = jnp.sum(kvT[E:] * repT, axis=-1, keepdims=True)                      # (E, 1)
        return kflat, vflat

    # -------- per-sample encoder, then one channel-major decoder slab (C, bblk*HW)
    xs = [x_ref[i].astype(f32) for i in range(bblk)]
    kvs = [encode(xc) for xc in xs]

    if bblk == 1:
        xd = xs[0] + posd
        kflat, vflat = kvs[0]
    else:
        xd = jnp.concatenate([xc + posd for xc in xs], axis=-1)                      # (C, bblk*HW)
        kflat = jnp.concatenate([jnp.broadcast_to(kf, (E, HW)) for kf, _ in kvs], axis=-1)
        vflat = jnp.concatenate([jnp.broadcast_to(vf, (E, HW)) for _, vf in kvs], axis=-1)

    # cross-attention (channel-major; scale folded into wq_expT)
    xn = _ln_cols(xd, gdc, bdc)
    qrep = jnp.dot(wq_expT_ref[...], xn.astype(bf16), preferred_element_type=f32)    # (E, N)
    dots = qrep * kflat
    e = jnp.exp(dots - jnp.max(dots, axis=0, keepdims=True))      # global shift: exact per group
    denom = jnp.dot(pmat, e, preferred_element_type=f32)          # per-head group sums (f32)
    wv = e * vflat * pl.reciprocal(denom, approx=True)
    xd = xd + jnp.dot(wgoT_ref[...], wv.astype(bf16),
                      preferred_element_type=f32) + bod_ref[...]                      # residual

    # decoder FF (pre-norm) + residual
    xf = _ln_cols(xd, gfc, bfc)
    h = _gelu(jnp.dot(w1d_ref[...], xf.astype(bf16),
                      preferred_element_type=f32) + b1d_ref[...])                     # (mlp_d, N)
    xd = xd + jnp.dot(w2d_ref[...], h.astype(bf16),
                      preferred_element_type=f32) + b2d_ref[...]

    if bblk == 1:
        o_ref[0] = xd.astype(o_ref.dtype)
    else:
        for i in range(bblk):
            o_ref[i] = xd[:, i * HW:(i + 1) * HW].astype(o_ref.dtype)


# ------------------------------------------------------------------ wrapper
def _pick_batch_block(B, max_block=8):
    """Prefer >= 2 grid steps (v7x dual TensorCore); block up to max_block samples/step."""
    divs = [d for d in range(min(B, max_block), 0, -1) if B % d == 0]
    return next((d for d in divs if B // d >= 2), divs[0])


def context_aggregator_forward(feature, p, *, heads_enc=8, dim_head_enc=64, batch_block=None):
    """feature: (B, C, H, W) NCHW, C == in_chan.  Returns (B, C, H, W) float32."""
    B, C, H, W = feature.shape
    HW = H * W
    L = p["conv_a_w"].shape[0]               # token_len
    heads_d = p["wq_d"].shape[0]              # decoder inner dim == #heads (dim_head == 1)
    assert heads_d == heads_enc, "flattening constants are shared between encoder and decoder"
    assert p["pos_dec"].shape[-2:] == (H, W), "decoder pos-embedding must match H, W"
    assert HW % 128 == 0, "H*W must be a multiple of 128 for lane-dense blocks"
    E = heads_d * L
    inner_e = heads_enc * dim_head_enc
    f32, bf16 = jnp.float32, jnp.bfloat16

    if batch_block is None:
        batch_block = _pick_batch_block(B)
    assert B % batch_block == 0
    grid = (B // batch_block,)

    # ---------------- activations / encoder weights
    x_flat = feature.reshape(B, C, HW).astype(f32)
    posd = p["pos_dec"].reshape(C, HW).astype(f32)
    wa = p["conv_a_w"].reshape(L, C).astype(bf16)
    ba = p["conv_a_b"].reshape(L, 1).astype(f32)
    pose = p["pos_enc"].reshape(L, C).astype(f32)

    ln_rows = jnp.stack([p["ln1_g"], p["ln1_b"], p["ln2_g"], p["ln2_b"],
                         p["lnd_g"], p["lnd_b"], p["lnf_g"], p["lnf_b"]], 0).astype(f32)
    ln_cols = jnp.stack([p["lnd_g"], p["lnd_b"], p["lnf_g"], p["lnf_b"]], 1).astype(f32)

    # fold encoder attention scale (dim_head**-0.5) into the q rows of wqkv
    scale_e = float(dim_head_enc) ** -0.5
    wqkv = p["wqkv_e"].astype(f32)
    wqkv = jnp.concatenate([wqkv[:inner_e] * scale_e, wqkv[inner_e:]], axis=0)
    wqkvT = wqkv.T.astype(bf16)                                   # (C, 3*inner_e)
    woTe = p["wo_e"].T.astype(bf16)                               # (inner_e, C)
    boe = p["bo_e"].reshape(1, C).astype(f32)
    w1Te = p["w1_e"].T.astype(bf16)
    b1e = p["b1_e"].reshape(1, -1).astype(f32)
    w2Te = p["w2_e"].T.astype(bf16)
    b2e = p["b2_e"].reshape(1, C).astype(f32)

    # ---------------- host constants for the flattened-head formulations
    pg = np.arange(E)
    G = (pg[:, None] // L == np.arange(heads_d)[None, :]).astype(np.float32)    # (E, heads)
    repT = (pg[:, None] % L == np.arange(L)[None, :]).astype(np.float32)        # (E, L)
    renc = np.ascontiguousarray(repT.T)                                         # (L, E)
    pmat = G @ G.T                                                              # (E, E)
    msel = (pg[:, None] // L ==
            np.arange(inner_e)[None, :] // dim_head_enc).astype(np.float32)     # (E, inner_e)

    # ---------------- decoder weights (channel-major, scale dim**-0.5 folded into q)
    scale_d = float(C) ** -0.5                # Cross_Attention: self.scale = dim ** -0.5
    Gj = jnp.asarray(G)
    wq_expT = (Gj @ p["wq_d"].astype(f32) * scale_d).astype(bf16)                # (E, C)
    wkv_expT = jnp.concatenate([Gj @ p["wk_d"].astype(f32),
                                Gj @ p["wv_d"].astype(f32)], axis=0).astype(bf16)  # (2E, C)
    wgoT = (p["wo_d"].astype(f32) @ Gj.T).astype(bf16)                           # (C, E)
    bod = p["bo_d"].reshape(C, 1).astype(f32)
    w1d = p["w1_d"].astype(bf16)                                                 # (mlp_d, C)
    b1d = p["b1_d"].reshape(-1, 1).astype(f32)
    w2d = p["w2_d"].astype(bf16)                                                 # (C, mlp_d)
    b2d = p["b2_d"].reshape(C, 1).astype(f32)

    operands = (x_flat, posd, wa, ba, pose, ln_rows, ln_cols,
                wqkvT, jnp.asarray(msel), jnp.asarray(repT), jnp.asarray(renc), jnp.asarray(pmat),
                woTe, boe, w1Te, b1e, w2Te, b2e,
                wq_expT, wkv_expT, wgoT, bod,
                w1d, b1d, w2d, b2d)

    def fixed(a):                             # whole-array block, resident for every grid step
        return pl.BlockSpec(a.shape, lambda b: (0,) * a.ndim)

    in_specs = [pl.BlockSpec((batch_block, C, HW), lambda b: (b, 0, 0))]
    in_specs += [fixed(a) for a in operands[1:]]

    out = pl.pallas_call(
        partial(_context_aggregator_kernel, bblk=batch_block),
        out_shape=jax.ShapeDtypeStruct((B, C, HW), f32),
        grid=grid,
        in_specs=in_specs,
        out_specs=pl.BlockSpec((batch_block, C, HW), lambda b: (b, 0, 0)),
        compiler_params=pltpu.CompilerParams(dimension_semantics=("parallel",)),
    )(*operands)
    return out.reshape(B, C, H, W)


# ------------------------------------------------------------------ pure-JAX reference
def _reference_forward(feature, p, *, heads_enc=8, dim_head_enc=64):
    B, C, H, W = feature.shape
    HW = H * W
    L = p["conv_a_w"].shape[0]
    x = feature.reshape(B, C, HW).astype(jnp.float32)

    def ln(z, g, b):
        mu = z.mean(-1, keepdims=True)
        v = ((z - mu) ** 2).mean(-1, keepdims=True)
        return (z - mu) * jax.lax.rsqrt(v + 1e-5) * g + b

    # token_encoder
    sa = jnp.einsum('lc,bcn->bln', p["conv_a_w"].reshape(L, C), x) + p["conv_a_b"][None, :, None]
    sa = jax.nn.softmax(sa, axis=-1)
    tok = jnp.einsum('bln,bcn->blc', sa, x) + p["pos_enc"]
    t1 = ln(tok, p["ln1_g"], p["ln1_b"])
    qkv = jnp.einsum('blc,dc->bld', t1, p["wqkv_e"])
    inner = heads_enc * dim_head_enc
    q, k, v = qkv[..., :inner], qkv[..., inner:2 * inner], qkv[..., 2 * inner:]
    split = lambda t: t.reshape(B, L, heads_enc, dim_head_enc).transpose(0, 2, 1, 3)
    q, k, v = split(q), split(k), split(v)
    dots = jnp.einsum('bhid,bhjd->bhij', q, k) * (dim_head_enc ** -0.5)
    o = jnp.einsum('bhij,bhjd->bhid', jax.nn.softmax(dots, -1), v)
    o = o.transpose(0, 2, 1, 3).reshape(B, L, inner)
    tok = tok + jnp.einsum('bli,ci->blc', o, p["wo_e"]) + p["bo_e"]
    t2 = ln(tok, p["ln2_g"], p["ln2_b"])
    hmid = jax.nn.gelu(jnp.einsum('blc,mc->blm', t2, p["w1_e"]) + p["b1_e"], approximate=True)
    tok = tok + jnp.einsum('blm,cm->blc', hmid, p["w2_e"]) + p["b2_e"]

    # token_decoder
    xq = (x + p["pos_dec"].reshape(1, C, HW)).transpose(0, 2, 1)      # (B, HW, C)
    xn = ln(xq, p["lnd_g"], p["lnd_b"])
    mn = ln(tok, p["lnd_g"], p["lnd_b"])
    qd = jnp.einsum('bnc,hc->bnh', xn, p["wq_d"])                     # dim_head = 1
    kd = jnp.einsum('blc,hc->blh', mn, p["wk_d"])
    vd = jnp.einsum('blc,hc->blh', mn, p["wv_d"])
    dd = jnp.einsum('bnh,blh->bhnl', qd, kd) * (C ** -0.5)
    od = jnp.einsum('bhnl,blh->bnh', jax.nn.softmax(dd, -1), vd)
    xq = xq + jnp.einsum('bnh,ch->bnc', od, p["wo_d"]) + p["bo_d"]
    xf = ln(xq, p["lnf_g"], p["lnf_b"])
    hd = jax.nn.gelu(jnp.einsum('bnc,mc->bnm', xf, p["w1_d"]) + p["b1_d"], approximate=True)
    xq = xq + jnp.einsum('bnm,cm->bnc', hd, p["w2_d"]) + p["b2_d"]
    return xq.transpose(0, 2, 1).reshape(B, C, H, W)


# ------------------------------------------------------------------ params
def init_params(key, in_chan=32, size=16, token_len=4, heads_enc=8, dim_head_enc=64,
                mlp_enc=64):
    inner_e = heads_enc * dim_head_enc
    heads_d = 8
    inner_d = heads_d * 1                # dim_head=True -> 1 in the original module
    mlp_d = in_chan * 2
    ks = iter(jax.random.split(key, 32))

    def nrm(shape, s=0.1):
        return s * jax.random.normal(next(ks), shape, jnp.float32)

    ones = jnp.ones((in_chan,), jnp.float32)
    zeros = jnp.zeros((in_chan,), jnp.float32)
    return {
        # token_encoder
        "conv_a_w": nrm((token_len, in_chan, 1, 1), 0.2),
        "conv_a_b": nrm((token_len,), 0.1),
        "pos_enc": jax.random.normal(next(ks), (1, token_len, in_chan), jnp.float32),
        "ln1_g": ones, "ln1_b": zeros,
        "wqkv_e": nrm((3 * inner_e, in_chan), 0.1),
        "wo_e": nrm((in_chan, inner_e), 0.1), "bo_e": nrm((in_chan,), 0.05),
        "ln2_g": ones, "ln2_b": zeros,
        "w1_e": nrm((mlp_enc, in_chan), 0.1), "b1_e": nrm((mlp_enc,), 0.05),
        "w2_e": nrm((in_chan, mlp_enc), 0.1), "b2_e": nrm((in_chan,), 0.05),
        # token_decoder
        "pos_dec": jax.random.normal(next(ks), (1, in_chan, size, size), jnp.float32),
        "lnd_g": ones, "lnd_b": zeros,
        "wq_d": nrm((inner_d, in_chan), 0.1),
        "wk_d": nrm((inner_d, in_chan), 0.1),
        "wv_d": nrm((inner_d, in_chan), 0.1),
        "wo_d": nrm((in_chan, inner_d), 0.1), "bo_d": nrm((in_chan,), 0.05),
        "lnf_g": ones, "lnf_b": zeros,
        "w1_d": nrm((mlp_d, in_chan), 0.1), "b1_d": nrm((mlp_d,), 0.05),
        "w2_d": nrm((in_chan, mlp_d), 0.1), "b2_d": nrm((in_chan,), 0.05),
    }


# ------------------------------------------------------------------ main
if __name__ == "__main__":
    B, C, H, W = 2, 32, 16, 16            # context_aggregator(in_chan=32, size=16)
    key = jax.random.PRNGKey(0)
    kx, kp = jax.random.split(key)
    feature = jax.random.normal(kx, (B, C, H, W), jnp.float32)   # NCHW, like PyTorch
    params = init_params(kp, in_chan=C, size=H)

    out = jax.block_until_ready(context_aggregator_forward(feature, params))
    assert out.shape == (B, C, H, W)
    assert bool(jnp.all(jnp.isfinite(out)))

    # loose check vs a pure-JAX reference (bf16 matmul operands + approx reciprocal in kernel)
    ref = jax.block_until_ready(_reference_forward(feature, params))
    err = float(jnp.max(jnp.abs(out - ref)))
    assert err < 1.5e-1, f"kernel/reference mismatch: max abs err {err}"
    print("KERNEL_OK")
</pallas_src>

<mosaic_0001>
module attributes {stable_mosaic.version = 11 : i64} {
  func.func @_context_aggregator_kernel(%arg0: i32, %arg1: memref<1x32x256xf32, #tpu.memory_space<vmem>>, %arg2: memref<32x256xf32, #tpu.memory_space<vmem>>, %arg3: memref<4x32xbf16, #tpu.memory_space<vmem>>, %arg4: memref<4x1xf32, #tpu.memory_space<vmem>>, %arg5: memref<4x32xf32, #tpu.memory_space<vmem>>, %arg6: memref<8x32xf32, #tpu.memory_space<vmem>>, %arg7: memref<32x4xf32, #tpu.memory_space<vmem>>, %arg8: memref<32x1536xbf16, #tpu.memory_space<vmem>>, %arg9: memref<32x512xf32, #tpu.memory_space<vmem>>, %arg10: memref<32x4xf32, #tpu.memory_space<vmem>>, %arg11: memref<4x32xf32, #tpu.memory_space<vmem>>, %arg12: memref<32x32xf32, #tpu.memory_space<vmem>>, %arg13: memref<512x32xbf16, #tpu.memory_space<vmem>>, %arg14: memref<1x32xf32, #tpu.memory_space<vmem>>, %arg15: memref<32x64xbf16, #tpu.memory_space<vmem>>, %arg16: memref<1x64xf32, #tpu.memory_space<vmem>>, %arg17: memref<64x32xbf16, #tpu.memory_space<vmem>>, %arg18: memref<1x32xf32, #tpu.memory_space<vmem>>, %arg19: memref<32x32xbf16, #tpu.memory_space<vmem>>, %arg20: memref<64x32xbf16, #tpu.memory_space<vmem>>, %arg21: memref<32x32xbf16, #tpu.memory_space<vmem>>, %arg22: memref<32x1xf32, #tpu.memory_space<vmem>>, %arg23: memref<64x32xbf16, #tpu.memory_space<vmem>>, %arg24: memref<64x1xf32, #tpu.memory_space<vmem>>, %arg25: memref<32x64xbf16, #tpu.memory_space<vmem>>, %arg26: memref<32x1xf32, #tpu.memory_space<vmem>>, %arg27: memref<1x32x256xf32, #tpu.memory_space<vmem>>) attributes {dimension_semantics = [#tpu.dimension_semantics<parallel>], iteration_bounds = array<i64: 2>, scalar_prefetch = 0 : i64, scratch_operands = 0 : i64, tpu.core_type = #tpu.core_type<tc>, window_params = [{transform_indices = @transform_0, window_bounds = array<i64: 1, 32, 256>}, {pipeline_mode = #tpu.pipeline_mode<synchronous>, transform_indices = @transform_1, window_bounds = array<i64: 32, 256>}, {pipeline_mode = #tpu.pipeline_mode<synchronous>, transform_indices = @transform_2, window_bounds = array<i64: 4, 32>}, {pipeline_mode = #tpu.pipeline_mode<synchronous>, transform_indices = @transform_3, window_bounds = array<i64: 4, 1>}, {pipeline_mode = #tpu.pipeline_mode<synchronous>, transform_indices = @transform_4, window_bounds = array<i64: 4, 32>}, {pipeline_mode = #tpu.pipeline_mode<synchronous>, transform_indices = @transform_5, window_bounds = array<i64: 8, 32>}, {pipeline_mode = #tpu.pipeline_mode<synchronous>, transform_indices = @transform_6, window_bounds = array<i64: 32, 4>}, {pipeline_mode = #tpu.pipeline_mode<synchronous>, transform_indices = @transform_7, window_bounds = array<i64: 32, 1536>}, {pipeline_mode = #tpu.pipeline_mode<synchronous>, transform_indices = @transform_8, window_bounds = array<i64: 32, 512>}, {pipeline_mode = #tpu.pipeline_mode<synchronous>, transform_indices = @transform_9, window_bounds = array<i64: 32, 4>}, {pipeline_mode = #tpu.pipeline_mode<synchronous>, transform_indices = @transform_10, window_bounds = array<i64: 4, 32>}, {pipeline_mode = #tpu.pipeline_mode<synchronous>, transform_indices = @transform_11, window_bounds = array<i64: 32, 32>}, {pipeline_mode = #tpu.pipeline_mode<synchronous>, transform_indices = @transform_12, window_bounds = array<i64: 512, 32>}, {pipeline_mode = #tpu.pipeline_mode<synchronous>, transform_indices = @transform_13, window_bounds = array<i64: 1, 32>}, {pipeline_mode = #tpu.pipeline_mode<synchronous>, transform_indices = @transform_14, window_bounds = array<i64: 32, 64>}, {pipeline_mode = #tpu.pipeline_mode<synchronous>, transform_indices = @transform_15, window_bounds = array<i64: 1, 64>}, {pipeline_mode = #tpu.pipeline_mode<synchronous>, transform_indices = @transform_16, window_bounds = array<i64: 64, 32>}, {pipeline_mode = #tpu.pipeline_mode<synchronous>, transform_indices = @transform_17, window_bounds = array<i64: 1, 32>}, {pipeline_mode = #tpu.pipeline_mode<synchronous>, transform_indices = @transform_18, window_bounds = array<i64: 32, 32>}, {pipeline_mode = #tpu.pipeline_mode<synchronous>, transform_indices = @transform_19, window_bounds = array<i64: 64, 32>}, {pipeline_mode = #tpu.pipeline_mode<synchronous>, transform_indices = @transform_20, window_bounds = array<i64: 32, 32>}, {pipeline_mode = #tpu.pipeline_mode<synchronous>, transform_indices = @transform_21, window_bounds = array<i64: 32, 1>}, {pipeline_mode = #tpu.pipeline_mode<synchronous>, transform_indices = @transform_22, window_bounds = array<i64: 64, 32>}, {pipeline_mode = #tpu.pipeline_mode<synchronous>, transform_indices = @transform_23, window_bounds = array<i64: 64, 1>}, {pipeline_mode = #tpu.pipeline_mode<synchronous>, transform_indices = @transform_24, window_bounds = array<i64: 32, 64>}, {pipeline_mode = #tpu.pipeline_mode<synchronous>, transform_indices = @transform_25, window_bounds = array<i64: 32, 1>}, {transform_indices = @transform_26, window_bounds = array<i64: 1, 32, 256>}]} {
    %c0 = arith.constant 0 : index
    %c0_0 = arith.constant 0 : index
    %0 = vector.load %arg6[%c0, %c0_0] : memref<8x32xf32, #tpu.memory_space<vmem>>, vector<8x32xf32>
    %1 = vector.extract_strided_slice %0 {offsets = [0, 0], sizes = [1, 32], strides = [1, 1]} : vector<8x32xf32> to vector<1x32xf32>
    %2 = vector.extract_strided_slice %0 {offsets = [1, 0], sizes = [1, 32], strides = [1, 1]} : vector<8x32xf32> to vector<1x32xf32>
    %3 = vector.extract_strided_slice %0 {offsets = [2, 0], sizes = [1, 32], strides = [1, 1]} : vector<8x32xf32> to vector<1x32xf32>
    %4 = vector.extract_strided_slice %0 {offsets = [3, 0], sizes = [1, 32], strides = [1, 1]} : vector<8x32xf32> to vector<1x32xf32>
    %5 = vector.extract_strided_slice %0 {offsets = [4, 0], sizes = [1, 32], strides = [1, 1]} : vector<8x32xf32> to vector<1x32xf32>
    %6 = vector.extract_strided_slice %0 {offsets = [5, 0], sizes = [1, 32], strides = [1, 1]} : vector<8x32xf32> to vector<1x32xf32>
    %c0_1 = arith.constant 0 : index
    %c0_2 = arith.constant 0 : index
    %7 = vector.load %arg7[%c0_1, %c0_2] : memref<32x4xf32, #tpu.memory_space<vmem>>, vector<32x4xf32>
    %8 = vector.extract_strided_slice %7 {offsets = [0, 0], sizes = [32, 1], strides = [1, 1]} : vector<32x4xf32> to vector<32x1xf32>
    %9 = vector.extract_strided_slice %7 {offsets = [0, 1], sizes = [32, 1], strides = [1, 1]} : vector<32x4xf32> to vector<32x1xf32>
    %10 = vector.extract_strided_slice %7 {offsets = [0, 2], sizes = [32, 1], strides = [1, 1]} : vector<32x4xf32> to vector<32x1xf32>
    %11 = vector.extract_strided_slice %7 {offsets = [0, 3], sizes = [32, 1], strides = [1, 1]} : vector<32x4xf32> to vector<32x1xf32>
    %c0_3 = arith.constant 0 : index
    %c0_4 = arith.constant 0 : index
    %12 = vector.load %arg9[%c0_3, %c0_4] : memref<32x512xf32, #tpu.memory_space<vmem>>, vector<32x512xf32>
    %c0_5 = arith.constant 0 : index
    %c0_6 = arith.constant 0 : index
    %13 = vector.load %arg10[%c0_5, %c0_6] : memref<32x4xf32, #tpu.memory_space<vmem>>, vector<32x4xf32>
    %c0_7 = arith.constant 0 : index
    %c0_8 = arith.constant 0 : index
    %14 = vector.load %arg11[%c0_7, %c0_8] : memref<4x32xf32, #tpu.memory_space<vmem>>, vector<4x32xf32>
    %c0_9 = arith.constant 0 : index
    %c0_10 = arith.constant 0 : index
    %15 = vector.load %arg12[%c0_9, %c0_10] : memref<32x32xf32, #tpu.memory_space<vmem>>, vector<32x32xf32>
    %c0_11 = arith.constant 0 : index
    %c0_12 = arith.constant 0 : index
    %16 = vector.load %arg2[%c0_11, %c0_12] : memref<32x256xf32, #tpu.memory_space<vmem>>, vector<32x256xf32>
    %c0_13 = arith.constant 0 : index
    %c0_14 = arith.constant 0 : index
    %c0_15 = arith.constant 0 : index
    %17 = vector.load %arg1[%c0_13, %c0_14, %c0_15] : memref<1x32x256xf32, #tpu.memory_space<vmem>>, vector<1x32x256xf32>
    %18 = vector.shape_cast %17 : vector<1x32x256xf32> to vector<32x256xf32>
    %19 = arith.truncf %18 : vector<32x256xf32> to vector<32x256xbf16>
    %c0_16 = arith.constant 0 : index
    %c0_17 = arith.constant 0 : index
    %20 = vector.load %arg3[%c0_16, %c0_17] : memref<4x32xbf16, #tpu.memory_space<vmem>>, vector<4x32xbf16>
    %cst = arith.constant dense<0.000000e+00> : vector<4x256xf32>
    %21 = tpu.matmul %20, %19, %cst {dimension_numbers = #tpu.dot_dimension_numbers<[1], [0], [0], [1], [0, 0, 1, 1], [], []>} : vector<4x32xbf16>, vector<32x256xbf16>, vector<4x256xf32> -> vector<4x256xf32>
    %c0_18 = arith.constant 0 : index
    %c0_19 = arith.constant 0 : index
    %22 = vector.load %arg4[%c0_18, %c0_19] : memref<4x1xf32, #tpu.memory_space<vmem>>, vector<4x1xf32>
    %23 = vector.broadcast %22 : vector<4x1xf32> to vector<4x256xf32>
    %24 = arith.addf %21, %23 : vector<4x256xf32>
    %cst_20 = arith.constant dense<0xFF800000> : vector<4xf32>
    %25 = vector.multi_reduction <maximumf>, %24, %cst_20 [1] : vector<4x256xf32> to vector<4xf32>
    %26 = vector.shape_cast %25 : vector<4xf32> to vector<4x1xf32>
    %27 = vector.broadcast %26 : vector<4x1xf32> to vector<4x256xf32>
    %28 = arith.subf %24, %27 : vector<4x256xf32>
    %29 = math.exp %28 : vector<4x256xf32>
    %cst_21 = arith.constant dense<0.000000e+00> : vector<4xf32>
    %30 = vector.multi_reduction <add>, %29, %cst_21 [1] : vector<4x256xf32> to vector<4xf32>
    %31 = vector.shape_cast %30 : vector<4xf32> to vector<4x1xf32>
    %32 = tpu.reciprocal %31 {approx = true} : vector<4x1xf32> -> vector<4x1xf32>
    %33 = vector.broadcast %32 : vector<4x1xf32> to vector<4x256xf32>
    %34 = arith.mulf %29, %33 : vector<4x256xf32>
    %35 = arith.truncf %34 : vector<4x256xf32> to vector<4x256xbf16>
    %cst_22 = arith.constant dense<0.000000e+00> : vector<4x32xf32>
    %36 = tpu.matmul %35, %19, %cst_22 {dimension_numbers = #tpu.dot_dimension_numbers<[1], [1], [0], [0], [0, 0, 1, 0], [], []>} : vector<4x256xbf16>, vector<32x256xbf16>, vector<4x32xf32> -> vector<4x32xf32>
    %c0_23 = arith.constant 0 : index
    %c0_24 = arith.constant 0 : index
    %37 = vector.load %arg5[%c0_23, %c0_24] : memref<4x32xf32, #tpu.memory_space<vmem>>, vector<4x32xf32>
    %38 = arith.addf %36, %37 : vector<4x32xf32>
    %cst_25 = arith.constant dense<0.000000e+00> : vector<4xf32>
    %39 = vector.multi_reduction <add>, %38, %cst_25 [1] : vector<4x32xf32> to vector<4xf32>
    %40 = vector.shape_cast %39 : vector<4xf32> to vector<4x1xf32>
    %cst_26 = arith.constant 3.200000e+01 : f32
    %41 = vector.broadcast %cst_26 : f32 to vector<4x1xf32>
    %42 = arith.divf %40, %41 : vector<4x1xf32>
    %43 = vector.broadcast %42 : vector<4x1xf32> to vector<4x32xf32>
    %44 = arith.subf %38, %43 : vector<4x32xf32>
    %45 = arith.mulf %44, %44 : vector<4x32xf32>
    %cst_27 = arith.constant dense<0.000000e+00> : vector<4xf32>
    %46 = vector.multi_reduction <add>, %45, %cst_27 [1] : vector<4x32xf32> to vector<4xf32>
    %47 = vector.shape_cast %46 : vector<4xf32> to vector<4x1xf32>
    %cst_28 = arith.constant 3.200000e+01 : f32
    %48 = vector.broadcast %cst_28 : f32 to vector<4x1xf32>
    %49 = arith.divf %47, %48 : vector<4x1xf32>
    %cst_29 = arith.constant 9.99999974E-6 : f32
    %50 = vector.broadcast %cst_29 : f32 to vector<4x1xf32>
    %51 = arith.addf %49, %50 : vector<4x1xf32>
    %52 = math.rsqrt %51 : vector<4x1xf32>
    %53 = vector.broadcast %52 : vector<4x1xf32> to vector<4x32xf32>
    %54 = arith.mulf %44, %53 : vector<4x32xf32>
    %55 = vector.broadcast %1 : vector<1x32xf32> to vector<4x32xf32>
    %56 = arith.mulf %54, %55 : vector<4x32xf32>
    %57 = vector.broadcast %2 : vector<1x32xf32> to vector<4x32xf32>
    %58 = arith.addf %56, %57 : vector<4x32xf32>
    %59 = arith.truncf %58 : vector<4x32xf32> to vector<4x32xbf16>
    %c0_30 = arith.constant 0 : index
    %c0_31 = arith.constant 0 : index
    %60 = vector.load %arg8[%c0_30, %c0_31] : memref<32x1536xbf16, #tpu.memory_space<vmem>>, vector<32x1536xbf16>
    %cst_32 = arith.constant dense<0.000000e+00> : vector<4x1536xf32>
    %61 = tpu.matmul %59, %60, %cst_32 {dimension_numbers = #tpu.dot_dimension_numbers<[1], [0], [0], [1], [0, 0, 1, 1], [], []>} : vector<4x32xbf16>, vector<32x1536xbf16>, vector<4x1536xf32> -> vector<4x1536xf32>
    %62 = vector.extract_strided_slice %61 {offsets = [0, 0], sizes = [4, 512], strides = [1, 1]} : vector<4x1536xf32> to vector<4x512xf32>
    %63 = vector.extract_strided_slice %61 {offsets = [0, 512], sizes = [4, 512], strides = [1, 1]} : vector<4x1536xf32> to vector<4x512xf32>
    %64 = vector.extract_strided_slice %61 {offsets = [0, 1024], sizes = [4, 512], strides = [1, 1]} : vector<4x1536xf32> to vector<4x512xf32>
    %cst_33 = arith.constant dense<0.000000e+00> : vector<32x512xf32>
    %65 = tpu.matmul %13, %62, %cst_33 {dimension_numbers = #tpu.dot_dimension_numbers<[1], [0], [0], [1], [0, 0, 1, 1], [], []>} : vector<32x4xf32>, vector<4x512xf32>, vector<32x512xf32> -> vector<32x512xf32>
    %66 = arith.mulf %65, %12 : vector<32x512xf32>
    %cst_34 = arith.constant dense<0.000000e+00> : vector<32x512xf32>
    %67 = tpu.matmul %13, %63, %cst_34 {dimension_numbers = #tpu.dot_dimension_numbers<[1], [0], [0], [1], [0, 0, 1, 1], [], []>} : vector<32x4xf32>, vector<4x512xf32>, vector<32x512xf32> -> vector<32x512xf32>
    %68 = arith.truncf %66 : vector<32x512xf32> to vector<32x512xbf16>
    %69 = arith.truncf %67 : vector<32x512xf32> to vector<32x512xbf16>
    %cst_35 = arith.constant dense<0.000000e+00> : vector<32x32xf32>
    %70 = tpu.matmul %68, %69, %cst_35 {dimension_numbers = #tpu.dot_dimension_numbers<[1], [1], [0], [0], [0, 0, 1, 0], [], []>} : vector<32x512xbf16>, vector<32x512xbf16>, vector<32x32xf32> -> vector<32x32xf32>
    %cst_36 = arith.constant dense<0xFF800000> : vector<32xf32>
    %71 = vector.multi_reduction <maximumf>, %70, %cst_36 [1] : vector<32x32xf32> to vector<32xf32>
    %72 = vector.shape_cast %71 : vector<32xf32> to vector<32x1xf32>
    %73 = vector.broadcast %72 : vector<32x1xf32> to vector<32x32xf32>
    %74 = arith.subf %70, %73 : vector<32x32xf32>
    %75 = math.exp %74 : vector<32x32xf32>
    %76 = arith.mulf %75, %15 : vector<32x32xf32>
    %cst_37 = arith.constant dense<0.000000e+00> : vector<32xf32>
    %77 = vector.multi_reduction <add>, %76, %cst_37 [1] : vector<32x32xf32> to vector<32xf32>
    %78 = vector.shape_cast %77 : vector<32xf32> to vector<32x1xf32>
    %79 = tpu.reciprocal %78 {approx = true} : vector<32x1xf32> -> vector<32x1xf32>
    %80 = vector.broadcast %79 : vector<32x1xf32> to vector<32x32xf32>
    %81 = arith.mulf %76, %80 : vector<32x32xf32>
    %cst_38 = arith.constant dense<0.000000e+00> : vector<32x4xf32>
    %82 = tpu.matmul %81, %14, %cst_38 {dimension_numbers = #tpu.dot_dimension_numbers<[1], [1], [0], [0], [0, 0, 1, 0], [], []>} : vector<32x32xf32>, vector<4x32xf32>, vector<32x4xf32> -> vector<32x4xf32>
    %cst_39 = arith.constant dense<0.000000e+00> : vector<32x512xf32>
    %83 = tpu.matmul %82, %64, %cst_39 {dimension_numbers = #tpu.dot_dimension_numbers<[1], [0], [0], [1], [0, 0, 1, 1], [], []>} : vector<32x4xf32>, vector<4x512xf32>, vector<32x512xf32> -> vector<32x512xf32>
    %84 = arith.mulf %83, %12 : vector<32x512xf32>
    %cst_40 = arith.constant dense<0.000000e+00> : vector<4x512xf32>
    %85 = tpu.matmul %14, %84, %cst_40 {dimension_numbers = #tpu.dot_dimension_numbers<[1], [0], [0], [1], [0, 0, 1, 1], [], []>} : vector<4x32xf32>, vector<32x512xf32>, vector<4x512xf32> -> vector<4x512xf32>
    %86 = arith.truncf %85 : vector<4x512xf32> to vector<4x512xbf16>
    %c0_41 = arith.constant 0 : index
    %c0_42 = arith.constant 0 : index
    %87 = vector.load %arg13[%c0_41, %c0_42] : memref<512x32xbf16, #tpu.memory_space<vmem>>, vector<512x32xbf16>
    %cst_43 = arith.constant dense<0.000000e+00> : vector<4x32xf32>
    %88 = tpu.matmul %86, %87, %cst_43 {dimension_numbers = #tpu.dot_dimension_numbers<[1], [0], [0], [1], [0, 0, 1, 1], [], []>} : vector<4x512xbf16>, vector<512x32xbf16>, vector<4x32xf32> -> vector<4x32xf32>
    %c0_44 = arith.constant 0 : index
    %c0_45 = arith.constant 0 : index
    %89 = vector.load %arg14[%c0_44, %c0_45] : memref<1x32xf32, #tpu.memory_space<vmem>>, vector<1x32xf32>
    %90 = vector.broadcast %89 : vector<1x32xf32> to vector<4x32xf32>
    %91 = arith.addf %88, %90 : vector<4x32xf32>
    %92 = arith.addf %38, %91 : vector<4x32xf32>
    %cst_46 = arith.constant dense<0.000000e+00> : vector<4xf32>
    %93 = vector.multi_reduction <add>, %92, %cst_46 [1] : vector<4x32xf32> to vector<4xf32>
    %94 = vector.shape_cast %93 : vector<4xf32> to vector<4x1xf32>
    %cst_47 = arith.constant 3.200000e+01 : f32
    %95 = vector.broadcast %cst_47 : f32 to vector<4x1xf32>
    %96 = arith.divf %94, %95 : vector<4x1xf32>
    %97 = vector.broadcast %96 : vector<4x1xf32> to vector<4x32xf32>
    %98 = arith.subf %92, %97 : vector<4x32xf32>
    %99 = arith.mulf %98, %98 : vector<4x32xf32>
    %cst_48 = arith.constant dense<0.000000e+00> : vector<4xf32>
    %100 = vector.multi_reduction <add>, %99, %cst_48 [1] : vector<4x32xf32> to vector<4xf32>
    %101 = vector.shape_cast %100 : vector<4xf32> to vector<4x1xf32>
    %cst_49 = arith.constant 3.200000e+01 : f32
    %102 = vector.broadcast %cst_49 : f32 to vector<4x1xf32>
    %103 = arith.divf %101, %102 : vector<4x1xf32>
    %cst_50 = arith.constant 9.99999974E-6 : f32
    %104 = vector.broadcast %cst_50 : f32 to vector<4x1xf32>
    %105 = arith.addf %103, %104 : vector<4x1xf32>
    %106 = math.rsqrt %105 : vector<4x1xf32>
    %107 = vector.broadcast %106 : vector<4x1xf32> to vector<4x32xf32>
    %108 = arith.mulf %98, %107 : vector<4x32xf32>
    %109 = vector.broadcast %3 : vector<1x32xf32> to vector<4x32xf32>
    %110 = arith.mulf %108, %109 : vector<4x32xf32>
    %111 = vector.broadcast %4 : vector<1x32xf32> to vector<4x32xf32>
    %112 = arith.addf %110, %111 : vector<4x32xf32>
    %113 = arith.truncf %112 : vector<4x32xf32> to vector<4x32xbf16>
    %c0_51 = arith.constant 0 : index
    %c0_52 = arith.constant 0 : index
    %114 = vector.load %arg15[%c0_51, %c0_52] : memref<32x64xbf16, #tpu.memory_space<vmem>>, vector<32x64xbf16>
    %cst_53 = arith.constant dense<0.000000e+00> : vector<4x64xf32>
    %115 = tpu.matmul %113, %114, %cst_53 {dimension_numbers = #tpu.dot_dimension_numbers<[1], [0], [0], [1], [0, 0, 1, 1], [], []>} : vector<4x32xbf16>, vector<32x64xbf16>, vector<4x64xf32> -> vector<4x64xf32>
    %c0_54 = arith.constant 0 : index
    %c0_55 = arith.constant 0 : index
    %116 = vector.load %arg16[%c0_54, %c0_55] : memref<1x64xf32, #tpu.memory_space<vmem>>, vector<1x64xf32>
    %117 = vector.broadcast %116 : vector<1x64xf32> to vector<4x64xf32>
    %118 = arith.addf %115, %117 : vector<4x64xf32>
    %119 = arith.mulf %118, %118 : vector<4x64xf32>
    %120 = arith.mulf %118, %119 : vector<4x64xf32>
    %cst_56 = arith.constant 4.471500e-02 : f32
    %121 = vector.broadcast %cst_56 : f32 to vector<4x64xf32>
    %122 = arith.mulf %121, %120 : vector<4x64xf32>
    %123 = arith.addf %118, %122 : vector<4x64xf32>
    %cst_57 = arith.constant 0.797884583 : f32
    %124 = vector.broadcast %cst_57 : f32 to vector<4x64xf32>
    %125 = arith.mulf %124, %123 : vector<4x64xf32>
    %126 = math.tanh %125 : vector<4x64xf32>
    %cst_58 = arith.constant 1.000000e+00 : f32
    %127 = vector.broadcast %cst_58 : f32 to vector<4x64xf32>
    %128 = arith.addf %127, %126 : vector<4x64xf32>
    %cst_59 = arith.constant 5.000000e-01 : f32
    %129 = vector.broadcast %cst_59 : f32 to vector<4x64xf32>
    %130 = arith.mulf %129, %128 : vector<4x64xf32>
    %131 = arith.mulf %118, %130 : vector<4x64xf32>
    %132 = arith.truncf %131 : vector<4x64xf32> to vector<4x64xbf16>
    %c0_60 = arith.constant 0 : index
    %c0_61 = arith.constant 0 : index
    %133 = vector.load %arg17[%c0_60, %c0_61] : memref<64x32xbf16, #tpu.memory_space<vmem>>, vector<64x32xbf16>
    %cst_62 = arith.constant dense<0.000000e+00> : vector<4x32xf32>
    %134 = tpu.matmul %132, %133, %cst_62 {dimension_numbers = #tpu.dot_dimension_numbers<[1], [0], [0], [1], [0, 0, 1, 1], [], []>} : vector<4x64xbf16>, vector<64x32xbf16>, vector<4x32xf32> -> vector<4x32xf32>
    %135 = arith.addf %92, %134 : vector<4x32xf32>
    %c0_63 = arith.constant 0 : index
    %c0_64 = arith.constant 0 : index
    %136 = vector.load %arg18[%c0_63, %c0_64] : memref<1x32xf32, #tpu.memory_space<vmem>>, vector<1x32xf32>
    %137 = vector.broadcast %136 : vector<1x32xf32> to vector<4x32xf32>
    %138 = arith.addf %135, %137 : vector<4x32xf32>
    %cst_65 = arith.constant dense<0.000000e+00> : vector<4xf32>
    %139 = vector.multi_reduction <add>, %138, %cst_65 [1] : vector<4x32xf32> to vector<4xf32>
    %140 = vector.shape_cast %139 : vector<4xf32> to vector<4x1xf32>
    %cst_66 = arith.constant 3.200000e+01 : f32
    %141 = vector.broadcast %cst_66 : f32 to vector<4x1xf32>
    %142 = arith.divf %140, %141 : vector<4x1xf32>
    %143 = vector.broadcast %142 : vector<4x1xf32> to vector<4x32xf32>
    %144 = arith.subf %138, %143 : vector<4x32xf32>
    %145 = arith.mulf %144, %144 : vector<4x32xf32>
    %cst_67 = arith.constant dense<0.000000e+00> : vector<4xf32>
    %146 = vector.multi_reduction <add>, %145, %cst_67 [1] : vector<4x32xf32> to vector<4xf32>
    %147 = vector.shape_cast %146 : vector<4xf32> to vector<4x1xf32>
    %cst_68 = arith.constant 3.200000e+01 : f32
    %148 = vector.broadcast %cst_68 : f32 to vector<4x1xf32>
    %149 = arith.divf %147, %148 : vector<4x1xf32>
    %cst_69 = arith.constant 9.99999974E-6 : f32
    %150 = vector.broadcast %cst_69 : f32 to vector<4x1xf32>
    %151 = arith.addf %149, %150 : vector<4x1xf32>
    %152 = math.rsqrt %151 : vector<4x1xf32>
    %153 = vector.broadcast %152 : vector<4x1xf32> to vector<4x32xf32>
    %154 = arith.mulf %144, %153 : vector<4x32xf32>
    %155 = vector.broadcast %5 : vector<1x32xf32> to vector<4x32xf32>
    %156 = arith.mulf %154, %155 : vector<4x32xf32>
    %157 = vector.broadcast %6 : vector<1x32xf32> to vector<4x32xf32>
    %158 = arith.addf %156, %157 : vector<4x32xf32>
    %c0_70 = arith.constant 0 : index
    %c0_71 = arith.constant 0 : index
    %159 = vector.load %arg20[%c0_70, %c0_71] : memref<64x32xbf16, #tpu.memory_space<vmem>>, vector<64x32xbf16>
    %160 = arith.truncf %158 : vector<4x32xf32> to vector<4x32xbf16>
    %cst_72 = arith.constant dense<0.000000e+00> : vector<64x4xf32>
    %161 = tpu.matmul %159, %160, %cst_72 {dimension_numbers = #tpu.dot_dimension_numbers<[1], [1], [0], [0], [0, 0, 1, 0], [], []>} : vector<64x32xbf16>, vector<4x32xbf16>, vector<64x4xf32> -> vector<64x4xf32>
    %162 = vector.extract_strided_slice %161 {offsets = [0, 0], sizes = [32, 4], strides = [1, 1]} : vector<64x4xf32> to vector<32x4xf32>
    %163 = arith.mulf %162, %13 : vector<32x4xf32>
    %cst_73 = arith.constant dense<0.000000e+00> : vector<32xf32>
    %164 = vector.multi_reduction <add>, %163, %cst_73 [1] : vector<32x4xf32> to vector<32xf32>
    %165 = vector.shape_cast %164 : vector<32xf32> to vector<32x1xf32>
    %166 = vector.extract_strided_slice %161 {offsets = [32, 0], sizes = [32, 4], strides = [1, 1]} : vector<64x4xf32> to vector<32x4xf32>
    %167 = arith.mulf %166, %13 : vector<32x4xf32>
    %cst_74 = arith.constant dense<0.000000e+00> : vector<32xf32>
    %168 = vector.multi_reduction <add>, %167, %cst_74 [1] : vector<32x4xf32> to vector<32xf32>
    %169 = vector.shape_cast %168 : vector<32xf32> to vector<32x1xf32>
    %170 = arith.addf %18, %16 : vector<32x256xf32>
    %cst_75 = arith.constant dense<0.000000e+00> : vector<256xf32>
    %171 = vector.multi_reduction <add>, %170, %cst_75 [0] : vector<32x256xf32> to vector<256xf32>
    %172 = vector.shape_cast %171 : vector<256xf32> to vector<1x256xf32>
    %cst_76 = arith.constant 3.200000e+01 : f32
    %173 = vector.broadcast %cst_76 : f32 to vector<1x256xf32>
    %174 = arith.divf %172, %173 : vector<1x256xf32>
    %175 = vector.broadcast %174 : vector<1x256xf32> to vector<32x256xf32>
    %176 = arith.subf %170, %175 : vector<32x256xf32>
    %177 = arith.mulf %176, %176 : vector<32x256xf32>
    %cst_77 = arith.constant dense<0.000000e+00> : vector<256xf32>
    %178 = vector.multi_reduction <add>, %177, %cst_77 [0] : vector<32x256xf32> to vector<256xf32>
    %179 = vector.shape_cast %178 : vector<256xf32> to vector<1x256xf32>
    %cst_78 = arith.constant 3.200000e+01 : f32
    %180 = vector.broadcast %cst_78 : f32 to vector<1x256xf32>
    %181 = arith.divf %179, %180 : vector<1x256xf32>
    %cst_79 = arith.constant 9.99999974E-6 : f32
    %182 = vector.broadcast %cst_79 : f32 to vector<1x256xf32>
    %183 = arith.addf %181, %182 : vector<1x256xf32>
    %184 = math.rsqrt %183 : vector<1x256xf32>
    %185 = vector.broadcast %184 : vector<1x256xf32> to vector<32x256xf32>
    %186 = arith.mulf %176, %185 : vector<32x256xf32>
    %187 = vector.broadcast %8 : vector<32x1xf32> to vector<32x256xf32>
    %188 = arith.mulf %186, %187 : vector<32x256xf32>
    %189 = vector.broadcast %9 : vector<32x1xf32> to vector<32x256xf32>
    %190 = arith.addf %188, %189 : vector<32x256xf32>
    %c0_80 = arith.constant 0 : index
    %c0_81 = arith.constant 0 : index
    %191 = vector.load %arg19[%c0_80, %c0_81] : memref<32x32xbf16, #tpu.memory_space<vmem>>, vector<32x32xbf16>
    %192 = arith.truncf %190 : vector<32x256xf32> to vector<32x256xbf16>
    %cst_82 = arith.constant dense<0.000000e+00> : vector<32x256xf32>
    %193 = tpu.matmul %191, %192, %cst_82 {dimension_numbers = #tpu.dot_dimension_numbers<[1], [0], [0], [1], [0, 0, 1, 1], [], []>} : vector<32x32xbf16>, vector<32x256xbf16>, vector<32x256xf32> -> vector<32x256xf32>
    %194 = vector.broadcast %165 : vector<32x1xf32> to vector<32x256xf32>
    %195 = arith.mulf %193, %194 : vector<32x256xf32>
    %cst_83 = arith.constant dense<0xFF800000> : vector<256xf32>
    %196 = vector.multi_reduction <maximumf>, %195, %cst_83 [0] : vector<32x256xf32> to vector<256xf32>
    %197 = vector.shape_cast %196 : vector<256xf32> to vector<1x256xf32>
    %198 = vector.broadcast %197 : vector<1x256xf32> to vector<32x256xf32>
    %199 = arith.subf %195, %198 : vector<32x256xf32>
    %200 = math.exp %199 : vector<32x256xf32>
    %cst_84 = arith.constant dense<0.000000e+00> : vector<32x256xf32>
    %201 = tpu.matmul %15, %200, %cst_84 {dimension_numbers = #tpu.dot_dimension_numbers<[1], [0], [0], [1], [0, 0, 1, 1], [], []>} : vector<32x32xf32>, vector<32x256xf32>, vector<32x256xf32> -> vector<32x256xf32>
    %202 = vector.broadcast %169 : vector<32x1xf32> to vector<32x256xf32>
    %203 = arith.mulf %200, %202 : vector<32x256xf32>
    %204 = tpu.reciprocal %201 {approx = true} : vector<32x256xf32> -> vector<32x256xf32>
    %205 = arith.mulf %203, %204 : vector<32x256xf32>
    %c0_85 = arith.constant 0 : index
    %c0_86 = arith.constant 0 : index
    %206 = vector.load %arg21[%c0_85, %c0_86] : memref<32x32xbf16, #tpu.memory_space<vmem>>, vector<32x32xbf16>
    %207 = arith.truncf %205 : vector<32x256xf32> to vector<32x256xbf16>
    %cst_87 = arith.constant dense<0.000000e+00> : vector<32x256xf32>
    %208 = tpu.matmul %206, %207, %cst_87 {dimension_numbers = #tpu.dot_dimension_numbers<[1], [0], [0], [1], [0, 0, 1, 1], [], []>} : vector<32x32xbf16>, vector<32x256xbf16>, vector<32x256xf32> -> vector<32x256xf32>
    %209 = arith.addf %170, %208 : vector<32x256xf32>
    %c0_88 = arith.constant 0 : index
    %c0_89 = arith.constant 0 : index
    %210 = vector.load %arg22[%c0_88, %c0_89] : memref<32x1xf32, #tpu.memory_space<vmem>>, vector<32x1xf32>
    %211 = vector.broadcast %210 : vector<32x1xf32> to vector<32x256xf32>
    %212 = arith.addf %209, %211 : vector<32x256xf32>
    %cst_90 = arith.constant dense<0.000000e+00> : vector<256xf32>
    %213 = vector.multi_reduction <add>, %212, %cst_90 [0] : vector<32x256xf32> to vector<256xf32>
    %214 = vector.shape_cast %213 : vector<256xf32> to vector<1x256xf32>
    %cst_91 = arith.constant 3.200000e+01 : f32
    %215 = vector.broadcast %cst_91 : f32 to vector<1x256xf32>
    %216 = arith.divf %214, %215 : vector<1x256xf32>
    %217 = vector.broadcast %216 : vector<1x256xf32> to vector<32x256xf32>
    %218 = arith.subf %212, %217 : vector<32x256xf32>
    %219 = arith.mulf %218, %218 : vector<32x256xf32>
    %cst_92 = arith.constant dense<0.000000e+00> : vector<256xf32>
    %220 = vector.multi_reduction <add>, %219, %cst_92 [0] : vector<32x256xf32> to vector<256xf32>
    %221 = vector.shape_cast %220 : vector<256xf32> to vector<1x256xf32>
    %cst_93 = arith.constant 3.200000e+01 : f32
    %222 = vector.broadcast %cst_93 : f32 to vector<1x256xf32>
    %223 = arith.divf %221, %222 : vector<1x256xf32>
    %cst_94 = arith.constant 9.99999974E-6 : f32
    %224 = vector.broadcast %cst_94 : f32 to vector<1x256xf32>
    %225 = arith.addf %223, %224 : vector<1x256xf32>
    %226 = math.rsqrt %225 : vector<1x256xf32>
    %227 = vector.broadcast %226 : vector<1x256xf32> to vector<32x256xf32>
    %228 = arith.mulf %218, %227 : vector<32x256xf32>
    %229 = vector.broadcast %10 : vector<32x1xf32> to vector<32x256xf32>
    %230 = arith.mulf %228, %229 : vector<32x256xf32>
    %231 = vector.broadcast %11 : vector<32x1xf32> to vector<32x256xf32>
    %232 = arith.addf %230, %231 : vector<32x256xf32>
    %c0_95 = arith.constant 0 : index
    %c0_96 = arith.constant 0 : index
    %233 = vector.load %arg23[%c0_95, %c0_96] : memref<64x32xbf16, #tpu.memory_space<vmem>>, vector<64x32xbf16>
    %234 = arith.truncf %232 : vector<32x256xf32> to vector<32x256xbf16>
    %cst_97 = arith.constant dense<0.000000e+00> : vector<64x256xf32>
    %235 = tpu.matmul %233, %234, %cst_97 {dimension_numbers = #tpu.dot_dimension_numbers<[1], [0], [0], [1], [0, 0, 1, 1], [], []>} : vector<64x32xbf16>, vector<32x256xbf16>, vector<64x256xf32> -> vector<64x256xf32>
    %c0_98 = arith.constant 0 : index
    %c0_99 = arith.constant 0 : index
    %236 = vector.load %arg24[%c0_98, %c0_99] : memref<64x1xf32, #tpu.memory_space<vmem>>, vector<64x1xf32>
    %237 = vector.broadcast %236 : vector<64x1xf32> to vector<64x256xf32>
    %238 = arith.addf %235, %237 : vector<64x256xf32>
    %239 = arith.mulf %238, %238 : vector<64x256xf32>
    %240 = arith.mulf %238, %239 : vector<64x256xf32>
    %cst_100 = arith.constant 4.471500e-02 : f32
    %241 = vector.broadcast %cst_100 : f32 to vector<64x256xf32>
    %242 = arith.mulf %241, %240 : vector<64x256xf32>
    %243 = arith.addf %238, %242 : vector<64x256xf32>
    %cst_101 = arith.constant 0.797884583 : f32
    %244 = vector.broadcast %cst_101 : f32 to vector<64x256xf32>
    %245 = arith.mulf %244, %243 : vector<64x256xf32>
    %246 = math.tanh %245 : vector<64x256xf32>
    %cst_102 = arith.constant 1.000000e+00 : f32
    %247 = vector.broadcast %cst_102 : f32 to vector<64x256xf32>
    %248 = arith.addf %247, %246 : vector<64x256xf32>
    %cst_103 = arith.constant 5.000000e-01 : f32
    %249 = vector.broadcast %cst_103 : f32 to vector<64x256xf32>
    %250 = arith.mulf %249, %248 : vector<64x256xf32>
    %251 = arith.mulf %238, %250 : vector<64x256xf32>
    %c0_104 = arith.constant 0 : index
    %c0_105 = arith.constant 0 : index
    %252 = vector.load %arg25[%c0_104, %c0_105] : memref<32x64xbf16, #tpu.memory_space<vmem>>, vector<32x64xbf16>
    %253 = arith.truncf %251 : vector<64x256xf32> to vector<64x256xbf16>
    %cst_106 = arith.constant dense<0.000000e+00> : vector<32x256xf32>
    %254 = tpu.matmul %252, %253, %cst_106 {dimension_numbers = #tpu.dot_dimension_numbers<[1], [0], [0], [1], [0, 0, 1, 1], [], []>} : vector<32x64xbf16>, vector<64x256xbf16>, vector<32x256xf32> -> vector<32x256xf32>
    %255 = arith.addf %212, %254 : vector<32x256xf32>
    %c0_107 = arith.constant 0 : index
    %c0_108 = arith.constant 0 : index
    %256 = vector.load %arg26[%c0_107, %c0_108] : memref<32x1xf32, #tpu.memory_space<vmem>>, vector<32x1xf32>
    %257 = vector.broadcast %256 : vector<32x1xf32> to vector<32x256xf32>
    %258 = arith.addf %255, %257 : vector<32x256xf32>
    %c0_109 = arith.constant 0 : index
    %c0_110 = arith.constant 0 : index
    %c0_111 = arith.constant 0 : index
    %259 = vector.load %arg27[%c0_109, %c0_110, %c0_111] : memref<1x32x256xf32, #tpu.memory_space<vmem>>, vector<1x32x256xf32>
    %260 = vector.shape_cast %259 : vector<1x32x256xf32> to vector<32x256xf32>
    %261 = vector.shape_cast %258 : vector<32x256xf32> to vector<1x32x256xf32>
    tpu.vector_store %arg27[%c0_109, %c0_110, %c0_111], %261 {strides = array<i32>} : memref<1x32x256xf32, #tpu.memory_space<vmem>>, vector<1x32x256xf32>,
    return
  }
  func.func @transform_0(%arg0: i32) -> (i32, i32, i32) {
    %c0_i32 = arith.constant 0 : i32
    %c0_i32_0 = arith.constant 0 : i32
    %c0_i32_1 = arith.constant 0 : i32
    return %arg0, %c0_i32, %c0_i32_0 : i32, i32, i32
  }
  func.func @transform_1(%arg0: i32) -> (i32, i32) {
    %c0_i32 = arith.constant 0 : i32
    %c0_i32_0 = arith.constant 0 : i32
    %c0_i32_1 = arith.constant 0 : i32
    return %c0_i32, %c0_i32_0 : i32, i32
  }
  func.func @transform_2(%arg0: i32) -> (i32, i32) {
    %c0_i32 = arith.constant 0 : i32
    %c0_i32_0 = arith.constant 0 : i32
    %c0_i32_1 = arith.constant 0 : i32
    return %c0_i32, %c0_i32_0 : i32, i32
  }
  func.func @transform_3(%arg0: i32) -> (i32, i32) {
    %c0_i32 = arith.constant 0 : i32
    %c0_i32_0 = arith.constant 0 : i32
    %c0_i32_1 = arith.constant 0 : i32
    return %c0_i32, %c0_i32_0 : i32, i32
  }
  func.func @transform_4(%arg0: i32) -> (i32, i32) {
    %c0_i32 = arith.constant 0 : i32
    %c0_i32_0 = arith.constant 0 : i32
    %c0_i32_1 = arith.constant 0 : i32
    return %c0_i32, %c0_i32_0 : i32, i32
  }
  func.func @transform_5(%arg0: i32) -> (i32, i32) {
    %c0_i32 = arith.constant 0 : i32
    %c0_i32_0 = arith.constant 0 : i32
    %c0_i32_1 = arith.constant 0 : i32
    return %c0_i32, %c0_i32_0 : i32, i32
  }
  func.func @transform_6(%arg0: i32) -> (i32, i32) {
    %c0_i32 = arith.constant 0 : i32
    %c0_i32_0 = arith.constant 0 : i32
    %c0_i32_1 = arith.constant 0 : i32
    return %c0_i32, %c0_i32_0 : i32, i32
  }
  func.func @transform_7(%arg0: i32) -> (i32, i32) {
    %c0_i32 = arith.constant 0 : i32
    %c0_i32_0 = arith.constant 0 : i32
    %c0_i32_1 = arith.constant 0 : i32
    return %c0_i32, %c0_i32_0 : i32, i32
  }
  func.func @transform_8(%arg0: i32) -> (i32, i32) {
    %c0_i32 = arith.constant 0 : i32
    %c0_i32_0 = arith.constant 0 : i32
    %c0_i32_1 = arith.constant 0 : i32
    return %c0_i32, %c0_i32_0 : i32, i32
  }
  func.func @transform_9(%arg0: i32) -> (i32, i32) {
    %c0_i32 = arith.constant 0 : i32
    %c0_i32_0 = arith.constant 0 : i32
    %c0_i32_1 = arith.constant 0 : i32
    return %c0_i32, %c0_i32_0 : i32, i32
  }
  func.func @transform_10(%arg0: i32) -> (i32, i32) {
    %c0_i32 = arith.constant 0 : i32
    %c0_i32_0 = arith.constant 0 : i32
    %c0_i32_1 = arith.constant 0 : i32
    return %c0_i32, %c0_i32_0 : i32, i32
  }
  func.func @transform_11(%arg0: i32) -> (i32, i32) {
    %c0_i32 = arith.constant 0 : i32
    %c0_i32_0 = arith.constant 0 : i32
    %c0_i32_1 = arith.constant 0 : i32
    return %c0_i32, %c0_i32_0 : i32, i32
  }
  func.func @transform_12(%arg0: i32) -> (i32, i32) {
    %c0_i32 = arith.constant 0 : i32
    %c0_i32_0 = arith.constant 0 : i32
    %c0_i32_1 = arith.constant 0 : i32
    return %c0_i32, %c0_i32_0 : i32, i32
  }
  func.func @transform_13(%arg0: i32) -> (i32, i32) {
    %c0_i32 = arith.constant 0 : i32
    %c0_i32_0 = arith.constant 0 : i32
    %c0_i32_1 = arith.constant 0 : i32
    return %c0_i32, %c0_i32_0 : i32, i32
  }
  func.func @transform_14(%arg0: i32) -> (i32, i32) {
    %c0_i32 = arith.constant 0 : i32
    %c0_i32_0 = arith.constant 0 : i32
    %c0_i32_1 = arith.constant 0 : i32
    return %c0_i32, %c0_i32_0 : i32, i32
  }
  func.func @transform_15(%arg0: i32) -> (i32, i32) {
    %c0_i32 = arith.constant 0 : i32
    %c0_i32_0 = arith.constant 0 : i32
    %c0_i32_1 = arith.constant 0 : i32
    return %c0_i32, %c0_i32_0 : i32, i32
  }
  func.func @transform_16(%arg0: i32) -> (i32, i32) {
    %c0_i32 = arith.constant 0 : i32
    %c0_i32_0 = arith.constant 0 : i32
    %c0_i32_1 = arith.constant 0 : i32
    return %c0_i32, %c0_i32_0 : i32, i32
  }
  func.func @transform_17(%arg0: i32) -> (i32, i32) {
    %c0_i32 = arith.constant 0 : i32
    %c0_i32_0 = arith.constant 0 : i32
    %c0_i32_1 = arith.constant 0 : i32
    return %c0_i32, %c0_i32_0 : i32, i32
  }
  func.func @transform_18(%arg0: i32) -> (i32, i32) {
    %c0_i32 = arith.constant 0 : i32
    %c0_i32_0 = arith.constant 0 : i32
    %c0_i32_1 = arith.constant 0 : i32
    return %c0_i32, %c0_i32_0 : i32, i32
  }
  func.func @transform_19(%arg0: i32) -> (i32, i32) {
    %c0_i32 = arith.constant 0 : i32
    %c0_i32_0 = arith.constant 0 : i32
    %c0_i32_1 = arith.constant 0 : i32
    return %c0_i32, %c0_i32_0 : i32, i32
  }
  func.func @transform_20(%arg0: i32) -> (i32, i32) {
    %c0_i32 = arith.constant 0 : i32
    %c0_i32_0 = arith.constant 0 : i32
    %c0_i32_1 = arith.constant 0 : i32
    return %c0_i32, %c0_i32_0 : i32, i32
  }
  func.func @transform_21(%arg0: i32) -> (i32, i32) {
    %c0_i32 = arith.constant 0 : i32
    %c0_i32_0 = arith.constant 0 : i32
    %c0_i32_1 = arith.constant 0 : i32
    return %c0_i32, %c0_i32_0 : i32, i32
  }
  func.func @transform_22(%arg0: i32) -> (i32, i32) {
    %c0_i32 = arith.constant 0 : i32
    %c0_i32_0 = arith.constant 0 : i32
    %c0_i32_1 = arith.constant 0 : i32
    return %c0_i32, %c0_i32_0 : i32, i32
  }
  func.func @transform_23(%arg0: i32) -> (i32, i32) {
    %c0_i32 = arith.constant 0 : i32
    %c0_i32_0 = arith.constant 0 : i32
    %c0_i32_1 = arith.constant 0 : i32
    return %c0_i32, %c0_i32_0 : i32, i32
  }
  func.func @transform_24(%arg0: i32) -> (i32, i32) {
    %c0_i32 = arith.constant 0 : i32
    %c0_i32_0 = arith.constant 0 : i32
    %c0_i32_1 = arith.constant 0 : i32
    return %c0_i32, %c0_i32_0 : i32, i32
  }
  func.func @transform_25(%arg0: i32) -> (i32, i32) {
    %c0_i32 = arith.constant 0 : i32
    %c0_i32_0 = arith.constant 0 : i32
    %c0_i32_1 = arith.constant 0 : i32
    return %c0_i32, %c0_i32_0 : i32, i32
  }
  func.func @transform_26(%arg0: i32) -> (i32, i32, i32) {
    %c0_i32 = arith.constant 0 : i32
    %c0_i32_0 = arith.constant 0 : i32
    %c0_i32_1 = arith.constant 0 : i32
    return %arg0, %c0_i32, %c0_i32_0 : i32, i32, i32
  }
}

</mosaic_0001>

<llo_original>
// kernel: tpu_custom_call.1
$region0: #{tpu_custom_call.1}
  #allocation0 [shape = 'u32[]', space=smem, size = 0x4, offset = 0x4, fixed_abs, tag = 'smem constant byte address 0x4 - core index']
  #allocation1 [shape = 'u32[72,128]{1,0:T(1,128)}', space=vmem, size = 0x9000, scoped, tag = 'internal scratch']
  %s0 = inlined_call_operand.vmem [shape: f32[2,32,256], index: 0, kind: input, shape index: {}]
  %s1 = inlined_call_operand.vmem [shape: f32[32,256], index: 1, kind: input, shape index: {}]
  %s2 = inlined_call_operand.vmem [shape: bf16[4,32], index: 2, kind: input, shape index: {}]
  %s3 = inlined_call_operand.vmem [shape: f32[4,1], index: 3, kind: input, shape index: {}]
  %s4 = inlined_call_operand.vmem [shape: f32[4,32], index: 4, kind: input, shape index: {}]
  %s5 = inlined_call_operand.vmem [shape: f32[8,32], index: 5, kind: input, shape index: {}]
  %s6 = inlined_call_operand.vmem [shape: f32[32,4], index: 6, kind: input, shape index: {}]
  %s7 = inlined_call_operand.vmem [shape: bf16[32,1536], index: 7, kind: input, shape index: {}]
  %s8 = inlined_call_operand.hbm [shape: f32[32,512], index: 8, kind: input, shape index: {}]
  %s9 = inlined_call_operand.vmem [shape: f32[32,4], index: 9, kind: input, shape index: {}]
  %s10 = inlined_call_operand.vmem [shape: f32[4,32], index: 10, kind: input, shape index: {}]
  %s11 = inlined_call_operand.vmem [shape: f32[32,32], index: 11, kind: input, shape index: {}]
  %s12 = inlined_call_operand.vmem [shape: bf16[512,32], index: 12, kind: input, shape index: {}]
  %s13 = inlined_call_operand.vmem [shape: f32[1,32], index: 13, kind: input, shape index: {}]
  %s14 = inlined_call_operand.vmem [shape: bf16[32,64], index: 14, kind: input, shape index: {}]
  %s15 = inlined_call_operand.vmem [shape: f32[1,64], index: 15, kind: input, shape index: {}]
  %s16 = inlined_call_operand.vmem [shape: bf16[64,32], index: 16, kind: input, shape index: {}]
  %s17 = inlined_call_operand.vmem [shape: f32[1,32], index: 17, kind: input, shape index: {}]
  %s18 = inlined_call_operand.vmem [shape: bf16[32,32], index: 18, kind: input, shape index: {}]
  %s19 = inlined_call_operand.vmem [shape: bf16[64,32], index: 19, kind: input, shape index: {}]
  %s20 = inlined_call_operand.vmem [shape: bf16[32,32], index: 20, kind: input, shape index: {}]
  %s21 = inlined_call_operand.vmem [shape: f32[32,1], index: 21, kind: input, shape index: {}]
  %s22 = inlined_call_operand.vmem [shape: bf16[64,32], index: 22, kind: input, shape index: {}]
  %s23 = inlined_call_operand.vmem [shape: f32[64,1], index: 23, kind: input, shape index: {}]
  %s24 = inlined_call_operand.vmem [shape: bf16[32,64], index: 24, kind: input, shape index: {}]
  %s25 = inlined_call_operand.vmem [shape: f32[32,1], index: 25, kind: input, shape index: {}]
  %s26 = inlined_call_operand.hbm [shape: f32[2,32,256], index: 26, kind: output, shape index: {}]
  %s27 = sld [smem:[#allocation0]]
  $region141: #{tpu_custom_call.1} parent=0
    _
  %s29 = ssub.s32 1, %s27
  %s30 = scalar_select 0, %s29, %s27
  $region1: #{tpu_custom_call.1} parent=0
    #allocation2 [shape = 'u8[65536]{0}', space=vmem, size = 0x10000, scoped, tag = 'input window, operand 8, single buffered']
    #allocation3 [shape = 's32[2]{0}', space=sflag, size = 0x8, scoped, tag = 'scoped memory for tpu_custom_call.1']
    #allocation4 [shape = 's32[2]{0}', space=sflag, size = 0x8, scoped, tag = 'scoped memory for tpu_custom_call.1']
    #allocation5 [shape = 'u8[65536]{0}', space=vmem, size = 0x10000, scoped, tag = 'output window, operand 0']
    %31 = vsyncpa [#allocation3], 0
    %32 = vsyncpa [#allocation4], 0
    %s33 = scalar_lea.sflag [#allocation4], 1
    %34 = vsyncpa %s33, 0
    loop: start=0, step=1, limit=4
    $region2: #{tpu_custom_call.1} parent=1 // loop_pre_header
      _
    $region3: #{tpu_custom_call.1} parent=1 // loop_header
      %s36 = sphi 0, %s40
      %p37 = scmp.ge.s32.totalorder %s36, 4
      %s46 = sphi 0, %s48
      %s49 = sphi 0, %s46
      %s50 = sphi 0, %s49
      %s66 = sphi 0, %s50
      %s70 = sphi 0, %s70
      %s72 = sphi 0, %s70
      %s73 = sphi 0, %s72
      %s87 = sphi 0, %s73
      %s91 = sphi 0, %s91
      %s93 = sphi 0, %s91
      %s94 = sphi 0, %s93
      %s108 = sphi 0, %s94
      %s112 = sphi 0, %s112
      %s114 = sphi 0, %s112
      %s115 = sphi 0, %s114
      %s129 = sphi 0, %s115
      %s133 = sphi 0, %s133
      %s135 = sphi 0, %s133
      %s136 = sphi 0, %s135
      %s150 = sphi 0, %s136
      %s154 = sphi 0, %s154
      %s156 = sphi 0, %s154
      %s157 = sphi 0, %s156
      %s171 = sphi 0, %s157
      %s175 = sphi 0, %s175
      %s177 = sphi 0, %s175
      %s178 = sphi 0, %s177
      %s192 = sphi 0, %s178
      %s196 = sphi 0, %s196
      %s198 = sphi 0, %s196
      %s199 = sphi 0, %s198
      %s213 = sphi 0, %s199
      %s217 = sphi 0, %s217
      %s219 = sphi 0, %s217
      %s220 = sphi 0, %s219
      %s234 = sphi 0, %s220
      %s238 = sphi 0, %s238
      %s240 = sphi 0, %s238
      %s241 = sphi 0, %s240
      %s255 = sphi 0, %s241
      %s259 = sphi 0, %s259
      %s261 = sphi 0, %s259
      %s262 = sphi 0, %s261
      %s276 = sphi 0, %s262
      %s280 = sphi 0, %s280
      %s282 = sphi 0, %s280
      %s283 = sphi 0, %s282
      %s297 = sphi 0, %s283
      %s301 = sphi 0, %s301
      %s303 = sphi 0, %s301
      %s304 = sphi 0, %s303
      %s318 = sphi 0, %s304
      %s322 = sphi 0, %s322
      %s324 = sphi 0, %s322
      %s325 = sphi 0, %s324
      %s339 = sphi 0, %s325
      %s343 = sphi 0, %s343
      %s345 = sphi 0, %s343
      %s346 = sphi 0, %s345
      %s360 = sphi 0, %s346
      %s364 = sphi 0, %s364
      %s366 = sphi 0, %s364
      %s367 = sphi 0, %s366
      %s381 = sphi 0, %s367
      %s385 = sphi 0, %s385
      %s387 = sphi 0, %s385
      %s388 = sphi 0, %s387
      %s402 = sphi 0, %s388
      %s406 = sphi 0, %s406
      %s408 = sphi 0, %s406
      %s409 = sphi 0, %s408
      %s423 = sphi 0, %s409
      %s427 = sphi 0, %s427
      %s429 = sphi 0, %s427
      %s430 = sphi 0, %s429
      %s444 = sphi 0, %s430
      %s448 = sphi 0, %s448
      %s450 = sphi 0, %s448
      %s451 = sphi 0, %s450
      %s465 = sphi 0, %s451
      %s469 = sphi 0, %s469
      %s471 = sphi 0, %s469
      %s472 = sphi 0, %s471
      %s486 = sphi 0, %s472
      %s490 = sphi 0, %s490
      %s492 = sphi 0, %s490
      %s493 = sphi 0, %s492
      %s507 = sphi 0, %s493
      %s511 = sphi 0, %s511
      %s513 = sphi 0, %s511
      %s514 = sphi 0, %s513
      %s528 = sphi 0, %s514
      %s532 = sphi 0, %s532
      %s534 = sphi 0, %s532
      %s535 = sphi 0, %s534
      %s549 = sphi 0, %s535
      %s553 = sphi 0, %s553
      %s555 = sphi 0, %s553
      %s556 = sphi 0, %s555
      %s570 = sphi 0, %s556
      %s574 = sphi 0, %s574
      %s576 = sphi 0, %s574
      %s577 = sphi 0, %s576
      %s591 = sphi 0, %s577
      %s597 = sphi 0, %s599
      %s600 = sphi 0, %s597
      %s601 = sphi 0, %s600
      %s617 = sphi 0, %s601
    $region4: #{tpu_custom_call.1} parent=1 // loop_header_branch
      %39 = sbr.rel (%p37) target = $region8
    $region5: #{tpu_custom_call.1} parent=1 // loop_body
      %s41 = ssub.s32 %s36, 1
      %s42 = ssub.s32 %s36, 2
      %s43 = sadd.s32 %s36, 1
      %s44 = ssub.s32 %s36, %s43
      %p45 = scmp.eq.s32.totalorder %s44, 0
      %s47 = sadd.s32 %s46, 1
      %s48 = scalar_select %p45, %s46, %s47
      %p51 = pneg %p45
      %p52 = scmp.eq.s32.totalorder %s36, 1
      %p53 = por %p51, %p52
      %p54 = scmp.ne.s32.totalorder %s46, %s49
      %p55 = scmp.eq.s32.totalorder %s36, 0
      %p56 = por %p54, %p55
      %p57 = scmp.ne.s32.totalorder %s46, %s49
      %p58 = scmp.eq.s32.totalorder %s41, 1
      %p59 = por %p57, %p58
      %p60 = scmp.ne.s32.totalorder %s49, %s50
      %p61 = scmp.eq.s32.totalorder %s41, 0
      %p62 = por %p60, %p61
      %p63 = scmp.ne.s32.totalorder %s49, %s50
      %p64 = scmp.eq.s32.totalorder %s42, 1
      %p65 = por %p63, %p64
      %p67 = scmp.ne.s32.totalorder %s50, %s66
      %p68 = scmp.eq.s32.totalorder %s42, 0
      %p69 = por %p67, %p68
      %s71 = sadd.s32 %s70, 1
      %p74 = scmp.eq.s32.totalorder %s36, 1
      %p75 = scmp.ne.s32.totalorder %s70, %s72
      %p76 = scmp.eq.s32.totalorder %s36, 0
      %p77 = por %p75, %p76
      %p78 = scmp.ne.s32.totalorder %s70, %s72
      %p79 = scmp.eq.s32.totalorder %s41, 1
      %p80 = por %p78, %p79
      %p81 = scmp.ne.s32.totalorder %s72, %s73
      %p82 = scmp.eq.s32.totalorder %s41, 0
      %p83 = por %p81, %p82
      %p84 = scmp.ne.s32.totalorder %s72, %s73
      %p85 = scmp.eq.s32.totalorder %s42, 1
      %p86 = por %p84, %p85
      %p88 = scmp.ne.s32.totalorder %s73, %s87
      %p89 = scmp.eq.s32.totalorder %s42, 0
      %p90 = por %p88, %p89
      %s92 = sadd.s32 %s91, 1
      %p95 = scmp.eq.s32.totalorder %s36, 1
      %p96 = scmp.ne.s32.totalorder %s91, %s93
      %p97 = scmp.eq.s32.totalorder %s36, 0
      %p98 = por %p96, %p97
      %p99 = scmp.ne.s32.totalorder %s91, %s93
      %p100 = scmp.eq.s32.totalorder %s41, 1
      %p101 = por %p99, %p100
      %p102 = scmp.ne.s32.totalorder %s93, %s94
      %p103 = scmp.eq.s32.totalorder %s41, 0
      %p104 = por %p102, %p103
      %p105 = scmp.ne.s32.totalorder %s93, %s94
      %p106 = scmp.eq.s32.totalorder %s42, 1
      %p107 = por %p105, %p106
      %p109 = scmp.ne.s32.totalorder %s94, %s108
      %p110 = scmp.eq.s32.totalorder %s42, 0
      %p111 = por %p109, %p110
      %s113 = sadd.s32 %s112, 1
      %p116 = scmp.eq.s32.totalorder %s36, 1
      %p117 = scmp.ne.s32.totalorder %s112, %s114
      %p118 = scmp.eq.s32.totalorder %s36, 0
      %p119 = por %p117, %p118
      %p120 = scmp.ne.s32.totalorder %s112, %s114
      %p121 = scmp.eq.s32.totalorder %s41, 1
      %p122 = por %p120, %p121
      %p123 = scmp.ne.s32.totalorder %s114, %s115
      %p124 = scmp.eq.s32.totalorder %s41, 0
      %p125 = por %p123, %p124
      %p126 = scmp.ne.s32.totalorder %s114, %s115
      %p127 = scmp.eq.s32.totalorder %s42, 1
      %p128 = por %p126, %p127
      %p130 = scmp.ne.s32.totalorder %s115, %s129
      %p131 = scmp.eq.s32.totalorder %s42, 0
      %p132 = por %p130, %p131
      %s134 = sadd.s32 %s133, 1
      %p137 = scmp.eq.s32.totalorder %s36, 1
      %p138 = scmp.ne.s32.totalorder %s133, %s135
      %p139 = scmp.eq.s32.totalorder %s36, 0
      %p140 = por %p138, %p139
      %p141 = scmp.ne.s32.totalorder %s133, %s135
      %p142 = scmp.eq.s32.totalorder %s41, 1
      %p143 = por %p141, %p142
      %p144 = scmp.ne.s32.totalorder %s135, %s136
      %p145 = scmp.eq.s32.totalorder %s41, 0
      %p146 = por %p144, %p145
      %p147 = scmp.ne.s32.totalorder %s135, %s136
      %p148 = scmp.eq.s32.totalorder %s42, 1
      %p149 = por %p147, %p148
      %p151 = scmp.ne.s32.totalorder %s136, %s150
      %p152 = scmp.eq.s32.totalorder %s42, 0
      %p153 = por %p151, %p152
      %s155 = sadd.s32 %s154, 1
      %p158 = scmp.eq.s32.totalorder %s36, 1
      %p159 = scmp.ne.s32.totalorder %s154, %s156
      %p160 = scmp.eq.s32.totalorder %s36, 0
      %p161 = por %p159, %p160
      %p162 = scmp.ne.s32.totalorder %s154, %s156
      %p163 = scmp.eq.s32.totalorder %s41, 1
      %p164 = por %p162, %p163
      %p165 = scmp.ne.s32.totalorder %s156, %s157
      %p166 = scmp.eq.s32.totalorder %s41, 0
      %p167 = por %p165, %p166
      %p168 = scmp.ne.s32.totalorder %s156, %s157
      %p169 = scmp.eq.s32.totalorder %s42, 1
      %p170 = por %p168, %p169
      %p172 = scmp.ne.s32.totalorder %s157, %s171
      %p173 = scmp.eq.s32.totalorder %s42, 0
      %p174 = por %p172, %p173
      %s176 = sadd.s32 %s175, 1
      %p179 = scmp.eq.s32.totalorder %s36, 1
      %p180 = scmp.ne.s32.totalorder %s175, %s177
      %p181 = scmp.eq.s32.totalorder %s36, 0
      %p182 = por %p180, %p181
      %p183 = scmp.ne.s32.totalorder %s175, %s177
      %p184 = scmp.eq.s32.totalorder %s41, 1
      %p185 = por %p183, %p184
      %p186 = scmp.ne.s32.totalorder %s177, %s178
      %p187 = scmp.eq.s32.totalorder %s41, 0
      %p188 = por %p186, %p187
      %p189 = scmp.ne.s32.totalorder %s177, %s178
      %p190 = scmp.eq.s32.totalorder %s42, 1
      %p191 = por %p189, %p190
      %p193 = scmp.ne.s32.totalorder %s178, %s192
      %p194 = scmp.eq.s32.totalorder %s42, 0
      %p195 = por %p193, %p194
      %s197 = sadd.s32 %s196, 1
      %p200 = scmp.eq.s32.totalorder %s36, 1
      %p201 = scmp.ne.s32.totalorder %s196, %s198
      %p202 = scmp.eq.s32.totalorder %s36, 0
      %p203 = por %p201, %p202
      %p204 = scmp.ne.s32.totalorder %s196, %s198
      %p205 = scmp.eq.s32.totalorder %s41, 1
      %p206 = por %p204, %p205
      %p207 = scmp.ne.s32.totalorder %s198, %s199
      %p208 = scmp.eq.s32.totalorder %s41, 0
      %p209 = por %p207, %p208
      %p210 = scmp.ne.s32.totalorder %s198, %s199
      %p211 = scmp.eq.s32.totalorder %s42, 1
      %p212 = por %p210, %p211
      %p214 = scmp.ne.s32.totalorder %s199, %s213
      %p215 = scmp.eq.s32.totalorder %s42, 0
      %p216 = por %p214, %p215
      %s218 = sadd.s32 %s217, 1
      %p221 = scmp.eq.s32.totalorder %s36, 1
      %p222 = scmp.ne.s32.totalorder %s217, %s219
      %p223 = scmp.eq.s32.totalorder %s36, 0
      %p224 = por %p222, %p223
      %p225 = scmp.ne.s32.totalorder %s217, %s219
      %p226 = scmp.eq.s32.totalorder %s41, 1
      %p227 = por %p225, %p226
      %p228 = scmp.ne.s32.totalorder %s219, %s220
      %p229 = scmp.eq.s32.totalorder %s41, 0
      %p230 = por %p228, %p229
      %p231 = scmp.ne.s32.totalorder %s219, %s220
      %p232 = scmp.eq.s32.totalorder %s42, 1
      %p233 = por %p231, %p232
      %p235 = scmp.ne.s32.totalorder %s220, %s234
      %p236 = scmp.eq.s32.totalorder %s42, 0
      %p237 = por %p235, %p236
      %s239 = sadd.s32 %s238, 1
      %p242 = scmp.eq.s32.totalorder %s36, 1
      %p243 = scmp.ne.s32.totalorder %s238, %s240
      %p244 = scmp.eq.s32.totalorder %s36, 0
      %p245 = por %p243, %p244
      %p246 = scmp.ne.s32.totalorder %s238, %s240
      %p247 = scmp.eq.s32.totalorder %s41, 1
      %p248 = por %p246, %p247
      %p249 = scmp.ne.s32.totalorder %s240, %s241
      %p250 = scmp.eq.s32.totalorder %s41, 0
      %p251 = por %p249, %p250
      %p252 = scmp.ne.s32.totalorder %s240, %s241
      %p253 = scmp.eq.s32.totalorder %s42, 1
      %p254 = por %p252, %p253
      %p256 = scmp.ne.s32.totalorder %s241, %s255
      %p257 = scmp.eq.s32.totalorder %s42, 0
      %p258 = por %p256, %p257
      %s260 = sadd.s32 %s259, 1
      %p263 = scmp.eq.s32.totalorder %s36, 1
      %p264 = scmp.ne.s32.totalorder %s259, %s261
      %p265 = scmp.eq.s32.totalorder %s36, 0
      %p266 = por %p264, %p265
      %p267 = scmp.ne.s32.totalorder %s259, %s261
      %p268 = scmp.eq.s32.totalorder %s41, 1
      %p269 = por %p267, %p268
      %p270 = scmp.ne.s32.totalorder %s261, %s262
      %p271 = scmp.eq.s32.totalorder %s41, 0
      %p272 = por %p270, %p271
      %p273 = scmp.ne.s32.totalorder %s261, %s262
      %p274 = scmp.eq.s32.totalorder %s42, 1
      %p275 = por %p273, %p274
      %p277 = scmp.ne.s32.totalorder %s262, %s276
      %p278 = scmp.eq.s32.totalorder %s42, 0
      %p279 = por %p277, %p278
      %s281 = sadd.s32 %s280, 1
      %p284 = scmp.eq.s32.totalorder %s36, 1
      %p285 = scmp.ne.s32.totalorder %s280, %s282
      %p286 = scmp.eq.s32.totalorder %s36, 0
      %p287 = por %p285, %p286
      %p288 = scmp.ne.s32.totalorder %s280, %s282
      %p289 = scmp.eq.s32.totalorder %s41, 1
      %p290 = por %p288, %p289
      %p291 = scmp.ne.s32.totalorder %s282, %s283
      %p292 = scmp.eq.s32.totalorder %s41, 0
      %p293 = por %p291, %p292
      %p294 = scmp.ne.s32.totalorder %s282, %s283
      %p295 = scmp.eq.s32.totalorder %s42, 1
      %p296 = por %p294, %p295
      %p298 = scmp.ne.s32.totalorder %s283, %s297
      %p299 = scmp.eq.s32.totalorder %s42, 0
      %p300 = por %p298, %p299
      %s302 = sadd.s32 %s301, 1
      %p305 = scmp.eq.s32.totalorder %s36, 1
      %p306 = scmp.ne.s32.totalorder %s301, %s303
      %p307 = scmp.eq.s32.totalorder %s36, 0
      %p308 = por %p306, %p307
      %p309 = scmp.ne.s32.totalorder %s301, %s303
      %p310 = scmp.eq.s32.totalorder %s41, 1
      %p311 = por %p309, %p310
      %p312 = scmp.ne.s32.totalorder %s303, %s304
      %p313 = scmp.eq.s32.totalorder %s41, 0
      %p314 = por %p312, %p313
      %p315 = scmp.ne.s32.totalorder %s303, %s304
      %p316 = scmp.eq.s32.totalorder %s42, 1
      %p317 = por %p315, %p316
      %p319 = scmp.ne.s32.totalorder %s304, %s318
      %p320 = scmp.eq.s32.totalorder %s42, 0
      %p321 = por %p319, %p320
      %s323 = sadd.s32 %s322, 1
      %p326 = scmp.eq.s32.totalorder %s36, 1
      %p327 = scmp.ne.s32.totalorder %s322, %s324
      %p328 = scmp.eq.s32.totalorder %s36, 0
      %p329 = por %p327, %p328
      %p330 = scmp.ne.s32.totalorder %s322, %s324
      %p331 = scmp.eq.s32.totalorder %s41, 1
      %p332 = por %p330, %p331
      %p333 = scmp.ne.s32.totalorder %s324, %s325
      %p334 = scmp.eq.s32.totalorder %s41, 0
      %p335 = por %p333, %p334
      %p336 = scmp.ne.s32.totalorder %s324, %s325
      %p337 = scmp.eq.s32.totalorder %s42, 1
      %p338 = por %p336, %p337
      %p340 = scmp.ne.s32.totalorder %s325, %s339
      %p341 = scmp.eq.s32.totalorder %s42, 0
      %p342 = por %p340, %p341
      %s344 = sadd.s32 %s343, 1
      %p347 = scmp.eq.s32.totalorder %s36, 1
      %p348 = scmp.ne.s32.totalorder %s343, %s345
      %p349 = scmp.eq.s32.totalorder %s36, 0
      %p350 = por %p348, %p349
      %p351 = scmp.ne.s32.totalorder %s343, %s345
      %p352 = scmp.eq.s32.totalorder %s41, 1
      %p353 = por %p351, %p352
      %p354 = scmp.ne.s32.totalorder %s345, %s346
      %p355 = scmp.eq.s32.totalorder %s41, 0
      %p356 = por %p354, %p355
      %p357 = scmp.ne.s32.totalorder %s345, %s346
      %p358 = scmp.eq.s32.totalorder %s42, 1
      %p359 = por %p357, %p358
      %p361 = scmp.ne.s32.totalorder %s346, %s360
      %p362 = scmp.eq.s32.totalorder %s42, 0
      %p363 = por %p361, %p362
      %s365 = sadd.s32 %s364, 1
      %p368 = scmp.eq.s32.totalorder %s36, 1
      %p369 = scmp.ne.s32.totalorder %s364, %s366
      %p370 = scmp.eq.s32.totalorder %s36, 0
      %p371 = por %p369, %p370
      %p372 = scmp.ne.s32.totalorder %s364, %s366
      %p373 = scmp.eq.s32.totalorder %s41, 1
      %p374 = por %p372, %p373
      %p375 = scmp.ne.s32.totalorder %s366, %s367
      %p376 = scmp.eq.s32.totalorder %s41, 0
      %p377 = por %p375, %p376
      %p378 = scmp.ne.s32.totalorder %s366, %s367
      %p379 = scmp.eq.s32.totalorder %s42, 1
      %p380 = por %p378, %p379
      %p382 = scmp.ne.s32.totalorder %s367, %s381
      %p383 = scmp.eq.s32.totalorder %s42, 0
      %p384 = por %p382, %p383
      %s386 = sadd.s32 %s385, 1
      %p389 = scmp.eq.s32.totalorder %s36, 1
      %p390 = scmp.ne.s32.totalorder %s385, %s387
      %p391 = scmp.eq.s32.totalorder %s36, 0
      %p392 = por %p390, %p391
      %p393 = scmp.ne.s32.totalorder %s385, %s387
      %p394 = scmp.eq.s32.totalorder %s41, 1
      %p395 = por %p393, %p394
      %p396 = scmp.ne.s32.totalorder %s387, %s388
      %p397 = scmp.eq.s32.totalorder %s41, 0
      %p398 = por %p396, %p397
      %p399 = scmp.ne.s32.totalorder %s387, %s388
      %p400 = scmp.eq.s32.totalorder %s42, 1
      %p401 = por %p399, %p400
      %p403 = scmp.ne.s32.totalorder %s388, %s402
      %p404 = scmp.eq.s32.totalorder %s42, 0
      %p405 = por %p403, %p404
      %s407 = sadd.s32 %s406, 1
      %p410 = scmp.eq.s32.totalorder %s36, 1
      %p411 = scmp.ne.s32.totalorder %s406, %s408
      %p412 = scmp.eq.s32.totalorder %s36, 0
      %p413 = por %p411, %p412
      %p414 = scmp.ne.s32.totalorder %s406, %s408
      %p415 = scmp.eq.s32.totalorder %s41, 1
      %p416 = por %p414, %p415
      %p417 = scmp.ne.s32.totalorder %s408, %s409
      %p418 = scmp.eq.s32.totalorder %s41, 0
      %p419 = por %p417, %p418
      %p420 = scmp.ne.s32.totalorder %s408, %s409
      %p421 = scmp.eq.s32.totalorder %s42, 1
      %p422 = por %p420, %p421
      %p424 = scmp.ne.s32.totalorder %s409, %s423
      %p425 = scmp.eq.s32.totalorder %s42, 0
      %p426 = por %p424, %p425
      %s428 = sadd.s32 %s427, 1
      %p431 = scmp.eq.s32.totalorder %s36, 1
      %p432 = scmp.ne.s32.totalorder %s427, %s429
      %p433 = scmp.eq.s32.totalorder %s36, 0
      %p434 = por %p432, %p433
      %p435 = scmp.ne.s32.totalorder %s427, %s429
      %p436 = scmp.eq.s32.totalorder %s41, 1
      %p437 = por %p435, %p436
      %p438 = scmp.ne.s32.totalorder %s429, %s430
      %p439 = scmp.eq.s32.totalorder %s41, 0
      %p440 = por %p438, %p439
      %p441 = scmp.ne.s32.totalorder %s429, %s430
      %p442 = scmp.eq.s32.totalorder %s42, 1
      %p443 = por %p441, %p442
      %p445 = scmp.ne.s32.totalorder %s430, %s444
      %p446 = scmp.eq.s32.totalorder %s42, 0
      %p447 = por %p445, %p446
      %s449 = sadd.s32 %s448, 1
      %p452 = scmp.eq.s32.totalorder %s36, 1
      %p453 = scmp.ne.s32.totalorder %s448, %s450
      %p454 = scmp.eq.s32.totalorder %s36, 0
      %p455 = por %p453, %p454
      %p456 = scmp.ne.s32.totalorder %s448, %s450
      %p457 = scmp.eq.s32.totalorder %s41, 1
      %p458 = por %p456, %p457
      %p459 = scmp.ne.s32.totalorder %s450, %s451
      %p460 = scmp.eq.s32.totalorder %s41, 0
      %p461 = por %p459, %p460
      %p462 = scmp.ne.s32.totalorder %s450, %s451
      %p463 = scmp.eq.s32.totalorder %s42, 1
      %p464 = por %p462, %p463
      %p466 = scmp.ne.s32.totalorder %s451, %s465
      %p467 = scmp.eq.s32.totalorder %s42, 0
      %p468 = por %p466, %p467
      %s470 = sadd.s32 %s469, 1
      %p473 = scmp.eq.s32.totalorder %s36, 1
      %p474 = scmp.ne.s32.totalorder %s469, %s471
      %p475 = scmp.eq.s32.totalorder %s36, 0
      %p476 = por %p474, %p475
      %p477 = scmp.ne.s32.totalorder %s469, %s471
      %p478 = scmp.eq.s32.totalorder %s41, 1
      %p479 = por %p477, %p478
      %p480 = scmp.ne.s32.totalorder %s471, %s472
      %p481 = scmp.eq.s32.totalorder %s41, 0
      %p482 = por %p480, %p481
      %p483 = scmp.ne.s32.totalorder %s471, %s472
      %p484 = scmp.eq.s32.totalorder %s42, 1
      %p485 = por %p483, %p484
      %p487 = scmp.ne.s32.totalorder %s472, %s486
      %p488 = scmp.eq.s32.totalorder %s42, 0
      %p489 = por %p487, %p488
      %s491 = sadd.s32 %s490, 1
      %p494 = scmp.eq.s32.totalorder %s36, 1
      %p495 = scmp.ne.s32.totalorder %s490, %s492
      %p496 = scmp.eq.s32.totalorder %s36, 0
      %p497 = por %p495, %p496
      %p498 = scmp.ne.s32.totalorder %s490, %s492
      %p499 = scmp.eq.s32.totalorder %s41, 1
      %p500 = por %p498, %p499
      %p501 = scmp.ne.s32.totalorder %s492, %s493
      %p502 = scmp.eq.s32.totalorder %s41, 0
      %p503 = por %p501, %p502
      %p504 = scmp.ne.s32.totalorder %s492, %s493
      %p505 = scmp.eq.s32.totalorder %s42, 1
      %p506 = por %p504, %p505
      %p508 = scmp.ne.s32.totalorder %s493, %s507
      %p509 = scmp.eq.s32.totalorder %s42, 0
      %p510 = por %p508, %p509
      %s512 = sadd.s32 %s511, 1
      %p515 = scmp.eq.s32.totalorder %s36, 1
      %p516 = scmp.ne.s32.totalorder %s511, %s513
      %p517 = scmp.eq.s32.totalorder %s36, 0
      %p518 = por %p516, %p517
      %p519 = scmp.ne.s32.totalorder %s511, %s513
      %p520 = scmp.eq.s32.totalorder %s41, 1
      %p521 = por %p519, %p520
      %p522 = scmp.ne.s32.totalorder %s513, %s514
      %p523 = scmp.eq.s32.totalorder %s41, 0
      %p524 = por %p522, %p523
      %p525 = scmp.ne.s32.totalorder %s513, %s514
      %p526 = scmp.eq.s32.totalorder %s42, 1
      %p527 = por %p525, %p526
      %p529 = scmp.ne.s32.totalorder %s514, %s528
      %p530 = scmp.eq.s32.totalorder %s42, 0
      %p531 = por %p529, %p530
      %s533 = sadd.s32 %s532, 1
      %p536 = scmp.eq.s32.totalorder %s36, 1
      %p537 = scmp.ne.s32.totalorder %s532, %s534
      %p538 = scmp.eq.s32.totalorder %s36, 0
      %p539 = por %p537, %p538
      %p540 = scmp.ne.s32.totalorder %s532, %s534
      %p541 = scmp.eq.s32.totalorder %s41, 1
      %p542 = por %p540, %p541
      %p543 = scmp.ne.s32.totalorder %s534, %s535
      %p544 = scmp.eq.s32.totalorder %s41, 0
      %p545 = por %p543, %p544
      %p546 = scmp.ne.s32.totalorder %s534, %s535
      %p547 = scmp.eq.s32.totalorder %s42, 1
      %p548 = por %p546, %p547
      %p550 = scmp.ne.s32.totalorder %s535, %s549
      %p551 = scmp.eq.s32.totalorder %s42, 0
      %p552 = por %p550, %p551
      %s554 = sadd.s32 %s553, 1
      %p557 = scmp.eq.s32.totalorder %s36, 1
      %p558 = scmp.ne.s32.totalorder %s553, %s555
      %p559 = scmp.eq.s32.totalorder %s36, 0
      %p560 = por %p558, %p559
      %p561 = scmp.ne.s32.totalorder %s553, %s555
      %p562 = scmp.eq.s32.totalorder %s41, 1
      %p563 = por %p561, %p562
      %p564 = scmp.ne.s32.totalorder %s555, %s556
      %p565 = scmp.eq.s32.totalorder %s41, 0
      %p566 = por %p564, %p565
      %p567 = scmp.ne.s32.totalorder %s555, %s556
      %p568 = scmp.eq.s32.totalorder %s42, 1
      %p569 = por %p567, %p568
      %p571 = scmp.ne.s32.totalorder %s556, %s570
      %p572 = scmp.eq.s32.totalorder %s42, 0
      %p573 = por %p571, %p572
      %s575 = sadd.s32 %s574, 1
      %p578 = scmp.eq.s32.totalorder %s36, 1
      %p579 = scmp.ne.s32.totalorder %s574, %s576
      %p580 = scmp.eq.s32.totalorder %s36, 0
      %p581 = por %p579, %p580
      %p582 = scmp.ne.s32.totalorder %s574, %s576
      %p583 = scmp.eq.s32.totalorder %s41, 1
      %p584 = por %p582, %p583
      %p585 = scmp.ne.s32.totalorder %s576, %s577
      %p586 = scmp.eq.s32.totalorder %s41, 0
      %p587 = por %p585, %p586
      %p588 = scmp.ne.s32.totalorder %s576, %s577
      %p589 = scmp.eq.s32.totalorder %s42, 1
      %p590 = por %p588, %p589
      %p592 = scmp.ne.s32.totalorder %s577, %s591
      %p593 = scmp.eq.s32.totalorder %s42, 0
      %p594 = por %p592, %p593
      %s595 = ssub.s32 %s36, %s43
      %p596 = scmp.eq.s32.totalorder %s595, 0
      %s598 = sadd.s32 %s597, 1
      %s599 = scalar_select %p596, %s597, %s598
      %p602 = pneg %p596
      %p603 = scmp.eq.s32.totalorder %s36, 1
      %p604 = por %p602, %p603
      %p605 = scmp.ne.s32.totalorder %s597, %s600
      %p606 = scmp.eq.s32.totalorder %s36, 0
      %p607 = por %p605, %p606
      %p608 = scmp.ne.s32.totalorder %s597, %s600
      %p609 = scmp.eq.s32.totalorder %s41, 1
      %p610 = por %p608, %p609
      %p611 = scmp.ne.s32.totalorder %s600, %s601
      %p612 = scmp.eq.s32.totalorder %s41, 0
      %p613 = por %p611, %p612
      %p614 = scmp.ne.s32.totalorder %s600, %s601
      %p615 = scmp.eq.s32.totalorder %s42, 1
      %p616 = por %p614, %p615
      %p618 = scmp.ne.s32.totalorder %s601, %s617
      %p619 = scmp.eq.s32.totalorder %s42, 0
      %p620 = por %p618, %p619
      %p621 = scmp.le.s32.totalorder 1, %s36
      %p622 = scmp.lt.s32.totalorder %s36, 3
      %p623 = pnand %p621, %p622
      %p624 = pneg %p623
      // Predicated region
      $region9: #{tpu_custom_call.1} parent=5 // pred_check
        _
      $region10: #{tpu_custom_call.1} parent=5 // pred_check_branch
        %626 = sbr.rel (%p623) target = $region12
      $region11: #{tpu_custom_call.1} parent=5 // pred_region
        %s627 = ssub.s32 %s36, 1
        // Predicated region
        $region13: #{tpu_custom_call.1} parent=11 // pred_check
          %p628 = pneg %p83
        $region14: #{tpu_custom_call.1} parent=11 // pred_check_branch
          %630 = sbr.rel (%p628) target = $region16
        $region15: #{tpu_custom_call.1} parent=11 // pred_region
          _
        $region16: #{tpu_custom_call.1} parent=11 // pred_fallthru
          _
        // Predicated region
        $region17: #{tpu_custom_call.1} parent=11 // pred_check
          %p631 = pneg %p104
        $region18: #{tpu_custom_call.1} parent=11 // pred_check_branch
          %633 = sbr.rel (%p631) target = $region20
        $region19: #{tpu_custom_call.1} parent=11 // pred_region
          _
        $region20: #{tpu_custom_call.1} parent=11 // pred_fallthru
          _
        // Predicated region
        $region21: #{tpu_custom_call.1} parent=11 // pred_check
          %p634 = pneg %p125
        $region22: #{tpu_custom_call.1} parent=11 // pred_check_branch
          %636 = sbr.rel (%p634) target = $region24
        $region23: #{tpu_custom_call.1} parent=11 // pred_region
          _
        $region24: #{tpu_custom_call.1} parent=11 // pred_fallthru
          _
        // Predicated region
        $region25: #{tpu_custom_call.1} parent=11 // pred_check
          %p637 = pneg %p146
        $region26: #{tpu_custom_call.1} parent=11 // pred_check_branch
          %639 = sbr.rel (%p637) target = $region28
        $region27: #{tpu_custom_call.1} parent=11 // pred_region
          _
        $region28: #{tpu_custom_call.1} parent=11 // pred_fallthru
          _
        // Predicated region
        $region29: #{tpu_custom_call.1} parent=11 // pred_check
          %p640 = pneg %p167
        $region30: #{tpu_custom_call.1} parent=11 // pred_check_branch
          %642 = sbr.rel (%p640) target = $region32
        $region31: #{tpu_custom_call.1} parent=11 // pred_region
          _
        $region32: #{tpu_custom_call.1} parent=11 // pred_fallthru
          _
        // Predicated region
        $region33: #{tpu_custom_call.1} parent=11 // pred_check
          %p643 = pneg %p188
        $region34: #{tpu_custom_call.1} parent=11 // pred_check_branch
          %645 = sbr.rel (%p643) target = $region36
        $region35: #{tpu_custom_call.1} parent=11 // pred_region
          _
        $region36: #{tpu_custom_call.1} parent=11 // pred_fallthru
          _
        // Predicated region
        $region37: #{tpu_custom_call.1} parent=11 // pred_check
          %p646 = pneg %p209
        $region38: #{tpu_custom_call.1} parent=11 // pred_check_branch
          %648 = sbr.rel (%p646) target = $region40
        $region39: #{tpu_custom_call.1} parent=11 // pred_region
          _
        $region40: #{tpu_custom_call.1} parent=11 // pred_fallthru
          _
        // Predicated region
        $region41: #{tpu_custom_call.1} parent=11 // pred_check
          %p649 = pneg %p230
        $region42: #{tpu_custom_call.1} parent=11 // pred_check_branch
          %651 = sbr.rel (%p649) target = $region44
        $region43: #{tpu_custom_call.1} parent=11 // pred_region
          %653 = vsyncadd [#allocation3], 0
          %s654 = sshll.u32 %s8, 4
          %s655 = int_to_ptr.hbm [resolvable:$true] %s654
          %s656 = sshll.u32 [#allocation2], 4
          %s657 = int_to_ptr.vmem [resolvable:$true] %s656
          %662 = dma.hbm_to_vmem [thread:$0]  %s655, 2048, %s657, [#allocation3], 512, 512, 32
        $region44: #{tpu_custom_call.1} parent=11 // pred_fallthru
          _
        // Predicated region
        $region45: #{tpu_custom_call.1} parent=11 // pred_check
          %p663 = pneg %p251
        $region46: #{tpu_custom_call.1} parent=11 // pred_check_branch
          %665 = sbr.rel (%p663) target = $region48
        $region47: #{tpu_custom_call.1} parent=11 // pred_region
          _
        $region48: #{tpu_custom_call.1} parent=11 // pred_fallthru
          _
        // Predicated region
        $region49: #{tpu_custom_call.1} parent=11 // pred_check
          %p666 = pneg %p272
        $region50: #{tpu_custom_call.1} parent=11 // pred_check_branch
          %668 = sbr.rel (%p666) target = $region52
        $region51: #{tpu_custom_call.1} parent=11 // pred_region
          _
        $region52: #{tpu_custom_call.1} parent=11 // pred_fallthru
          _
        // Predicated region
        $region53: #{tpu_custom_call.1} parent=11 // pred_check
          %p669 = pneg %p293
        $region54: #{tpu_custom_call.1} parent=11 // pred_check_branch
          %671 = sbr.rel (%p669) target = $region56
        $region55: #{tpu_custom_call.1} parent=11 // pred_region
          _
        $region56: #{tpu_custom_call.1} parent=11 // pred_fallthru
          _
        // Predicated region
        $region57: #{tpu_custom_call.1} parent=11 // pred_check
          %p672 = pneg %p314
        $region58: #{tpu_custom_call.1} parent=11 // pred_check_branch
          %674 = sbr.rel (%p672) target = $region60
        $region59: #{tpu_custom_call.1} parent=11 // pred_region
          _
        $region60: #{tpu_custom_call.1} parent=11 // pred_fallthru
          _
        // Predicated region
        $region61: #{tpu_custom_call.1} parent=11 // pred_check
          %p675 = pneg %p335
        $region62: #{tpu_custom_call.1} parent=11 // pred_check_branch
          %677 = sbr.rel (%p675) target = $region64
        $region63: #{tpu_custom_call.1} parent=11 // pred_region
          _
        $region64: #{tpu_custom_call.1} parent=11 // pred_fallthru
          _
        // Predicated region
        $region65: #{tpu_custom_call.1} parent=11 // pred_check
          %p678 = pneg %p356
        $region66: #{tpu_custom_call.1} parent=11 // pred_check_branch
          %680 = sbr.rel (%p678) target = $region68
        $region67: #{tpu_custom_call.1} parent=11 // pred_region
          _
        $region68: #{tpu_custom_call.1} parent=11 // pred_fallthru
          _
        // Predicated region
        $region69: #{tpu_custom_call.1} parent=11 // pred_check
          %p681 = pneg %p377
        $region70: #{tpu_custom_call.1} parent=11 // pred_check_branch
          %683 = sbr.rel (%p681) target = $region72
        $region71: #{tpu_custom_call.1} parent=11 // pred_region
          _
        $region72: #{tpu_custom_call.1} parent=11 // pred_fallthru
          _
        // Predicated region
        $region73: #{tpu_custom_call.1} parent=11 // pred_check
          %p684 = pneg %p398
        $region74: #{tpu_custom_call.1} parent=11 // pred_check_branch
          %686 = sbr.rel (%p684) target = $region76
        $region75: #{tpu_custom_call.1} parent=11 // pred_region
          _
        $region76: #{tpu_custom_call.1} parent=11 // pred_fallthru
          _
        // Predicated region
        $region77: #{tpu_custom_call.1} parent=11 // pred_check
          %p687 = pneg %p419
        $region78: #{tpu_custom_call.1} parent=11 // pred_check_branch
          %689 = sbr.rel (%p687) target = $region80
        $region79: #{tpu_custom_call.1} parent=11 // pred_region
          _
        $region80: #{tpu_custom_call.1} parent=11 // pred_fallthru
          _
        // Predicated region
        $region81: #{tpu_custom_call.1} parent=11 // pred_check
          %p690 = pneg %p440
        $region82: #{tpu_custom_call.1} parent=11 // pred_check_branch
          %692 = sbr.rel (%p690) target = $region84
        $region83: #{tpu_custom_call.1} parent=11 // pred_region
          _
        $region84: #{tpu_custom_call.1} parent=11 // pred_fallthru
          _
        // Predicated region
        $region85: #{tpu_custom_call.1} parent=11 // pred_check
          %p693 = pneg %p461
        $region86: #{tpu_custom_call.1} parent=11 // pred_check_branch
          %695 = sbr.rel (%p693) target = $region88
        $region87: #{tpu_custom_call.1} parent=11 // pred_region
          _
        $region88: #{tpu_custom_call.1} parent=11 // pred_fallthru
          _
        // Predicated region
        $region89: #{tpu_custom_call.1} parent=11 // pred_check
          %p696 = pneg %p482
        $region90: #{tpu_custom_call.1} parent=11 // pred_check_branch
          %698 = sbr.rel (%p696) target = $region92
        $region91: #{tpu_custom_call.1} parent=11 // pred_region
          _
        $region92: #{tpu_custom_call.1} parent=11 // pred_fallthru
          _
        // Predicated region
        $region93: #{tpu_custom_call.1} parent=11 // pred_check
          %p699 = pneg %p503
        $region94: #{tpu_custom_call.1} parent=11 // pred_check_branch
          %701 = sbr.rel (%p699) target = $region96
        $region95: #{tpu_custom_call.1} parent=11 // pred_region
          _
        $region96: #{tpu_custom_call.1} parent=11 // pred_fallthru
          _
        // Predicated region
        $region97: #{tpu_custom_call.1} parent=11 // pred_check
          %p702 = pneg %p524
        $region98: #{tpu_custom_call.1} parent=11 // pred_check_branch
          %704 = sbr.rel (%p702) target = $region100
        $region99: #{tpu_custom_call.1} parent=11 // pred_region
          _
        $region100: #{tpu_custom_call.1} parent=11 // pred_fallthru
          _
        // Predicated region
        $region101: #{tpu_custom_call.1} parent=11 // pred_check
          %p705 = pneg %p545
        $region102: #{tpu_custom_call.1} parent=11 // pred_check_branch
          %707 = sbr.rel (%p705) target = $region104
        $region103: #{tpu_custom_call.1} parent=11 // pred_region
          _
        $region104: #{tpu_custom_call.1} parent=11 // pred_fallthru
          _
        // Predicated region
        $region105: #{tpu_custom_call.1} parent=11 // pred_check
          %p708 = pneg %p566
        $region106: #{tpu_custom_call.1} parent=11 // pred_check_branch
          %710 = sbr.rel (%p708) target = $region108
        $region107: #{tpu_custom_call.1} parent=11 // pred_region
          _
        $region108: #{tpu_custom_call.1} parent=11 // pred_fallthru
          _
        // Predicated region
        $region109: #{tpu_custom_call.1} parent=11 // pred_check
          %p711 = pneg %p587
        $region110: #{tpu_custom_call.1} parent=11 // pred_check_branch
          %713 = sbr.rel (%p711) target = $region112
        $region111: #{tpu_custom_call.1} parent=11 // pred_region
          _
        $region112: #{tpu_custom_call.1} parent=11 // pred_fallthru
          _
      $region12: #{tpu_custom_call.1} parent=5 // pred_fallthru
        _
      %p714 = scmp.lt.s32.totalorder %s36, 2
      // Predicated region
      $region113: #{tpu_custom_call.1} parent=5 // pred_check
        %p715 = pneg %p714
      $region114: #{tpu_custom_call.1} parent=5 // pred_check_branch
        %717 = sbr.rel (%p715) target = $region116
      $region115: #{tpu_custom_call.1} parent=5 // pred_region
        // Predicated region
        $region117: #{tpu_custom_call.1} parent=115 // pred_check
          %p718 = pneg %p56
        $region118: #{tpu_custom_call.1} parent=115 // pred_check_branch
          %720 = sbr.rel (%p718) target = $region120
        $region119: #{tpu_custom_call.1} parent=115 // pred_region
          %p721 = scmp.lt.s32.totalorder %s36, 1
          %s722 = scalar_select %p721, %s36, 1
          %s723 = smul.addr %s722, 8
          %s724 = smul.addr %s723, 8
          %s725 = scalar_lea.vmem %s0, %s724
        $region120: #{tpu_custom_call.1} parent=115 // pred_fallthru
          _
      $region116: #{tpu_custom_call.1} parent=5 // pred_fallthru
        _
      %p726 = scmp.le.s32.totalorder 1, %s36
      %p727 = scmp.lt.s32.totalorder %s36, 3
      %p728 = pnand %p726, %p727
      %p729 = pneg %p728
      // Predicated region
      $region121: #{tpu_custom_call.1} parent=5 // pred_check
        _
      $region122: #{tpu_custom_call.1} parent=5 // pred_check_branch
        %731 = sbr.rel (%p728) target = $region124
      $region123: #{tpu_custom_call.1} parent=5 // pred_region
        %s732 = ssub.s32 %s36, 1
        // Predicated region
        $region125: #{tpu_custom_call.1} parent=123 // pred_check
          %p733 = pneg %p230
        $region126: #{tpu_custom_call.1} parent=123 // pred_check_branch
          %735 = sbr.rel (%p733) target = $region128
        $region127: #{tpu_custom_call.1} parent=123 // pred_region
          %737 = dma.done [#allocation3], 2048
        $region128: #{tpu_custom_call.1} parent=123 // pred_fallthru
          _
        %p738 = scmp.lt.s32.totalorder %s41, 1
        %s739 = scalar_select %p738, %s41, 1
        %s740 = smul.addr %s739, 8
        %s741 = smul.addr %s740, 8
        %s742 = scalar_lea.vmem %s0, %s741
        %p743 = pneg %p62
        %p744 = pneg %p59
        %p745 = pneg %p83
        %p746 = pneg %p80
        %p747 = pneg %p104
        %p748 = pneg %p101
        %p749 = pneg %p125
        %p750 = pneg %p122
        %p751 = pneg %p146
        %p752 = pneg %p143
        %p753 = pneg %p167
        %p754 = pneg %p164
        %p755 = pneg %p188
        %p756 = pneg %p185
        %p757 = pneg %p209
        %p758 = pneg %p206
        %p759 = pneg %p230
        %p760 = pneg %p227
        %p761 = pneg %p251
        %p762 = pneg %p248
        %p763 = pneg %p272
        %p764 = pneg %p269
        %p765 = pneg %p293
        %p766 = pneg %p290
        %p767 = pneg %p314
        %p768 = pneg %p311
        %p769 = pneg %p335
        %p770 = pneg %p332
        %p771 = pneg %p356
        %p772 = pneg %p353
        %p773 = pneg %p377
        %p774 = pneg %p374
        %p775 = pneg %p398
        %p776 = pneg %p395
        %p777 = pneg %p419
        %p778 = pneg %p416
        %p779 = pneg %p440
        %p780 = pneg %p437
        %p781 = pneg %p461
        %p782 = pneg %p458
        %p783 = pneg %p482
        %p784 = pneg %p479
        %p785 = pneg %p503
        %p786 = pneg %p500
        %p787 = pneg %p524
        %p788 = pneg %p521
        %p789 = pneg %p545
        %p790 = pneg %p542
        %p791 = pneg %p566
        %p792 = pneg %p563
        %p793 = pneg %p587
        %p794 = pneg %p584
        %p795 = pneg %p613
        %p796 = pneg %p610
        %s797 = sand.u32 %s600, 1
        %s798 = scalar_lea.sflag [#allocation4], %s797
        %s799 = sand.u32 %s600, 1
        %s800 = smul.addr %s799, 64
        %s801 = scalar_lea.vmem [#allocation5], %s800
        %p802 = scmp.lt.s32.totalorder %s41, 1
        %s803 = scalar_select %p802, %s41, 1
        %s804 = smul.addr %s803, 8
        %s805 = smul.addr %s804, 8
        %s806 = scalar_lea.vmem %s0, %s805
        %v808 = vld [vmem:[%s5] sm:$0xff]
        %v809 = vld [vmem:[%s6] sm:$0xff]
        %v810 = vld [vmem:[%s6 + $0x8] sm:$0xff]
        %v811 = vld [vmem:[%s6 + $0x10] sm:$0xff]
        %v812 = vld [vmem:[%s6 + $0x18] sm:$0xff]
        %v813 = vld [vmem:[#allocation2] sm:$0xff]
        %v814 = vld [vmem:[#allocation2 + $0x8] sm:$0xff]
        %v815 = vld [vmem:[#allocation2 + $0x10] sm:$0xff]
        %v816 = vld [vmem:[#allocation2 + $0x18] sm:$0xff]
        %v817 = vld [vmem:[#allocation2 + $0x20] sm:$0xff]
        %v818 = vld [vmem:[#allocation2 + $0x28] sm:$0xff]
        %v819 = vld [vmem:[#allocation2 + $0x30] sm:$0xff]
        %v820 = vld [vmem:[#allocation2 + $0x38] sm:$0xff]
        %v821 = vld [vmem:[#allocation2 + $0x40] sm:$0xff]
        %v822 = vld [vmem:[#allocation2 + $0x48] sm:$0xff]
        %v823 = vld [vmem:[#allocation2 + $0x50] sm:$0xff]
        %v824 = vld [vmem:[#allocation2 + $0x58] sm:$0xff]
        %v825 = vld [vmem:[#allocation2 + $0x60] sm:$0xff]
        %v826 = vld [vmem:[#allocation2 + $0x68] sm:$0xff]
        %v827 = vld [vmem:[#allocation2 + $0x70] sm:$0xff]
        %v828 = vld [vmem:[#allocation2 + $0x78] sm:$0xff]
        %v829 = vld [vmem:[%s9] sm:$0xff]
        %v830 = vld [vmem:[%s9 + $0x8] sm:$0xff]
        %v831 = vld [vmem:[%s9 + $0x10] sm:$0xff]
        %v832 = vld [vmem:[%s9 + $0x18] sm:$0xff]
        %v833 = vld [vmem:[%s10] sm:$0xf]
        %v834 = vld [vmem:[%s11] sm:$0xff]
        %v835 = vld [vmem:[%s11 + $0x8] sm:$0xff]
        %v836 = vld [vmem:[%s11 + $0x10] sm:$0xff]
        %v837 = vld [vmem:[%s11 + $0x18] sm:$0xff]
        %v838 = vld [vmem:[%s1] sm:$0xff]
        %v839 = vld [vmem:[%s1 + $0x8] sm:$0xff]
        %v840 = vld [vmem:[%s1 + $0x10] sm:$0xff]
        %v841 = vld [vmem:[%s1 + $0x18] sm:$0xff]
        %v842 = vld [vmem:[%s1 + $0x20] sm:$0xff]
        %v843 = vld [vmem:[%s1 + $0x28] sm:$0xff]
        %v844 = vld [vmem:[%s1 + $0x30] sm:$0xff]
        %v845 = vld [vmem:[%s1 + $0x38] sm:$0xff]
        %v846 = vld [vmem:[%s806] sm:$0xff]
        %v847 = vld [vmem:[%s806 + $0x8] sm:$0xff]
        %v848 = vld [vmem:[%s806 + $0x10] sm:$0xff]
        %v849 = vld [vmem:[%s806 + $0x18] sm:$0xff]
        %v850 = vld [vmem:[%s806 + $0x20] sm:$0xff]
        %v851 = vld [vmem:[%s806 + $0x28] sm:$0xff]
        %v852 = vld [vmem:[%s806 + $0x30] sm:$0xff]
        %v853 = vld [vmem:[%s806 + $0x38] sm:$0xff]
        %v854 = vpack.c.bf16 %v848, %v846
        %v855 = vpack.c.bf16 %v849, %v847
        %v856 = vpack.c.bf16 %v852, %v850
        %v857 = vpack.c.bf16 %v853, %v851
        %v858 = vld [vmem:[%s2] sm:$0x3]
        %v859 = vld [vmem:[%s3] sm:$0xf]
        %861 = vset.pattern.permute.xlu0 0
        %862 = vperm.xlu0 %861, %v859
        %v863 = vpop.permute.xlu0 %862
        %vm865 = vcmask 261120
        %v867 = vsel %vm865, %v858, 0
        %869 = vmatpush.bf16.msra.mxu0 0
        %870 = vmatpush.bf16.msra.mxu0 0
        %871 = vmatpush.bf16.msra.mxu0 0
        %872 = vmatpush.bf16.msra.mxu0 0
        %873 = vmatpush.bf16.msra.mxu0 0
        %874 = vmatpush.bf16.msra.mxu0 0
        %875 = vmatpush.bf16.msra.mxu0 %v856
        %876 = vmatpush.bf16.msra.mxu0 %v854
        %877 = vmatmul.bf16.gmra.mxu0 %v867
        %v878 = vpop.f32.mrf.mxu0
        %v879 = vadd.f32 %v863, %v878
        %v880 = vpop.f32.mrf.mxu0
        %881 = vdwg.mxu0
        %882 = vmatpush.bf16.msra.mxu0 0
        %883 = vmatpush.bf16.msra.mxu0 0
        %884 = vmatpush.bf16.msra.mxu0 0
        %885 = vmatpush.bf16.msra.mxu0 0
        %886 = vmatpush.bf16.msra.mxu0 0
        %887 = vmatpush.bf16.msra.mxu0 0
        %888 = vmatpush.bf16.msra.mxu0 %v857
        %889 = vmatpush.bf16.msra.mxu0 %v855
        %890 = vmatmul.bf16.gmra.mxu0 %v867
        %v891 = vpop.f32.mrf.mxu0
        %v892 = vadd.f32 %v863, %v891
        %v893 = vpop.f32.mrf.mxu0
        %894 = vdwg.mxu0
        %vm895 = vcmask 1043456
        %v896 = vsel %vm895, %v879, -inf
        %v897 = vsel %vm895, %v892, -inf
        %v898 = vmax.f32 %v896, %v897
        %899 = vmax.xlane.f32.xlu0 %v898
        %v900 = vpop.xlane.xlu0 %899
        %v901 = vsub.f32 %v879, %v900
        %v902 = vsub.f32 %v892, %v900
        %v903 = vmul.f32 %v901, 1.442695
        %v904 = vpow.pop %v903
        %v905 = vmul.f32 %v902, 1.442695
        %v906 = vpow.pop %v905
        %v907 = vsel %vm895, %v904, 0.0
        %v908 = vsel %vm895, %v906, 0.0
        %v909 = vadd.f32 %v907, %v908
        %910 = vadd.xlane.f32.xlu0 %v909
        %v911 = vpop.xlane.xlu0 %910
        %v912 = vrcp.pop %v911
        %v913 = vmul.f32 %v904, %v912
        %v914 = vmul.f32 %v906, %v912
        %v915 = vpack.c.bf16 %v913, %v913
        %v916 = vpack.c.bf16 %v914, %v914
        %v917 = vld [vmem:[%s4] sm:$0xf]
        %918 = vmatpush.bf16.xpose.msra.mxu0 0
        %919 = vmatpush.bf16.xpose.msra.mxu0 0
        %920 = vmatpush.bf16.xpose.msra.mxu0 0
        %921 = vmatpush.bf16.xpose.msra.mxu0 0
        %922 = vmatpush.bf16.xpose.msra.mxu0 0
        %923 = vmatpush.bf16.xpose.msra.mxu0 0
        %924 = vmatpush.bf16.xpose.msra.mxu0 %v856
        %925 = vmatpush.bf16.xpose.msra.mxu0 %v854
        %926 = vmatmul.bf16.gmra.mxu0 %v915
        %v927 = vpop.f32.mrf.mxu0
        %v928 = vadd.f32 %v917, %v927
        %v929 = vpop.f32.mrf.mxu0
        %930 = vdwg.mxu0
        %931 = vmatpush.bf16.xpose.msra.mxu0 0
        %932 = vmatpush.bf16.xpose.msra.mxu0 0
        %933 = vmatpush.bf16.xpose.msra.mxu0 0
        %934 = vmatpush.bf16.xpose.msra.mxu0 0
        %935 = vmatpush.bf16.xpose.msra.mxu0 0
        %936 = vmatpush.bf16.xpose.msra.mxu0 0
        %937 = vmatpush.bf16.xpose.msra.mxu0 %v857
        %938 = vmatpush.bf16.xpose.msra.mxu0 %v855
        %939 = vmatmul.bf16.gmra.mxu0 %v916
        %v940 = vpop.f32.mrf.mxu0
        %v941 = vadd.f32 %v928, %v940
        %v942 = vpop.f32.mrf.mxu0
        %943 = vdwg.mxu0
        %vm944 = vcmask 257024
        %v945 = vsel %vm944, %v941, 0.0
        %946 = vadd.xlane.f32.xlu0 %v945
        %v947 = vpop.xlane.xlu0 %946
        %v948 = vrcp.pop 32.0
        %v949 = vmul.f32 32.0, %v948
        %v950 = vsub.f32 1.0, %v949
        %v951 = vmul.f32 %v948, %v950
        %v952 = vadd.f32 %v948, %v951
        %vm953 = vweird.f32 %v948
        %v954 = vsel %vm953, %v948, %v952
        %v955 = vmul.f32 %v947, %v954
        %v956 = vsub.f32 %v941, %v955
        %v957 = vmul.f32 %v956, %v956
        %v958 = vsel %vm944, %v957, 0.0
        %959 = vadd.xlane.f32.xlu0 %v958
        %v960 = vpop.xlane.xlu0 %959
        %v961 = vmul.f32 %v960, %v954
        %v962 = vadd.f32 %v961, 1e-05
        %v963 = vrsqrt.pop %v962
        %v964 = vmul.f32 %v963, %v962
        %v965 = vmul.f32 %v964, %v963
        %v966 = vmul.f32 0.5, %v965
        %v967 = vsub.f32 1.5, %v966
        %v968 = vmul.f32 %v963, %v967
        %vm969 = vweird.f32 %v962
        %vm970 = vweird.f32 %v963
        %vm971 = vmor %vm969, %vm970
        %v972 = vsel %vm971, %v963, %v968
        %v973 = vmul.f32 %v956, %v972
        %v974 = vperm.slane %v808, 0
        %v975 = vmul.f32 %v973, %v974
        %v976 = vperm.slane %v808, 1
        %v977 = vadd.f32 %v975, %v976
        %v978 = vpack.c.bf16 %v977, %v977
        %v979 = vld [vmem:[%s7] sm:$0xff]
        %v980 = vld [vmem:[%s7 + $0x8] sm:$0xff]
        %v981 = vld [vmem:[%s7 + $0x10] sm:$0xff]
        %v982 = vld [vmem:[%s7 + $0x18] sm:$0xff]
        %v983 = vld [vmem:[%s7 + $0x20] sm:$0xff]
        %v984 = vld [vmem:[%s7 + $0x28] sm:$0xff]
        %v985 = vld [vmem:[%s7 + $0x30] sm:$0xff]
        %v986 = vld [vmem:[%s7 + $0x38] sm:$0xff]
        %v987 = vld [vmem:[%s7 + $0x40] sm:$0xff]
        %v988 = vld [vmem:[%s7 + $0x48] sm:$0xff]
        %v989 = vld [vmem:[%s7 + $0x50] sm:$0xff]
        %v990 = vld [vmem:[%s7 + $0x58] sm:$0xff]
        %v991 = vld [vmem:[%s7 + $0x60] sm:$0xff]
        %v992 = vld [vmem:[%s7 + $0x68] sm:$0xff]
        %v993 = vld [vmem:[%s7 + $0x70] sm:$0xff]
        %v994 = vld [vmem:[%s7 + $0x78] sm:$0xff]
        %v995 = vld [vmem:[%s7 + $0x80] sm:$0xff]
        %v996 = vld [vmem:[%s7 + $0x88] sm:$0xff]
        %v997 = vld [vmem:[%s7 + $0x90] sm:$0xff]
        %v998 = vld [vmem:[%s7 + $0x98] sm:$0xff]
        %v999 = vld [vmem:[%s7 + $0xa0] sm:$0xff]
        %v1000 = vld [vmem:[%s7 + $0xa8] sm:$0xff]
        %v1001 = vld [vmem:[%s7 + $0xb0] sm:$0xff]
        %v1002 = vld [vmem:[%s7 + $0xb8] sm:$0xff]
        %v1027 = vunpack.c.l.b16 %v979
        %v1028 = vunpack.c.h.b16 %v979
        %v1029 = vunpack.c.l.b16 %v980
        %v1030 = vunpack.c.h.b16 %v980
        %v1031 = vunpack.c.l.b16 %v981
        %v1032 = vunpack.c.h.b16 %v981
        %v1033 = vunpack.c.l.b16 %v982
        %v1034 = vunpack.c.h.b16 %v982
        %v1035 = vunpack.c.l.b16 %v983
        %v1036 = vunpack.c.h.b16 %v983
        %v1037 = vunpack.c.l.b16 %v984
        %v1038 = vunpack.c.h.b16 %v984
        %v1039 = vunpack.c.l.b16 %v985
        %v1040 = vunpack.c.h.b16 %v985
        %v1041 = vunpack.c.l.b16 %v986
        %v1042 = vunpack.c.h.b16 %v986
        %v1043 = vunpack.c.l.b16 %v987
        %v1044 = vunpack.c.h.b16 %v987
        %v1045 = vunpack.c.l.b16 %v988
        %v1046 = vunpack.c.h.b16 %v988
        %v1047 = vunpack.c.l.b16 %v989
        %v1048 = vunpack.c.h.b16 %v989
        %v1049 = vunpack.c.l.b16 %v990
        %v1050 = vunpack.c.h.b16 %v990
        %v1051 = vunpack.c.l.b16 %v991
        %v1052 = vunpack.c.h.b16 %v991
        %v1053 = vunpack.c.l.b16 %v992
        %v1054 = vunpack.c.h.b16 %v992
        %v1055 = vunpack.c.l.b16 %v993
        %v1056 = vunpack.c.h.b16 %v993
        %v1057 = vunpack.c.l.b16 %v994
        %v1058 = vunpack.c.h.b16 %v994
        %v1059 = vunpack.c.l.b16 %v995
        %v1060 = vunpack.c.h.b16 %v995
        %v1061 = vunpack.c.l.b16 %v996
        %v1062 = vunpack.c.h.b16 %v996
        %v1063 = vunpack.c.l.b16 %v997
        %v1064 = vunpack.c.h.b16 %v997
        %v1065 = vunpack.c.l.b16 %v998
        %v1066 = vunpack.c.h.b16 %v998
        %v1067 = vunpack.c.l.b16 %v999
        %v1068 = vunpack.c.h.b16 %v999
        %v1069 = vunpack.c.l.b16 %v1000
        %v1070 = vunpack.c.h.b16 %v1000
        %v1071 = vunpack.c.l.b16 %v1001
        %v1072 = vunpack.c.h.b16 %v1001
        %v1073 = vunpack.c.l.b16 %v1002
        %v1074 = vunpack.c.h.b16 %v1002
        %v1075 = vpack.c.b16 %v1039, %v1027
        %v1076 = vpack.c.b16 %v1040, %v1028
        %v1077 = vpack.c.b16 %v1041, %v1029
        %v1078 = vpack.c.b16 %v1042, %v1030
        %v1079 = vpack.c.b16 %v1043, %v1031
        %v1080 = vpack.c.b16 %v1044, %v1032
        %v1081 = vpack.c.b16 %v1045, %v1033
        %v1082 = vpack.c.b16 %v1046, %v1034
        %v1083 = vpack.c.b16 %v1047, %v1035
        %v1084 = vpack.c.b16 %v1048, %v1036
        %v1085 = vpack.c.b16 %v1049, %v1037
        %v1086 = vpack.c.b16 %v1050, %v1038
        %v1087 = vpack.c.b16 %v1063, %v1051
        %v1088 = vpack.c.b16 %v1064, %v1052
        %v1089 = vpack.c.b16 %v1065, %v1053
        %v1090 = vpack.c.b16 %v1066, %v1054
        %v1091 = vpack.c.b16 %v1067, %v1055
        %v1092 = vpack.c.b16 %v1068, %v1056
        %v1093 = vpack.c.b16 %v1069, %v1057
        %v1094 = vpack.c.b16 %v1070, %v1058
        %v1095 = vpack.c.b16 %v1071, %v1059
        %v1096 = vpack.c.b16 %v1072, %v1060
        %v1097 = vpack.c.b16 %v1073, %v1061
        %v1098 = vpack.c.b16 %v1074, %v1062
        %v1124 = vsel %vm865, %v978, 0
        %1126 = vmatpush.bf16.msra.mxu0 0
        %1127 = vmatpush.bf16.msra.mxu0 0
        %1128 = vmatpush.bf16.msra.mxu0 0
        %1129 = vmatpush.bf16.msra.mxu0 0
        %1130 = vmatpush.bf16.msra.mxu0 0
        %1131 = vmatpush.bf16.msra.mxu0 0
        %1132 = vmatpush.bf16.msra.mxu0 %v1087
        %1133 = vmatpush.bf16.msra.mxu0 %v1075
        %1134 = vmatmul.bf16.gmra.mxu0 %v1124
        %v1135 = vpop.f32.mrf.mxu0
        %v1136 = vadd.f32 0.0, %v1135
        %v1137 = vpop.f32.mrf.mxu0
        %1138 = vdwg.mxu0
        %1139 = vmatpush.bf16.msra.mxu0 0
        %1140 = vmatpush.bf16.msra.mxu0 0
        %1141 = vmatpush.bf16.msra.mxu0 0
        %1142 = vmatpush.bf16.msra.mxu0 0
        %1143 = vmatpush.bf16.msra.mxu0 0
        %1144 = vmatpush.bf16.msra.mxu0 0
        %1145 = vmatpush.bf16.msra.mxu0 %v1088
        %1146 = vmatpush.bf16.msra.mxu0 %v1076
        %1147 = vmatmul.bf16.gmra.mxu0 %v1124
        %v1148 = vpop.f32.mrf.mxu0
        %v1149 = vadd.f32 0.0, %v1148
        %v1150 = vpop.f32.mrf.mxu0
        %1151 = vdwg.mxu0
        %1152 = vmatpush.bf16.msra.mxu0 0
        %1153 = vmatpush.bf16.msra.mxu0 0
        %1154 = vmatpush.bf16.msra.mxu0 0
        %1155 = vmatpush.bf16.msra.mxu0 0
        %1156 = vmatpush.bf16.msra.mxu0 0
        %1157 = vmatpush.bf16.msra.mxu0 0
        %1158 = vmatpush.bf16.msra.mxu0 %v1089
        %1159 = vmatpush.bf16.msra.mxu0 %v1077
        %1160 = vmatmul.bf16.gmra.mxu0 %v1124
        %v1161 = vpop.f32.mrf.mxu0
        %v1162 = vadd.f32 0.0, %v1161
        %v1163 = vpop.f32.mrf.mxu0
        %1164 = vdwg.mxu0
        %1165 = vmatpush.bf16.msra.mxu0 0
        %1166 = vmatpush.bf16.msra.mxu0 0
        %1167 = vmatpush.bf16.msra.mxu0 0
        %1168 = vmatpush.bf16.msra.mxu0 0
        %1169 = vmatpush.bf16.msra.mxu0 0
        %1170 = vmatpush.bf16.msra.mxu0 0
        %1171 = vmatpush.bf16.msra.mxu0 %v1090
        %1172 = vmatpush.bf16.msra.mxu0 %v1078
        %1173 = vmatmul.bf16.gmra.mxu0 %v1124
        %v1174 = vpop.f32.mrf.mxu0
        %v1175 = vadd.f32 0.0, %v1174
        %v1176 = vpop.f32.mrf.mxu0
        %1177 = vdwg.mxu0
        %1178 = vmatpush.bf16.msra.mxu0 0
        %1179 = vmatpush.bf16.msra.mxu0 0
        %1180 = vmatpush.bf16.msra.mxu0 0
        %1181 = vmatpush.bf16.msra.mxu0 0
        %1182 = vmatpush.bf16.msra.mxu0 0
        %1183 = vmatpush.bf16.msra.mxu0 0
        %1184 = vmatpush.bf16.msra.mxu0 %v1091
        %1185 = vmatpush.bf16.msra.mxu0 %v1079
        %1186 = vmatmul.bf16.gmra.mxu0 %v1124
        %v1187 = vpop.f32.mrf.mxu0
        %v1188 = vadd.f32 0.0, %v1187
        %v1189 = vpop.f32.mrf.mxu0
        %1190 = vdwg.mxu0
        %1191 = vmatpush.bf16.msra.mxu0 0
        %1192 = vmatpush.bf16.msra.mxu0 0
        %1193 = vmatpush.bf16.msra.mxu0 0
        %1194 = vmatpush.bf16.msra.mxu0 0
        %1195 = vmatpush.bf16.msra.mxu0 0
        %1196 = vmatpush.bf16.msra.mxu0 0
        %1197 = vmatpush.bf16.msra.mxu0 %v1092
        %1198 = vmatpush.bf16.msra.mxu0 %v1080
        %1199 = vmatmul.bf16.gmra.mxu0 %v1124
        %v1200 = vpop.f32.mrf.mxu0
        %v1201 = vadd.f32 0.0, %v1200
        %v1202 = vpop.f32.mrf.mxu0
        %1203 = vdwg.mxu0
        %1204 = vmatpush.bf16.msra.mxu0 0
        %1205 = vmatpush.bf16.msra.mxu0 0
        %1206 = vmatpush.bf16.msra.mxu0 0
        %1207 = vmatpush.bf16.msra.mxu0 0
        %1208 = vmatpush.bf16.msra.mxu0 0
        %1209 = vmatpush.bf16.msra.mxu0 0
        %1210 = vmatpush.bf16.msra.mxu0 %v1093
        %1211 = vmatpush.bf16.msra.mxu0 %v1081
        %1212 = vmatmul.bf16.gmra.mxu0 %v1124
        %v1213 = vpop.f32.mrf.mxu0
        %v1214 = vadd.f32 0.0, %v1213
        %v1215 = vpop.f32.mrf.mxu0
        %1216 = vdwg.mxu0
        %1217 = vmatpush.bf16.msra.mxu0 0
        %1218 = vmatpush.bf16.msra.mxu0 0
        %1219 = vmatpush.bf16.msra.mxu0 0
        %1220 = vmatpush.bf16.msra.mxu0 0
        %1221 = vmatpush.bf16.msra.mxu0 0
        %1222 = vmatpush.bf16.msra.mxu0 0
        %1223 = vmatpush.bf16.msra.mxu0 %v1094
        %1224 = vmatpush.bf16.msra.mxu0 %v1082
        %1225 = vmatmul.bf16.gmra.mxu0 %v1124
        %v1226 = vpop.f32.mrf.mxu0
        %v1227 = vadd.f32 0.0, %v1226
        %v1228 = vpop.f32.mrf.mxu0
        %1229 = vdwg.mxu0
        %1230 = vmatpush.bf16.msra.mxu0 0
        %1231 = vmatpush.bf16.msra.mxu0 0
        %1232 = vmatpush.bf16.msra.mxu0 0
        %1233 = vmatpush.bf16.msra.mxu0 0
        %1234 = vmatpush.bf16.msra.mxu0 0
        %1235 = vmatpush.bf16.msra.mxu0 0
        %1236 = vmatpush.bf16.msra.mxu0 %v1095
        %1237 = vmatpush.bf16.msra.mxu0 %v1083
        %1238 = vmatmul.bf16.gmra.mxu0 %v1124
        %v1239 = vpop.f32.mrf.mxu0
        %v1240 = vadd.f32 0.0, %v1239
        %v1241 = vpop.f32.mrf.mxu0
        %1242 = vdwg.mxu0
        %1243 = vmatpush.bf16.msra.mxu0 0
        %1244 = vmatpush.bf16.msra.mxu0 0
        %1245 = vmatpush.bf16.msra.mxu0 0
        %1246 = vmatpush.bf16.msra.mxu0 0
        %1247 = vmatpush.bf16.msra.mxu0 0
        %1248 = vmatpush.bf16.msra.mxu0 0
        %1249 = vmatpush.bf16.msra.mxu0 %v1096
        %1250 = vmatpush.bf16.msra.mxu0 %v1084
        %1251 = vmatmul.bf16.gmra.mxu0 %v1124
        %v1252 = vpop.f32.mrf.mxu0
        %v1253 = vadd.f32 0.0, %v1252
        %v1254 = vpop.f32.mrf.mxu0
        %1255 = vdwg.mxu0
        %1256 = vmatpush.bf16.msra.mxu0 0
        %1257 = vmatpush.bf16.msra.mxu0 0
        %1258 = vmatpush.bf16.msra.mxu0 0
        %1259 = vmatpush.bf16.msra.mxu0 0
        %1260 = vmatpush.bf16.msra.mxu0 0
        %1261 = vmatpush.bf16.msra.mxu0 0
        %1262 = vmatpush.bf16.msra.mxu0 %v1097
        %1263 = vmatpush.bf16.msra.mxu0 %v1085
        %1264 = vmatmul.bf16.gmra.mxu0 %v1124
        %v1265 = vpop.f32.mrf.mxu0
        %v1266 = vadd.f32 0.0, %v1265
        %v1267 = vpop.f32.mrf.mxu0
        %1268 = vdwg.mxu0
        %1269 = vmatpush.bf16.msra.mxu0 0
        %1270 = vmatpush.bf16.msra.mxu0 0
        %1271 = vmatpush.bf16.msra.mxu0 0
        %1272 = vmatpush.bf16.msra.mxu0 0
        %1273 = vmatpush.bf16.msra.mxu0 0
        %1274 = vmatpush.bf16.msra.mxu0 0
        %1275 = vmatpush.bf16.msra.mxu0 %v1098
        %1276 = vmatpush.bf16.msra.mxu0 %v1086
        %1277 = vmatmul.bf16.gmra.mxu0 %v1124
        %v1278 = vpop.f32.mrf.mxu0
        %v1279 = vadd.f32 0.0, %v1278
        %v1280 = vpop.f32.mrf.mxu0
        %1281 = vdwg.mxu0
        %vm1282 = vcmask 31744
        %v1284 = vsel %vm1282, %v829, 0
        %v1287 = vsel %vm1282, %v830, 0
        %v1290 = vsel %vm1282, %v831, 0
        %v1293 = vsel %vm1282, %v832, 0
        %v1296 = vsel %vm895, %v1136, 0
        %v1299 = vsel %vm895, %v1149, 0
        %v1302 = vsel %vm895, %v1162, 0
        %v1305 = vsel %vm895, %v1175, 0
        %1307 = vmatpush.msra.mxu0 0.0
        %1308 = vmatpush.msra.mxu0 0.0
        %1309 = vmatpush.msra.mxu0 0.0
        %1310 = vmatpush.msra.mxu0 0.0
        %1311 = vmatpush.msra.mxu0 0.0
        %1312 = vmatpush.msra.mxu0 0.0
        %1313 = vmatpush.msra.mxu0 0.0
        %1314 = vmatpush.msra.mxu0 0.0
        %1315 = vmatpush.msra.mxu0 0.0
        %1316 = vmatpush.msra.mxu0 0.0
        %1317 = vmatpush.msra.mxu0 0.0
        %1318 = vmatpush.msra.mxu0 0.0
        %1319 = vmatpush.msra.mxu0 0.0
        %1320 = vmatpush.msra.mxu0 0.0
        %1321 = vmatpush.msra.mxu0 0.0
        %1322 = vmatpush.msra.mxu0 %v1296
        %1323 = vmatmul.f32.gmra.mxu0 %v1284
        %v1324 = vpop.f32.mrf.mxu0
        %v1325 = vadd.f32 0.0, %v1324
        %1326 = vmatmul.f32.gmra.mxu0 %v1287
        %v1327 = vpop.f32.mrf.mxu0
        %v1328 = vadd.f32 0.0, %v1327
        %1329 = vmatmul.f32.gmra.mxu0 %v1290
        %v1330 = vpop.f32.mrf.mxu0
        %v1331 = vadd.f32 0.0, %v1330
        %1332 = vmatmul.f32.gmra.mxu0 %v1293
        %v1333 = vpop.f32.mrf.mxu0
        %v1334 = vadd.f32 0.0, %v1333
        %1335 = vdwg.mxu0
        %1336 = vmatpush.msra.mxu0 0.0
        %1337 = vmatpush.msra.mxu0 0.0
        %1338 = vmatpush.msra.mxu0 0.0
        %1339 = vmatpush.msra.mxu0 0.0
        %1340 = vmatpush.msra.mxu0 0.0
        %1341 = vmatpush.msra.mxu0 0.0
        %1342 = vmatpush.msra.mxu0 0.0
        %1343 = vmatpush.msra.mxu0 0.0
        %1344 = vmatpush.msra.mxu0 0.0
        %1345 = vmatpush.msra.mxu0 0.0
        %1346 = vmatpush.msra.mxu0 0.0
        %1347 = vmatpush.msra.mxu0 0.0
        %1348 = vmatpush.msra.mxu0 0.0
        %1349 = vmatpush.msra.mxu0 0.0
        %1350 = vmatpush.msra.mxu0 0.0
        %1351 = vmatpush.msra.mxu0 %v1299
        %1352 = vmatmul.f32.gmra.mxu0 %v1284
        %v1353 = vpop.f32.mrf.mxu0
        %v1354 = vadd.f32 0.0, %v1353
        %1355 = vmatmul.f32.gmra.mxu0 %v1287
        %v1356 = vpop.f32.mrf.mxu0
        %v1357 = vadd.f32 0.0, %v1356
        %1358 = vmatmul.f32.gmra.mxu0 %v1290
        %v1359 = vpop.f32.mrf.mxu0
        %v1360 = vadd.f32 0.0, %v1359
        %1361 = vmatmul.f32.gmra.mxu0 %v1293
        %v1362 = vpop.f32.mrf.mxu0
        %v1363 = vadd.f32 0.0, %v1362
        %1364 = vdwg.mxu0
        %1365 = vmatpush.msra.mxu0 0.0
        %1366 = vmatpush.msra.mxu0 0.0
        %1367 = vmatpush.msra.mxu0 0.0
        %1368 = vmatpush.msra.mxu0 0.0
        %1369 = vmatpush.msra.mxu0 0.0
        %1370 = vmatpush.msra.mxu0 0.0
        %1371 = vmatpush.msra.mxu0 0.0
        %1372 = vmatpush.msra.mxu0 0.0
        %1373 = vmatpush.msra.mxu0 0.0
        %1374 = vmatpush.msra.mxu0 0.0
        %1375 = vmatpush.msra.mxu0 0.0
        %1376 = vmatpush.msra.mxu0 0.0
        %1377 = vmatpush.msra.mxu0 0.0
        %1378 = vmatpush.msra.mxu0 0.0
        %1379 = vmatpush.msra.mxu0 0.0
        %1380 = vmatpush.msra.mxu0 %v1302
        %1381 = vmatmul.f32.gmra.mxu0 %v1284
        %v1382 = vpop.f32.mrf.mxu0
        %v1383 = vadd.f32 0.0, %v1382
        %1384 = vmatmul.f32.gmra.mxu0 %v1287
        %v1385 = vpop.f32.mrf.mxu0
        %v1386 = vadd.f32 0.0, %v1385
        %1387 = vmatmul.f32.gmra.mxu0 %v1290
        %v1388 = vpop.f32.mrf.mxu0
        %v1389 = vadd.f32 0.0, %v1388
        %1390 = vmatmul.f32.gmra.mxu0 %v1293
        %v1391 = vpop.f32.mrf.mxu0
        %v1392 = vadd.f32 0.0, %v1391
        %1393 = vdwg.mxu0
        %1394 = vmatpush.msra.mxu0 0.0
        %1395 = vmatpush.msra.mxu0 0.0
        %1396 = vmatpush.msra.mxu0 0.0
        %1397 = vmatpush.msra.mxu0 0.0
        %1398 = vmatpush.msra.mxu0 0.0
        %1399 = vmatpush.msra.mxu0 0.0
        %1400 = vmatpush.msra.mxu0 0.0
        %1401 = vmatpush.msra.mxu0 0.0
        %1402 = vmatpush.msra.mxu0 0.0
        %1403 = vmatpush.msra.mxu0 0.0
        %1404 = vmatpush.msra.mxu0 0.0
        %1405 = vmatpush.msra.mxu0 0.0
        %1406 = vmatpush.msra.mxu0 0.0
        %1407 = vmatpush.msra.mxu0 0.0
        %1408 = vmatpush.msra.mxu0 0.0
        %1409 = vmatpush.msra.mxu0 %v1305
        %1410 = vmatmul.f32.gmra.mxu0 %v1284
        %v1411 = vpop.f32.mrf.mxu0
        %v1412 = vadd.f32 0.0, %v1411
        %1413 = vmatmul.f32.gmra.mxu0 %v1287
        %v1414 = vpop.f32.mrf.mxu0
        %v1415 = vadd.f32 0.0, %v1414
        %1416 = vmatmul.f32.gmra.mxu0 %v1290
        %v1417 = vpop.f32.mrf.mxu0
        %v1418 = vadd.f32 0.0, %v1417
        %1419 = vmatmul.f32.gmra.mxu0 %v1293
        %v1420 = vpop.f32.mrf.mxu0
        %v1421 = vadd.f32 0.0, %v1420
        %1422 = vdwg.mxu0
        %v1423 = vmul.f32 %v1325, %v813
        %v1424 = vmul.f32 %v1354, %v814
        %v1425 = vmul.f32 %v1383, %v815
        %v1426 = vmul.f32 %v1412, %v816
        %v1427 = vmul.f32 %v1328, %v817
        %v1428 = vmul.f32 %v1357, %v818
        %v1429 = vmul.f32 %v1386, %v819
        %v1430 = vmul.f32 %v1415, %v820
        %v1431 = vmul.f32 %v1331, %v821
        %v1432 = vmul.f32 %v1360, %v822
        %v1433 = vmul.f32 %v1389, %v823
        %v1434 = vmul.f32 %v1418, %v824
        %v1435 = vmul.f32 %v1334, %v825
        %v1436 = vmul.f32 %v1363, %v826
        %v1437 = vmul.f32 %v1392, %v827
        %v1438 = vmul.f32 %v1421, %v828
        %v1440 = vsel %vm895, %v1188, 0
        %v1443 = vsel %vm895, %v1201, 0
        %v1446 = vsel %vm895, %v1214, 0
        %v1449 = vsel %vm895, %v1227, 0
        %1451 = vmatpush.msra.mxu0 0.0
        %1452 = vmatpush.msra.mxu0 0.0
        %1453 = vmatpush.msra.mxu0 0.0
        %1454 = vmatpush.msra.mxu0 0.0
        %1455 = vmatpush.msra.mxu0 0.0
        %1456 = vmatpush.msra.mxu0 0.0
        %1457 = vmatpush.msra.mxu0 0.0
        %1458 = vmatpush.msra.mxu0 0.0
        %1459 = vmatpush.msra.mxu0 0.0
        %1460 = vmatpush.msra.mxu0 0.0
        %1461 = vmatpush.msra.mxu0 0.0
        %1462 = vmatpush.msra.mxu0 0.0
        %1463 = vmatpush.msra.mxu0 0.0
        %1464 = vmatpush.msra.mxu0 0.0
        %1465 = vmatpush.msra.mxu0 0.0
        %1466 = vmatpush.msra.mxu0 %v1440
        %1467 = vmatmul.f32.gmra.mxu0 %v1284
        %v1468 = vpop.f32.mrf.mxu0
        %v1469 = vadd.f32 0.0, %v1468
        %1470 = vmatmul.f32.gmra.mxu0 %v1287
        %v1471 = vpop.f32.mrf.mxu0
        %v1472 = vadd.f32 0.0, %v1471
        %1473 = vmatmul.f32.gmra.mxu0 %v1290
        %v1474 = vpop.f32.mrf.mxu0
        %v1475 = vadd.f32 0.0, %v1474
        %1476 = vmatmul.f32.gmra.mxu0 %v1293
        %v1477 = vpop.f32.mrf.mxu0
        %v1478 = vadd.f32 0.0, %v1477
        %1479 = vdwg.mxu0
        %1480 = vmatpush.msra.mxu0 0.0
        %1481 = vmatpush.msra.mxu0 0.0
        %1482 = vmatpush.msra.mxu0 0.0
        %1483 = vmatpush.msra.mxu0 0.0
        %1484 = vmatpush.msra.mxu0 0.0
        %1485 = vmatpush.msra.mxu0 0.0
        %1486 = vmatpush.msra.mxu0 0.0
        %1487 = vmatpush.msra.mxu0 0.0
        %1488 = vmatpush.msra.mxu0 0.0
        %1489 = vmatpush.msra.mxu0 0.0
        %1490 = vmatpush.msra.mxu0 0.0
        %1491 = vmatpush.msra.mxu0 0.0
        %1492 = vmatpush.msra.mxu0 0.0
        %1493 = vmatpush.msra.mxu0 0.0
        %1494 = vmatpush.msra.mxu0 0.0
        %1495 = vmatpush.msra.mxu0 %v1443
        %1496 = vmatmul.f32.gmra.mxu0 %v1284
        %v1497 = vpop.f32.mrf.mxu0
        %v1498 = vadd.f32 0.0, %v1497
        %1499 = vmatmul.f32.gmra.mxu0 %v1287
        %v1500 = vpop.f32.mrf.mxu0
        %v1501 = vadd.f32 0.0, %v1500
        %1502 = vmatmul.f32.gmra.mxu0 %v1290
        %v1503 = vpop.f32.mrf.mxu0
        %v1504 = vadd.f32 0.0, %v1503
        %1505 = vmatmul.f32.gmra.mxu0 %v1293
        %v1506 = vpop.f32.mrf.mxu0
        %v1507 = vadd.f32 0.0, %v1506
        %1508 = vdwg.mxu0
        %1509 = vmatpush.msra.mxu0 0.0
        %1510 = vmatpush.msra.mxu0 0.0
        %1511 = vmatpush.msra.mxu0 0.0
        %1512 = vmatpush.msra.mxu0 0.0
        %1513 = vmatpush.msra.mxu0 0.0
        %1514 = vmatpush.msra.mxu0 0.0
        %1515 = vmatpush.msra.mxu0 0.0
        %1516 = vmatpush.msra.mxu0 0.0
        %1517 = vmatpush.msra.mxu0 0.0
        %1518 = vmatpush.msra.mxu0 0.0
        %1519 = vmatpush.msra.mxu0 0.0
        %1520 = vmatpush.msra.mxu0 0.0
        %1521 = vmatpush.msra.mxu0 0.0
        %1522 = vmatpush.msra.mxu0 0.0
        %1523 = vmatpush.msra.mxu0 0.0
        %1524 = vmatpush.msra.mxu0 %v1446
        %1525 = vmatmul.f32.gmra.mxu0 %v1284
        %v1526 = vpop.f32.mrf.mxu0
        %v1527 = vadd.f32 0.0, %v1526
        %1528 = vmatmul.f32.gmra.mxu0 %v1287
        %v1529 = vpop.f32.mrf.mxu0
        %v1530 = vadd.f32 0.0, %v1529
        %1531 = vmatmul.f32.gmra.mxu0 %v1290
        %v1532 = vpop.f32.mrf.mxu0
        %v1533 = vadd.f32 0.0, %v1532
        %1534 = vmatmul.f32.gmra.mxu0 %v1293
        %v1535 = vpop.f32.mrf.mxu0
        %v1536 = vadd.f32 0.0, %v1535
        %1537 = vdwg.mxu0
        %1538 = vmatpush.msra.mxu0 0.0
        %1539 = vmatpush.msra.mxu0 0.0
        %1540 = vmatpush.msra.mxu0 0.0
        %1541 = vmatpush.msra.mxu0 0.0
        %1542 = vmatpush.msra.mxu0 0.0
        %1543 = vmatpush.msra.mxu0 0.0
        %1544 = vmatpush.msra.mxu0 0.0
        %1545 = vmatpush.msra.mxu0 0.0
        %1546 = vmatpush.msra.mxu0 0.0
        %1547 = vmatpush.msra.mxu0 0.0
        %1548 = vmatpush.msra.mxu0 0.0
        %1549 = vmatpush.msra.mxu0 0.0
        %1550 = vmatpush.msra.mxu0 0.0
        %1551 = vmatpush.msra.mxu0 0.0
        %1552 = vmatpush.msra.mxu0 0.0
        %1553 = vmatpush.msra.mxu0 %v1449
        %1554 = vmatmul.f32.gmra.mxu0 %v1284
        %v1555 = vpop.f32.mrf.mxu0
        %v1556 = vadd.f32 0.0, %v1555
        %1557 = vmatmul.f32.gmra.mxu0 %v1287
        %v1558 = vpop.f32.mrf.mxu0
        %v1559 = vadd.f32 0.0, %v1558
        %1560 = vmatmul.f32.gmra.mxu0 %v1290
        %v1561 = vpop.f32.mrf.mxu0
        %v1562 = vadd.f32 0.0, %v1561
        %1563 = vmatmul.f32.gmra.mxu0 %v1293
        %v1564 = vpop.f32.mrf.mxu0
        %v1565 = vadd.f32 0.0, %v1564
        %1566 = vdwg.mxu0
        %v1567 = vpack.c.bf16 %v1427, %v1423
        %v1568 = vpack.c.bf16 %v1428, %v1424
        %v1569 = vpack.c.bf16 %v1429, %v1425
        %v1570 = vpack.c.bf16 %v1430, %v1426
        %v1571 = vpack.c.bf16 %v1435, %v1431
        %v1572 = vpack.c.bf16 %v1436, %v1432
        %v1573 = vpack.c.bf16 %v1437, %v1433
        %v1574 = vpack.c.bf16 %v1438, %v1434
        %v1575 = vpack.c.bf16 %v1472, %v1469
        %v1576 = vpack.c.bf16 %v1501, %v1498
        %v1577 = vpack.c.bf16 %v1530, %v1527
        %v1578 = vpack.c.bf16 %v1559, %v1556
        %v1579 = vpack.c.bf16 %v1478, %v1475
        %v1580 = vpack.c.bf16 %v1507, %v1504
        %v1581 = vpack.c.bf16 %v1536, %v1533
        %v1582 = vpack.c.bf16 %v1565, %v1562
        %1583 = vmatpush.bf16.xpose.msra.mxu0 0
        %1584 = vmatpush.bf16.xpose.msra.mxu0 0
        %1585 = vmatpush.bf16.xpose.msra.mxu0 0
        %1586 = vmatpush.bf16.xpose.msra.mxu0 0
        %1587 = vmatpush.bf16.xpose.msra.mxu0 0
        %1588 = vmatpush.bf16.xpose.msra.mxu0 0
        %1589 = vmatpush.bf16.xpose.msra.mxu0 %v1579
        %1590 = vmatpush.bf16.xpose.msra.mxu0 %v1575
        %1591 = vmatmul.bf16.gmra.mxu0 %v1567
        %v1592 = vpop.f32.mrf.mxu0
        %v1593 = vadd.f32 0.0, %v1592
        %v1594 = vpop.f32.mrf.mxu0
        %v1595 = vadd.f32 0.0, %v1594
        %1596 = vmatmul.bf16.gmra.mxu0 %v1571
        %v1597 = vpop.f32.mrf.mxu0
        %v1598 = vadd.f32 0.0, %v1597
        %v1599 = vpop.f32.mrf.mxu0
        %v1600 = vadd.f32 0.0, %v1599
        %1601 = vdwg.mxu0
        %1602 = vmatpush.bf16.xpose.msra.mxu0 0
        %1603 = vmatpush.bf16.xpose.msra.mxu0 0
        %1604 = vmatpush.bf16.xpose.msra.mxu0 0
        %1605 = vmatpush.bf16.xpose.msra.mxu0 0
        %1606 = vmatpush.bf16.xpose.msra.mxu0 0
        %1607 = vmatpush.bf16.xpose.msra.mxu0 0
        %1608 = vmatpush.bf16.xpose.msra.mxu0 %v1580
        %1609 = vmatpush.bf16.xpose.msra.mxu0 %v1576
        %1610 = vmatmul.bf16.gmra.mxu0 %v1568
        %v1611 = vpop.f32.mrf.mxu0
        %v1612 = vadd.f32 %v1593, %v1611
        %v1613 = vpop.f32.mrf.mxu0
        %v1614 = vadd.f32 %v1595, %v1613
        %1615 = vmatmul.bf16.gmra.mxu0 %v1572
        %v1616 = vpop.f32.mrf.mxu0
        %v1617 = vadd.f32 %v1598, %v1616
        %v1618 = vpop.f32.mrf.mxu0
        %v1619 = vadd.f32 %v1600, %v1618
        %1620 = vdwg.mxu0
        %1621 = vmatpush.bf16.xpose.msra.mxu0 0
        %1622 = vmatpush.bf16.xpose.msra.mxu0 0
        %1623 = vmatpush.bf16.xpose.msra.mxu0 0
        %1624 = vmatpush.bf16.xpose.msra.mxu0 0
        %1625 = vmatpush.bf16.xpose.msra.mxu0 0
        %1626 = vmatpush.bf16.xpose.msra.mxu0 0
        %1627 = vmatpush.bf16.xpose.msra.mxu0 %v1581
        %1628 = vmatpush.bf16.xpose.msra.mxu0 %v1577
        %1629 = vmatmul.bf16.gmra.mxu0 %v1569
        %v1630 = vpop.f32.mrf.mxu0
        %v1631 = vadd.f32 %v1612, %v1630
        %v1632 = vpop.f32.mrf.mxu0
        %v1633 = vadd.f32 %v1614, %v1632
        %1634 = vmatmul.bf16.gmra.mxu0 %v1573
        %v1635 = vpop.f32.mrf.mxu0
        %v1636 = vadd.f32 %v1617, %v1635
        %v1637 = vpop.f32.mrf.mxu0
        %v1638 = vadd.f32 %v1619, %v1637
        %1639 = vdwg.mxu0
        %1640 = vmatpush.bf16.xpose.msra.mxu0 0
        %1641 = vmatpush.bf16.xpose.msra.mxu0 0
        %1642 = vmatpush.bf16.xpose.msra.mxu0 0
        %1643 = vmatpush.bf16.xpose.msra.mxu0 0
        %1644 = vmatpush.bf16.xpose.msra.mxu0 0
        %1645 = vmatpush.bf16.xpose.msra.mxu0 0
        %1646 = vmatpush.bf16.xpose.msra.mxu0 %v1582
        %1647 = vmatpush.bf16.xpose.msra.mxu0 %v1578
        %1648 = vmatmul.bf16.gmra.mxu0 %v1570
        %v1649 = vpop.f32.mrf.mxu0
        %v1650 = vadd.f32 %v1631, %v1649
        %v1651 = vpop.f32.mrf.mxu0
        %v1652 = vadd.f32 %v1633, %v1651
        %1653 = vmatmul.bf16.gmra.mxu0 %v1574
        %v1654 = vpop.f32.mrf.mxu0
        %v1655 = vadd.f32 %v1636, %v1654
        %v1656 = vpop.f32.mrf.mxu0
        %v1657 = vadd.f32 %v1638, %v1656
        %1658 = vdwg.mxu0
        %v1659 = vsel %vm865, %v1650, -inf
        %1660 = vmax.xlane.f32.xlu0 %v1659
        %v1661 = vpop.xlane.xlu0 %1660
        %v1662 = vsel %vm865, %v1652, -inf
        %1663 = vmax.xlane.f32.xlu0 %v1662
        %v1664 = vpop.xlane.xlu0 %1663
        %v1665 = vsel %vm865, %v1655, -inf
        %1666 = vmax.xlane.f32.xlu0 %v1665
        %v1667 = vpop.xlane.xlu0 %1666
        %v1668 = vsel %vm865, %v1657, -inf
        %1669 = vmax.xlane.f32.xlu0 %v1668
        %v1670 = vpop.xlane.xlu0 %1669
        %v1671 = vsub.f32 %v1650, %v1661
        %v1672 = vsub.f32 %v1652, %v1664
        %v1673 = vsub.f32 %v1655, %v1667
        %v1674 = vsub.f32 %v1657, %v1670
        %v1675 = vmul.f32 %v1671, 1.442695
        %v1676 = vpow.pop %v1675
        %v1677 = vmul.f32 %v1672, 1.442695
        %v1678 = vpow.pop %v1677
        %v1679 = vmul.f32 %v1673, 1.442695
        %v1680 = vpow.pop %v1679
        %v1681 = vmul.f32 %v1674, 1.442695
        %v1682 = vpow.pop %v1681
        %v1683 = vmul.f32 %v1676, %v834
        %v1684 = vmul.f32 %v1678, %v835
        %v1685 = vmul.f32 %v1680, %v836
        %v1686 = vmul.f32 %v1682, %v837
        %v1687 = vsel %vm865, %v1683, 0.0
        %1688 = vadd.xlane.f32.xlu0 %v1687
        %v1689 = vpop.xlane.xlu0 %1688
        %v1690 = vsel %vm865, %v1684, 0.0
        %1691 = vadd.xlane.f32.xlu0 %v1690
        %v1692 = vpop.xlane.xlu0 %1691
        %v1693 = vsel %vm865, %v1685, 0.0
        %1694 = vadd.xlane.f32.xlu0 %v1693
        %v1695 = vpop.xlane.xlu0 %1694
        %v1696 = vsel %vm865, %v1686, 0.0
        %1697 = vadd.xlane.f32.xlu0 %v1696
        %v1698 = vpop.xlane.xlu0 %1697
        %v1699 = vrcp.pop %v1689
        %v1700 = vrcp.pop %v1692
        %v1701 = vrcp.pop %v1695
        %v1702 = vrcp.pop %v1698
        %v1703 = vmul.f32 %v1683, %v1699
        %v1704 = vmul.f32 %v1684, %v1700
        %v1705 = vmul.f32 %v1685, %v1701
        %v1706 = vmul.f32 %v1686, %v1702
        %v1708 = vsel %vm865, %v1703, 0
        %v1711 = vsel %vm865, %v1704, 0
        %v1714 = vsel %vm865, %v1705, 0
        %v1717 = vsel %vm865, %v1706, 0
        %v1720 = vsel %vm865, %v833, 0
        %1722 = vmatpush.xpose.msra.mxu0 0.0
        %1723 = vmatpush.xpose.msra.mxu0 0.0
        %1724 = vmatpush.xpose.msra.mxu0 0.0
        %1725 = vmatpush.xpose.msra.mxu0 0.0
        %1726 = vmatpush.xpose.msra.mxu0 0.0
        %1727 = vmatpush.xpose.msra.mxu0 0.0
        %1728 = vmatpush.xpose.msra.mxu0 0.0
        %1729 = vmatpush.xpose.msra.mxu0 0.0
        %1730 = vmatpush.xpose.msra.mxu0 0.0
        %1731 = vmatpush.xpose.msra.mxu0 0.0
        %1732 = vmatpush.xpose.msra.mxu0 0.0
        %1733 = vmatpush.xpose.msra.mxu0 0.0
        %1734 = vmatpush.xpose.msra.mxu0 0.0
        %1735 = vmatpush.xpose.msra.mxu0 0.0
        %1736 = vmatpush.xpose.msra.mxu0 0.0
        %1737 = vmatpush.xpose.msra.mxu0 %v1720
        %1738 = vmatmul.f32.gmra.mxu0 %v1708
        %v1739 = vpop.f32.mrf.mxu0
        %v1740 = vadd.f32 0.0, %v1739
        %1741 = vmatmul.f32.gmra.mxu0 %v1711
        %v1742 = vpop.f32.mrf.mxu0
        %v1743 = vadd.f32 0.0, %v1742
        %1744 = vmatmul.f32.gmra.mxu0 %v1714
        %v1745 = vpop.f32.mrf.mxu0
        %v1746 = vadd.f32 0.0, %v1745
        %1747 = vmatmul.f32.gmra.mxu0 %v1717
        %v1748 = vpop.f32.mrf.mxu0
        %v1749 = vadd.f32 0.0, %v1748
        %1750 = vdwg.mxu0
        %v1752 = vsel %vm1282, %v1740, 0
        %v1755 = vsel %vm1282, %v1743, 0
        %v1758 = vsel %vm1282, %v1746, 0
        %v1761 = vsel %vm1282, %v1749, 0
        %v1764 = vsel %vm895, %v1240, 0
        %v1767 = vsel %vm895, %v1253, 0
        %v1770 = vsel %vm895, %v1266, 0
        %v1773 = vsel %vm895, %v1279, 0
        %1775 = vmatpush.msra.mxu0 0.0
        %1776 = vmatpush.msra.mxu0 0.0
        %1777 = vmatpush.msra.mxu0 0.0
        %1778 = vmatpush.msra.mxu0 0.0
        %1779 = vmatpush.msra.mxu0 0.0
        %1780 = vmatpush.msra.mxu0 0.0
        %1781 = vmatpush.msra.mxu0 0.0
        %1782 = vmatpush.msra.mxu0 0.0
        %1783 = vmatpush.msra.mxu0 0.0
        %1784 = vmatpush.msra.mxu0 0.0
        %1785 = vmatpush.msra.mxu0 0.0
        %1786 = vmatpush.msra.mxu0 0.0
        %1787 = vmatpush.msra.mxu0 0.0
        %1788 = vmatpush.msra.mxu0 0.0
        %1789 = vmatpush.msra.mxu0 0.0
        %1790 = vmatpush.msra.mxu0 %v1764
        %1791 = vmatmul.f32.gmra.mxu0 %v1752
        %v1792 = vpop.f32.mrf.mxu0
        %v1793 = vadd.f32 0.0, %v1792
        %1794 = vmatmul.f32.gmra.mxu0 %v1755
        %v1795 = vpop.f32.mrf.mxu0
        %v1796 = vadd.f32 0.0, %v1795
        %1797 = vmatmul.f32.gmra.mxu0 %v1758
        %v1798 = vpop.f32.mrf.mxu0
        %v1799 = vadd.f32 0.0, %v1798
        %1800 = vmatmul.f32.gmra.mxu0 %v1761
        %v1801 = vpop.f32.mrf.mxu0
        %v1802 = vadd.f32 0.0, %v1801
        %1803 = vdwg.mxu0
        %1804 = vmatpush.msra.mxu0 0.0
        %1805 = vmatpush.msra.mxu0 0.0
        %1806 = vmatpush.msra.mxu0 0.0
        %1807 = vmatpush.msra.mxu0 0.0
        %1808 = vmatpush.msra.mxu0 0.0
        %1809 = vmatpush.msra.mxu0 0.0
        %1810 = vmatpush.msra.mxu0 0.0
        %1811 = vmatpush.msra.mxu0 0.0
        %1812 = vmatpush.msra.mxu0 0.0
        %1813 = vmatpush.msra.mxu0 0.0
        %1814 = vmatpush.msra.mxu0 0.0
        %1815 = vmatpush.msra.mxu0 0.0
        %1816 = vmatpush.msra.mxu0 0.0
        %1817 = vmatpush.msra.mxu0 0.0
        %1818 = vmatpush.msra.mxu0 0.0
        %1819 = vmatpush.msra.mxu0 %v1767
        %1820 = vmatmul.f32.gmra.mxu0 %v1752
        %v1821 = vpop.f32.mrf.mxu0
        %v1822 = vadd.f32 0.0, %v1821
        %1823 = vmatmul.f32.gmra.mxu0 %v1755
        %v1824 = vpop.f32.mrf.mxu0
        %v1825 = vadd.f32 0.0, %v1824
        %1826 = vmatmul.f32.gmra.mxu0 %v1758
        %v1827 = vpop.f32.mrf.mxu0
        %v1828 = vadd.f32 0.0, %v1827
        %1829 = vmatmul.f32.gmra.mxu0 %v1761
        %v1830 = vpop.f32.mrf.mxu0
        %v1831 = vadd.f32 0.0, %v1830
        %1832 = vdwg.mxu0
        %1833 = vmatpush.msra.mxu0 0.0
        %1834 = vmatpush.msra.mxu0 0.0
        %1835 = vmatpush.msra.mxu0 0.0
        %1836 = vmatpush.msra.mxu0 0.0
        %1837 = vmatpush.msra.mxu0 0.0
        %1838 = vmatpush.msra.mxu0 0.0
        %1839 = vmatpush.msra.mxu0 0.0
        %1840 = vmatpush.msra.mxu0 0.0
        %1841 = vmatpush.msra.mxu0 0.0
        %1842 = vmatpush.msra.mxu0 0.0
        %1843 = vmatpush.msra.mxu0 0.0
        %1844 = vmatpush.msra.mxu0 0.0
        %1845 = vmatpush.msra.mxu0 0.0
        %1846 = vmatpush.msra.mxu0 0.0
        %1847 = vmatpush.msra.mxu0 0.0
        %1848 = vmatpush.msra.mxu0 %v1770
        %1849 = vmatmul.f32.gmra.mxu0 %v1752
        %v1850 = vpop.f32.mrf.mxu0
        %v1851 = vadd.f32 0.0, %v1850
        %1852 = vmatmul.f32.gmra.mxu0 %v1755
        %v1853 = vpop.f32.mrf.mxu0
        %v1854 = vadd.f32 0.0, %v1853
        %1855 = vmatmul.f32.gmra.mxu0 %v1758
        %v1856 = vpop.f32.mrf.mxu0
        %v1857 = vadd.f32 0.0, %v1856
        %1858 = vmatmul.f32.gmra.mxu0 %v1761
        %v1859 = vpop.f32.mrf.mxu0
        %v1860 = vadd.f32 0.0, %v1859
        %1861 = vdwg.mxu0
        %1862 = vmatpush.msra.mxu0 0.0
        %1863 = vmatpush.msra.mxu0 0.0
        %1864 = vmatpush.msra.mxu0 0.0
        %1865 = vmatpush.msra.mxu0 0.0
        %1866 = vmatpush.msra.mxu0 0.0
        %1867 = vmatpush.msra.mxu0 0.0
        %1868 = vmatpush.msra.mxu0 0.0
        %1869 = vmatpush.msra.mxu0 0.0
        %1870 = vmatpush.msra.mxu0 0.0
        %1871 = vmatpush.msra.mxu0 0.0
        %1872 = vmatpush.msra.mxu0 0.0
        %1873 = vmatpush.msra.mxu0 0.0
        %1874 = vmatpush.msra.mxu0 0.0
        %1875 = vmatpush.msra.mxu0 0.0
        %1876 = vmatpush.msra.mxu0 0.0
        %1877 = vmatpush.msra.mxu0 %v1773
        %1878 = vmatmul.f32.gmra.mxu0 %v1752
        %v1879 = vpop.f32.mrf.mxu0
        %v1880 = vadd.f32 0.0, %v1879
        %1881 = vmatmul.f32.gmra.mxu0 %v1755
        %v1882 = vpop.f32.mrf.mxu0
        %v1883 = vadd.f32 0.0, %v1882
        %1884 = vmatmul.f32.gmra.mxu0 %v1758
        %v1885 = vpop.f32.mrf.mxu0
        %v1886 = vadd.f32 0.0, %v1885
        %1887 = vmatmul.f32.gmra.mxu0 %v1761
        %v1888 = vpop.f32.mrf.mxu0
        %v1889 = vadd.f32 0.0, %v1888
        %1890 = vdwg.mxu0
        %v1891 = vmul.f32 %v1793, %v813
        %v1892 = vmul.f32 %v1822, %v814
        %v1893 = vmul.f32 %v1851, %v815
        %v1894 = vmul.f32 %v1880, %v816
        %v1895 = vmul.f32 %v1796, %v817
        %v1896 = vmul.f32 %v1825, %v818
        %v1897 = vmul.f32 %v1854, %v819
        %v1898 = vmul.f32 %v1883, %v820
        %v1899 = vmul.f32 %v1799, %v821
        %v1900 = vmul.f32 %v1828, %v822
        %v1901 = vmul.f32 %v1857, %v823
        %v1902 = vmul.f32 %v1886, %v824
        %v1903 = vmul.f32 %v1802, %v825
        %v1904 = vmul.f32 %v1831, %v826
        %v1905 = vmul.f32 %v1860, %v827
        %v1906 = vmul.f32 %v1889, %v828
        %1907 = vmatpush.msra.mxu0 0.0
        %1908 = vmatpush.msra.mxu0 0.0
        %1909 = vmatpush.msra.mxu0 0.0
        %1910 = vmatpush.msra.mxu0 0.0
        %1911 = vmatpush.msra.mxu0 0.0
        %1912 = vmatpush.msra.mxu0 0.0
        %1913 = vmatpush.msra.mxu0 0.0
        %1914 = vmatpush.msra.mxu0 0.0
        %1915 = vmatpush.msra.mxu0 0.0
        %1916 = vmatpush.msra.mxu0 0.0
        %1917 = vmatpush.msra.mxu0 0.0
        %1918 = vmatpush.msra.mxu0 0.0
        %1919 = vmatpush.msra.mxu0 %v1903
        %1920 = vmatpush.msra.mxu0 %v1899
        %1921 = vmatpush.msra.mxu0 %v1895
        %1922 = vmatpush.msra.mxu0 %v1891
        %1923 = vmatmul.f32.gmra.mxu0 %v1720
        %v1924 = vpop.f32.mrf.mxu0
        %v1925 = vadd.f32 0.0, %v1924
        %1926 = vdwg.mxu0
        %1927 = vmatpush.msra.mxu0 0.0
        %1928 = vmatpush.msra.mxu0 0.0
        %1929 = vmatpush.msra.mxu0 0.0
        %1930 = vmatpush.msra.mxu0 0.0
        %1931 = vmatpush.msra.mxu0 0.0
        %1932 = vmatpush.msra.mxu0 0.0
        %1933 = vmatpush.msra.mxu0 0.0
        %1934 = vmatpush.msra.mxu0 0.0
        %1935 = vmatpush.msra.mxu0 0.0
        %1936 = vmatpush.msra.mxu0 0.0
        %1937 = vmatpush.msra.mxu0 0.0
        %1938 = vmatpush.msra.mxu0 0.0
        %1939 = vmatpush.msra.mxu0 %v1904
        %1940 = vmatpush.msra.mxu0 %v1900
        %1941 = vmatpush.msra.mxu0 %v1896
        %1942 = vmatpush.msra.mxu0 %v1892
        %1943 = vmatmul.f32.gmra.mxu0 %v1720
        %v1944 = vpop.f32.mrf.mxu0
        %v1945 = vadd.f32 0.0, %v1944
        %1946 = vdwg.mxu0
        %1947 = vmatpush.msra.mxu0 0.0
        %1948 = vmatpush.msra.mxu0 0.0
        %1949 = vmatpush.msra.mxu0 0.0
        %1950 = vmatpush.msra.mxu0 0.0
        %1951 = vmatpush.msra.mxu0 0.0
        %1952 = vmatpush.msra.mxu0 0.0
        %1953 = vmatpush.msra.mxu0 0.0
        %1954 = vmatpush.msra.mxu0 0.0
        %1955 = vmatpush.msra.mxu0 0.0
        %1956 = vmatpush.msra.mxu0 0.0
        %1957 = vmatpush.msra.mxu0 0.0
        %1958 = vmatpush.msra.mxu0 0.0
        %1959 = vmatpush.msra.mxu0 %v1905
        %1960 = vmatpush.msra.mxu0 %v1901
        %1961 = vmatpush.msra.mxu0 %v1897
        %1962 = vmatpush.msra.mxu0 %v1893
        %1963 = vmatmul.f32.gmra.mxu0 %v1720
        %v1964 = vpop.f32.mrf.mxu0
        %v1965 = vadd.f32 0.0, %v1964
        %1966 = vdwg.mxu0
        %1967 = vmatpush.msra.mxu0 0.0
        %1968 = vmatpush.msra.mxu0 0.0
        %1969 = vmatpush.msra.mxu0 0.0
        %1970 = vmatpush.msra.mxu0 0.0
        %1971 = vmatpush.msra.mxu0 0.0
        %1972 = vmatpush.msra.mxu0 0.0
        %1973 = vmatpush.msra.mxu0 0.0
        %1974 = vmatpush.msra.mxu0 0.0
        %1975 = vmatpush.msra.mxu0 0.0
        %1976 = vmatpush.msra.mxu0 0.0
        %1977 = vmatpush.msra.mxu0 0.0
        %1978 = vmatpush.msra.mxu0 0.0
        %1979 = vmatpush.msra.mxu0 %v1906
        %1980 = vmatpush.msra.mxu0 %v1902
        %1981 = vmatpush.msra.mxu0 %v1898
        %1982 = vmatpush.msra.mxu0 %v1894
        %1983 = vmatmul.f32.gmra.mxu0 %v1720
        %v1984 = vpop.f32.mrf.mxu0
        %v1985 = vadd.f32 0.0, %v1984
        %1986 = vdwg.mxu0
        %v1987 = vpack.c.bf16 %v1925, %v1925
        %v1988 = vpack.c.bf16 %v1945, %v1945
        %v1989 = vpack.c.bf16 %v1965, %v1965
        %v1990 = vpack.c.bf16 %v1985, %v1985
        %v1991 = vld [vmem:[%s12] sm:$0xf]
        %v1992 = vld [vmem:[%s12 + $0x4] sm:$0xf]
        %v1993 = vld [vmem:[%s12 + $0x8] sm:$0xf]
        %v1994 = vld [vmem:[%s12 + $0xc] sm:$0xf]
        %v1995 = vld [vmem:[%s12 + $0x10] sm:$0xf]
        %v1996 = vld [vmem:[%s12 + $0x14] sm:$0xf]
        %v1997 = vld [vmem:[%s12 + $0x18] sm:$0xf]
        %v1998 = vld [vmem:[%s12 + $0x1c] sm:$0xf]
        %v1999 = vld [vmem:[%s12 + $0x20] sm:$0xf]
        %v2000 = vld [vmem:[%s12 + $0x24] sm:$0xf]
        %v2001 = vld [vmem:[%s12 + $0x28] sm:$0xf]
        %v2002 = vld [vmem:[%s12 + $0x2c] sm:$0xf]
        %v2003 = vld [vmem:[%s12 + $0x30] sm:$0xf]
        %v2004 = vld [vmem:[%s12 + $0x34] sm:$0xf]
        %v2005 = vld [vmem:[%s12 + $0x38] sm:$0xf]
        %v2006 = vld [vmem:[%s12 + $0x3c] sm:$0xf]
        %v2007 = vld [vmem:[%s12 + $0x40] sm:$0xf]
        %v2008 = vld [vmem:[%s12 + $0x44] sm:$0xf]
        %v2009 = vld [vmem:[%s12 + $0x48] sm:$0xf]
        %v2010 = vld [vmem:[%s12 + $0x4c] sm:$0xf]
        %v2011 = vld [vmem:[%s12 + $0x50] sm:$0xf]
        %v2012 = vld [vmem:[%s12 + $0x54] sm:$0xf]
        %v2013 = vld [vmem:[%s12 + $0x58] sm:$0xf]
        %v2014 = vld [vmem:[%s12 + $0x5c] sm:$0xf]
        %v2015 = vld [vmem:[%s12 + $0x60] sm:$0xf]
        %v2016 = vld [vmem:[%s12 + $0x64] sm:$0xf]
        %v2017 = vld [vmem:[%s12 + $0x68] sm:$0xf]
        %v2018 = vld [vmem:[%s12 + $0x6c] sm:$0xf]
        %v2019 = vld [vmem:[%s12 + $0x70] sm:$0xf]
        %v2020 = vld [vmem:[%s12 + $0x74] sm:$0xf]
        %v2021 = vld [vmem:[%s12 + $0x78] sm:$0xf]
        %v2022 = vld [vmem:[%s12 + $0x7c] sm:$0xf]
        %v2023 = vld [vmem:[%s12 + $0x80] sm:$0xf]
        %v2024 = vld [vmem:[%s12 + $0x84] sm:$0xf]
        %v2025 = vld [vmem:[%s12 + $0x88] sm:$0xf]
        %v2026 = vld [vmem:[%s12 + $0x8c] sm:$0xf]
        %v2027 = vld [vmem:[%s12 + $0x90] sm:$0xf]
        %v2028 = vld [vmem:[%s12 + $0x94] sm:$0xf]
        %v2029 = vld [vmem:[%s12 + $0x98] sm:$0xf]
        %v2030 = vld [vmem:[%s12 + $0x9c] sm:$0xf]
        %v2031 = vld [vmem:[%s12 + $0xa0] sm:$0xf]
        %v2032 = vld [vmem:[%s12 + $0xa4] sm:$0xf]
        %v2033 = vld [vmem:[%s12 + $0xa8] sm:$0xf]
        %v2034 = vld [vmem:[%s12 + $0xac] sm:$0xf]
        %v2035 = vld [vmem:[%s12 + $0xb0] sm:$0xf]
        %v2036 = vld [vmem:[%s12 + $0xb4] sm:$0xf]
        %v2037 = vld [vmem:[%s12 + $0xb8] sm:$0xf]
        %v2038 = vld [vmem:[%s12 + $0xbc] sm:$0xf]
        %v2039 = vld [vmem:[%s12 + $0xc0] sm:$0xf]
        %v2040 = vld [vmem:[%s12 + $0xc4] sm:$0xf]
        %v2041 = vld [vmem:[%s12 + $0xc8] sm:$0xf]
        %v2042 = vld [vmem:[%s12 + $0xcc] sm:$0xf]
        %v2043 = vld [vmem:[%s12 + $0xd0] sm:$0xf]
        %v2044 = vld [vmem:[%s12 + $0xd4] sm:$0xf]
        %v2045 = vld [vmem:[%s12 + $0xd8] sm:$0xf]
        %v2046 = vld [vmem:[%s12 + $0xdc] sm:$0xf]
        %v2047 = vld [vmem:[%s12 + $0xe0] sm:$0xf]
        %v2048 = vld [vmem:[%s12 + $0xe4] sm:$0xf]
        %v2049 = vld [vmem:[%s12 + $0xe8] sm:$0xf]
        %v2050 = vld [vmem:[%s12 + $0xec] sm:$0xf]
        %v2051 = vld [vmem:[%s12 + $0xf0] sm:$0xf]
        %v2052 = vld [vmem:[%s12 + $0xf4] sm:$0xf]
        %v2053 = vld [vmem:[%s12 + $0xf8] sm:$0xf]
        %v2054 = vld [vmem:[%s12 + $0xfc] sm:$0xf]
        %v2055 = vld [vmem:[%s13] sm:$0x1]
        %v2057 = vperm.slane %v2055, 0
        %v2123 = vunpack.c.l.b16 %v1991
        %v2124 = vunpack.c.l.b16 %v1992
        %v2125 = vunpack.c.l.b16 %v1993
        %v2126 = vunpack.c.l.b16 %v1994
        %v2127 = vunpack.c.l.b16 %v1995
        %v2128 = vunpack.c.l.b16 %v1996
        %v2129 = vunpack.c.l.b16 %v1997
        %v2130 = vunpack.c.l.b16 %v1998
        %v2131 = vunpack.c.l.b16 %v1999
        %v2132 = vunpack.c.l.b16 %v2000
        %v2133 = vunpack.c.l.b16 %v2001
        %v2134 = vunpack.c.l.b16 %v2002
        %v2135 = vunpack.c.l.b16 %v2003
        %v2136 = vunpack.c.l.b16 %v2004
        %v2137 = vunpack.c.l.b16 %v2005
        %v2138 = vunpack.c.l.b16 %v2006
        %v2139 = vunpack.c.l.b16 %v2007
        %v2140 = vunpack.c.l.b16 %v2008
        %v2141 = vunpack.c.l.b16 %v2009
        %v2142 = vunpack.c.l.b16 %v2010
        %v2143 = vunpack.c.l.b16 %v2011
        %v2144 = vunpack.c.l.b16 %v2012
        %v2145 = vunpack.c.l.b16 %v2013
        %v2146 = vunpack.c.l.b16 %v2014
        %v2147 = vunpack.c.l.b16 %v2015
        %v2148 = vunpack.c.l.b16 %v2016
        %v2149 = vunpack.c.l.b16 %v2017
        %v2150 = vunpack.c.l.b16 %v2018
        %v2151 = vunpack.c.l.b16 %v2019
        %v2152 = vunpack.c.l.b16 %v2020
        %v2153 = vunpack.c.l.b16 %v2021
        %v2154 = vunpack.c.l.b16 %v2022
        %v2155 = vunpack.c.l.b16 %v2023
        %v2156 = vunpack.c.l.b16 %v2024
        %v2157 = vunpack.c.l.b16 %v2025
        %v2158 = vunpack.c.l.b16 %v2026
        %v2159 = vunpack.c.l.b16 %v2027
        %v2160 = vunpack.c.l.b16 %v2028
        %v2161 = vunpack.c.l.b16 %v2029
        %v2162 = vunpack.c.l.b16 %v2030
        %v2163 = vunpack.c.l.b16 %v2031
        %v2164 = vunpack.c.l.b16 %v2032
        %v2165 = vunpack.c.l.b16 %v2033
        %v2166 = vunpack.c.l.b16 %v2034
        %v2167 = vunpack.c.l.b16 %v2035
        %v2168 = vunpack.c.l.b16 %v2036
        %v2169 = vunpack.c.l.b16 %v2037
        %v2170 = vunpack.c.l.b16 %v2038
        %v2171 = vunpack.c.l.b16 %v2039
        %v2172 = vunpack.c.l.b16 %v2040
        %v2173 = vunpack.c.l.b16 %v2041
        %v2174 = vunpack.c.l.b16 %v2042
        %v2175 = vunpack.c.l.b16 %v2043
        %v2176 = vunpack.c.l.b16 %v2044
        %v2177 = vunpack.c.l.b16 %v2045
        %v2178 = vunpack.c.l.b16 %v2046
        %v2179 = vunpack.c.l.b16 %v2047
        %v2180 = vunpack.c.l.b16 %v2048
        %v2181 = vunpack.c.l.b16 %v2049
        %v2182 = vunpack.c.l.b16 %v2050
        %v2183 = vunpack.c.l.b16 %v2051
        %v2184 = vunpack.c.l.b16 %v2052
        %v2185 = vunpack.c.l.b16 %v2053
        %v2186 = vunpack.c.l.b16 %v2054
        %v2187 = vpack.c.b16 %v2124, %v2123
        %v2188 = vpack.c.b16 %v2126, %v2125
        %v2189 = vpack.c.b16 %v2128, %v2127
        %v2190 = vpack.c.b16 %v2130, %v2129
        %v2191 = vpack.c.b16 %v2132, %v2131
        %v2192 = vpack.c.b16 %v2134, %v2133
        %v2193 = vpack.c.b16 %v2136, %v2135
        %v2194 = vpack.c.b16 %v2138, %v2137
        %v2195 = vpack.c.b16 %v2140, %v2139
        %v2196 = vpack.c.b16 %v2142, %v2141
        %v2197 = vpack.c.b16 %v2144, %v2143
        %v2198 = vpack.c.b16 %v2146, %v2145
        %v2199 = vpack.c.b16 %v2148, %v2147
        %v2200 = vpack.c.b16 %v2150, %v2149
        %v2201 = vpack.c.b16 %v2152, %v2151
        %v2202 = vpack.c.b16 %v2154, %v2153
        %v2203 = vpack.c.b16 %v2156, %v2155
        %v2204 = vpack.c.b16 %v2158, %v2157
        %v2205 = vpack.c.b16 %v2160, %v2159
        %v2206 = vpack.c.b16 %v2162, %v2161
        %v2207 = vpack.c.b16 %v2164, %v2163
        %v2208 = vpack.c.b16 %v2166, %v2165
        %v2209 = vpack.c.b16 %v2168, %v2167
        %v2210 = vpack.c.b16 %v2170, %v2169
        %v2211 = vpack.c.b16 %v2172, %v2171
        %v2212 = vpack.c.b16 %v2174, %v2173
        %v2213 = vpack.c.b16 %v2176, %v2175
        %v2214 = vpack.c.b16 %v2178, %v2177
        %v2215 = vpack.c.b16 %v2180, %v2179
        %v2216 = vpack.c.b16 %v2182, %v2181
        %v2217 = vpack.c.b16 %v2184, %v2183
        %v2218 = vpack.c.b16 %v2186, %v2185
        %2251 = vmatpush.bf16.msra.mxu0 %v2194
        %2252 = vmatpush.bf16.msra.mxu0 %v2193
        %2253 = vmatpush.bf16.msra.mxu0 %v2192
        %2254 = vmatpush.bf16.msra.mxu0 %v2191
        %2255 = vmatpush.bf16.msra.mxu0 %v2190
        %2256 = vmatpush.bf16.msra.mxu0 %v2189
        %2257 = vmatpush.bf16.msra.mxu0 %v2188
        %2258 = vmatpush.bf16.msra.mxu0 %v2187
        %2259 = vmatmul.bf16.gmra.mxu0 %v1987
        %v2260 = vpop.f32.mrf.mxu0
        %v2261 = vadd.f32 %v2057, %v2260
        %v2262 = vpop.f32.mrf.mxu0
        %2263 = vdwg.mxu0
        %2264 = vmatpush.bf16.msra.mxu0 %v2202
        %2265 = vmatpush.bf16.msra.mxu0 %v2201
        %2266 = vmatpush.bf16.msra.mxu0 %v2200
        %2267 = vmatpush.bf16.msra.mxu0 %v2199
        %2268 = vmatpush.bf16.msra.mxu0 %v2198
        %2269 = vmatpush.bf16.msra.mxu0 %v2197
        %2270 = vmatpush.bf16.msra.mxu0 %v2196
        %2271 = vmatpush.bf16.msra.mxu0 %v2195
        %2272 = vmatmul.bf16.gmra.mxu0 %v1988
        %v2273 = vpop.f32.mrf.mxu0
        %v2274 = vadd.f32 %v2261, %v2273
        %v2275 = vpop.f32.mrf.mxu0
        %2276 = vdwg.mxu0
        %2277 = vmatpush.bf16.msra.mxu0 %v2210
        %2278 = vmatpush.bf16.msra.mxu0 %v2209
        %2279 = vmatpush.bf16.msra.mxu0 %v2208
        %2280 = vmatpush.bf16.msra.mxu0 %v2207
        %2281 = vmatpush.bf16.msra.mxu0 %v2206
        %2282 = vmatpush.bf16.msra.mxu0 %v2205
        %2283 = vmatpush.bf16.msra.mxu0 %v2204
        %2284 = vmatpush.bf16.msra.mxu0 %v2203
        %2285 = vmatmul.bf16.gmra.mxu0 %v1989
        %v2286 = vpop.f32.mrf.mxu0
        %v2287 = vadd.f32 %v2274, %v2286
        %v2288 = vpop.f32.mrf.mxu0
        %2289 = vdwg.mxu0
        %2290 = vmatpush.bf16.msra.mxu0 %v2218
        %2291 = vmatpush.bf16.msra.mxu0 %v2217
        %2292 = vmatpush.bf16.msra.mxu0 %v2216
        %2293 = vmatpush.bf16.msra.mxu0 %v2215
        %2294 = vmatpush.bf16.msra.mxu0 %v2214
        %2295 = vmatpush.bf16.msra.mxu0 %v2213
        %2296 = vmatpush.bf16.msra.mxu0 %v2212
        %2297 = vmatpush.bf16.msra.mxu0 %v2211
        %2298 = vmatmul.bf16.gmra.mxu0 %v1990
        %v2299 = vpop.f32.mrf.mxu0
        %v2300 = vadd.f32 %v2287, %v2299
        %v2301 = vpop.f32.mrf.mxu0
        %2302 = vdwg.mxu0
        %v2303 = vadd.f32 %v941, %v2300
        %v2304 = vsel %vm944, %v2303, 0.0
        %2305 = vadd.xlane.f32.xlu0 %v2304
        %v2306 = vpop.xlane.xlu0 %2305
        %v2307 = vmul.f32 %v2306, %v954
        %v2308 = vsub.f32 %v2303, %v2307
        %v2309 = vmul.f32 %v2308, %v2308
        %v2310 = vsel %vm944, %v2309, 0.0
        %2311 = vadd.xlane.f32.xlu0 %v2310
        %v2312 = vpop.xlane.xlu0 %2311
        %v2313 = vmul.f32 %v2312, %v954
        %v2314 = vadd.f32 %v2313, 1e-05
        %v2315 = vrsqrt.pop %v2314
        %v2316 = vmul.f32 %v2315, %v2314
        %v2317 = vmul.f32 %v2316, %v2315
        %v2318 = vmul.f32 0.5, %v2317
        %v2319 = vsub.f32 1.5, %v2318
        %v2320 = vmul.f32 %v2315, %v2319
        %vm2321 = vweird.f32 %v2314
        %vm2322 = vweird.f32 %v2315
        %vm2323 = vmor %vm2321, %vm2322
        %v2324 = vsel %vm2323, %v2315, %v2320
        %v2325 = vmul.f32 %v2308, %v2324
        %v2326 = vperm.slane %v808, 2
        %v2327 = vmul.f32 %v2325, %v2326
        %v2328 = vperm.slane %v808, 3
        %v2329 = vadd.f32 %v2327, %v2328
        %v2330 = vpack.c.bf16 %v2329, %v2329
        %v2331 = vld [vmem:[%s14] sm:$0xf]
        %v2332 = vld [vmem:[%s14 + $0x4] sm:$0xf]
        %v2333 = vld [vmem:[%s14 + $0x8] sm:$0xf]
        %v2334 = vld [vmem:[%s14 + $0xc] sm:$0xf]
        %v2335 = vld [vmem:[%s15] sm:$0x1]
        %v2337 = vperm.slane %v2335, 0
        %v2343 = vunpack.c.l.b16 %v2331
        %v2344 = vunpack.c.l.b16 %v2332
        %v2345 = vunpack.c.l.b16 %v2333
        %v2346 = vunpack.c.l.b16 %v2334
        %v2347 = vpack.c.b16 %v2344, %v2343
        %v2348 = vpack.c.b16 %v2346, %v2345
        %v2352 = vsel %vm865, %v2330, 0
        %2354 = vmatpush.bf16.msra.mxu0 0
        %2355 = vmatpush.bf16.msra.mxu0 0
        %2356 = vmatpush.bf16.msra.mxu0 0
        %2357 = vmatpush.bf16.msra.mxu0 0
        %2358 = vmatpush.bf16.msra.mxu0 0
        %2359 = vmatpush.bf16.msra.mxu0 0
        %2360 = vmatpush.bf16.msra.mxu0 %v2348
        %2361 = vmatpush.bf16.msra.mxu0 %v2347
        %2362 = vmatmul.bf16.gmra.mxu0 %v2352
        %v2363 = vpop.f32.mrf.mxu0
        %v2364 = vadd.f32 %v2337, %v2363
        %v2365 = vpop.f32.mrf.mxu0
        %2366 = vdwg.mxu0
        %v2367 = vmul.f32 %v2364, %v2364
        %v2368 = vmul.f32 %v2364, %v2367
        %v2369 = vmul.f32 %v2368, 0.044715
        %v2370 = vadd.f32 %v2364, %v2369
        %v2371 = vmul.f32 %v2370, 0.7978846
        %v2372 = vtanh.pop %v2371
        %v2373 = vadd.f32 %v2372, 1.0
        %v2374 = vmul.f32 %v2373, 0.5
        %v2375 = vmul.f32 %v2364, %v2374
        %v2376 = vpack.c.bf16 %v2375, %v2375
        %v2377 = vld [vmem:[%s16] sm:$0xf]
        %v2378 = vld [vmem:[%s16 + $0x4] sm:$0xf]
        %v2379 = vld [vmem:[%s16 + $0x8] sm:$0xf]
        %v2380 = vld [vmem:[%s16 + $0xc] sm:$0xf]
        %v2381 = vld [vmem:[%s16 + $0x10] sm:$0xf]
        %v2382 = vld [vmem:[%s16 + $0x14] sm:$0xf]
        %v2383 = vld [vmem:[%s16 + $0x18] sm:$0xf]
        %v2384 = vld [vmem:[%s16 + $0x1c] sm:$0xf]
        %v2393 = vunpack.c.l.b16 %v2377
        %v2394 = vunpack.c.l.b16 %v2378
        %v2395 = vunpack.c.l.b16 %v2379
        %v2396 = vunpack.c.l.b16 %v2380
        %v2397 = vunpack.c.l.b16 %v2381
        %v2398 = vunpack.c.l.b16 %v2382
        %v2399 = vunpack.c.l.b16 %v2383
        %v2400 = vunpack.c.l.b16 %v2384
        %v2401 = vpack.c.b16 %v2394, %v2393
        %v2402 = vpack.c.b16 %v2396, %v2395
        %v2403 = vpack.c.b16 %v2398, %v2397
        %v2404 = vpack.c.b16 %v2400, %v2399
        %vm2409 = vcmask 523264
        %v2411 = vsel %vm2409, %v2376, 0
        %2413 = vmatpush.bf16.msra.mxu0 0
        %2414 = vmatpush.bf16.msra.mxu0 0
        %2415 = vmatpush.bf16.msra.mxu0 0
        %2416 = vmatpush.bf16.msra.mxu0 0
        %2417 = vmatpush.bf16.msra.mxu0 %v2404
        %2418 = vmatpush.bf16.msra.mxu0 %v2403
        %2419 = vmatpush.bf16.msra.mxu0 %v2402
        %2420 = vmatpush.bf16.msra.mxu0 %v2401
        %2421 = vmatmul.bf16.gmra.mxu0 %v2411
        %v2422 = vpop.f32.mrf.mxu0
        %v2423 = vadd.f32 0.0, %v2422
        %v2424 = vpop.f32.mrf.mxu0
        %2425 = vdwg.mxu0
        %v2426 = vadd.f32 %v2303, %v2423
        %v2427 = vld [vmem:[%s17] sm:$0x1]
        %v2429 = vperm.slane %v2427, 0
        %v2431 = vadd.f32 %v2426, %v2429
        %v2432 = vsel %vm944, %v2431, 0.0
        %2433 = vadd.xlane.f32.xlu0 %v2432
        %v2434 = vpop.xlane.xlu0 %2433
        %v2435 = vmul.f32 %v2434, %v954
        %v2436 = vsub.f32 %v2431, %v2435
        %v2437 = vmul.f32 %v2436, %v2436
        %v2438 = vsel %vm944, %v2437, 0.0
        %2439 = vadd.xlane.f32.xlu0 %v2438
        %v2440 = vpop.xlane.xlu0 %2439
        %v2441 = vmul.f32 %v2440, %v954
        %v2442 = vadd.f32 %v2441, 1e-05
        %v2443 = vrsqrt.pop %v2442
        %v2444 = vmul.f32 %v2443, %v2442
        %v2445 = vmul.f32 %v2444, %v2443
        %v2446 = vmul.f32 0.5, %v2445
        %v2447 = vsub.f32 1.5, %v2446
        %v2448 = vmul.f32 %v2443, %v2447
        %vm2449 = vweird.f32 %v2442
        %vm2450 = vweird.f32 %v2443
        %vm2451 = vmor %vm2449, %vm2450
        %v2452 = vsel %vm2451, %v2443, %v2448
        %v2453 = vmul.f32 %v2436, %v2452
        %v2454 = vperm.slane %v808, 4
        %v2455 = vmul.f32 %v2453, %v2454
        %v2456 = vperm.slane %v808, 5
        %v2457 = vadd.f32 %v2455, %v2456
        %v2458 = vld [vmem:[%s19] sm:$0xf]
        %v2459 = vld [vmem:[%s19 + $0x4] sm:$0xf]
        %v2460 = vld [vmem:[%s19 + $0x8] sm:$0xf]
        %v2461 = vld [vmem:[%s19 + $0xc] sm:$0xf]
        %v2462 = vld [vmem:[%s19 + $0x10] sm:$0xf]
        %v2463 = vld [vmem:[%s19 + $0x14] sm:$0xf]
        %v2464 = vld [vmem:[%s19 + $0x18] sm:$0xf]
        %v2465 = vld [vmem:[%s19 + $0x1c] sm:$0xf]
        %v2466 = vpack.c.bf16 %v2457, %v2457
        %v2475 = vunpack.c.l.b16 %v2458
        %v2476 = vunpack.c.l.b16 %v2459
        %v2477 = vunpack.c.l.b16 %v2460
        %v2478 = vunpack.c.l.b16 %v2461
        %v2479 = vunpack.c.l.b16 %v2462
        %v2480 = vunpack.c.l.b16 %v2463
        %v2481 = vunpack.c.l.b16 %v2464
        %v2482 = vunpack.c.l.b16 %v2465
        %v2483 = vpack.c.b16 %v2476, %v2475
        %v2484 = vpack.c.b16 %v2478, %v2477
        %v2485 = vpack.c.b16 %v2480, %v2479
        %v2486 = vpack.c.b16 %v2482, %v2481
        %v2488 = vsel %vm865, %v2483, 0
        %v2491 = vsel %vm865, %v2484, 0
        %v2494 = vsel %vm865, %v2485, 0
        %v2497 = vsel %vm865, %v2486, 0
        %v2500 = vsel %vm865, %v2466, 0
        %2502 = vmatpush.bf16.xpose.msra.mxu0 0
        %2503 = vmatpush.bf16.xpose.msra.mxu0 0
        %2504 = vmatpush.bf16.xpose.msra.mxu0 0
        %2505 = vmatpush.bf16.xpose.msra.mxu0 0
        %2506 = vmatpush.bf16.xpose.msra.mxu0 0
        %2507 = vmatpush.bf16.xpose.msra.mxu0 0
        %2508 = vmatpush.bf16.xpose.msra.mxu0 0
        %2509 = vmatpush.bf16.xpose.msra.mxu0 %v2500
        %2510 = vmatmul.bf16.gmra.mxu0 %v2488
        %v2511 = vpop.f32.mrf.mxu0
        %v2512 = vadd.f32 0.0, %v2511
        %v2513 = vpop.f32.mrf.mxu0
        %v2514 = vadd.f32 0.0, %v2513
        %2515 = vmatmul.bf16.gmra.mxu0 %v2491
        %v2516 = vpop.f32.mrf.mxu0
        %v2517 = vadd.f32 0.0, %v2516
        %v2518 = vpop.f32.mrf.mxu0
        %v2519 = vadd.f32 0.0, %v2518
        %2520 = vmatmul.bf16.gmra.mxu0 %v2494
        %v2521 = vpop.f32.mrf.mxu0
        %v2522 = vadd.f32 0.0, %v2521
        %v2523 = vpop.f32.mrf.mxu0
        %v2524 = vadd.f32 0.0, %v2523
        %2525 = vmatmul.bf16.gmra.mxu0 %v2497
        %v2526 = vpop.f32.mrf.mxu0
        %v2527 = vadd.f32 0.0, %v2526
        %v2528 = vpop.f32.mrf.mxu0
        %v2529 = vadd.f32 0.0, %v2528
        %2530 = vdwg.mxu0
        %v2531 = vmul.f32 %v2512, %v829
        %v2532 = vmul.f32 %v2514, %v830
        %v2533 = vmul.f32 %v2517, %v831
        %v2534 = vmul.f32 %v2519, %v832
        %v2535 = vsel %vm1282, %v2531, 0.0
        %2536 = vadd.xlane.f32.xlu0 %v2535
        %v2537 = vpop.xlane.xlu0 %2536
        %v2538 = vsel %vm1282, %v2532, 0.0
        %2539 = vadd.xlane.f32.xlu0 %v2538
        %v2540 = vpop.xlane.xlu0 %2539
        %v2541 = vsel %vm1282, %v2533, 0.0
        %2542 = vadd.xlane.f32.xlu0 %v2541
        %v2543 = vpop.xlane.xlu0 %2542
        %v2544 = vsel %vm1282, %v2534, 0.0
        %2545 = vadd.xlane.f32.xlu0 %v2544
        %v2546 = vpop.xlane.xlu0 %2545
        %v2547 = vmul.f32 %v2522, %v829
        %v2548 = vmul.f32 %v2524, %v830
        %v2549 = vmul.f32 %v2527, %v831
        %v2550 = vmul.f32 %v2529, %v832
        %v2551 = vsel %vm1282, %v2547, 0.0
        %2552 = vadd.xlane.f32.xlu0 %v2551
        %v2553 = vpop.xlane.xlu0 %2552
        %v2554 = vsel %vm1282, %v2548, 0.0
        %2555 = vadd.xlane.f32.xlu0 %v2554
        %v2556 = vpop.xlane.xlu0 %2555
        %v2557 = vsel %vm1282, %v2549, 0.0
        %2558 = vadd.xlane.f32.xlu0 %v2557
        %v2559 = vpop.xlane.xlu0 %2558
        %v2560 = vsel %vm1282, %v2550, 0.0
        %2561 = vadd.xlane.f32.xlu0 %v2560
        %v2562 = vpop.xlane.xlu0 %2561
        %v2563 = vadd.f32 %v846, %v838
        %v2564 = vadd.f32 %v847, %v839
        %v2565 = vadd.f32 %v848, %v840
        %v2566 = vadd.f32 %v849, %v841
        %v2567 = vadd.f32 %v850, %v842
        %v2568 = vadd.f32 %v851, %v843
        %v2569 = vadd.f32 %v852, %v844
        %v2570 = vadd.f32 %v853, %v845
        %v2571 = vadd.f32 %v2563, %v2565
        %v2572 = vadd.f32 %v2571, %v2567
        %v2573 = vadd.f32 %v2572, %v2569
        %v2574 = vrot.slane %v2573, 4
        %v2575 = vadd.f32 %v2573, %v2574
        %v2576 = vrot.slane %v2575, 2
        %v2577 = vadd.f32 %v2575, %v2576
        %v2578 = vrot.slane %v2577, 1
        %v2579 = vadd.f32 %v2577, %v2578
        %v2580 = vadd.f32 %v2564, %v2566
        %v2581 = vadd.f32 %v2580, %v2568
        %v2582 = vadd.f32 %v2581, %v2570
        %v2583 = vrot.slane %v2582, 4
        %v2584 = vadd.f32 %v2582, %v2583
        %v2585 = vrot.slane %v2584, 2
        %v2586 = vadd.f32 %v2584, %v2585
        %v2587 = vrot.slane %v2586, 1
        %v2588 = vadd.f32 %v2586, %v2587
        %v2589 = vmul.f32 %v2579, %v954
        %v2590 = vmul.f32 %v2588, %v954
        %v2591 = vsub.f32 %v2563, %v2589
        %v2592 = vsub.f32 %v2564, %v2590
        %v2593 = vsub.f32 %v2565, %v2589
        %v2594 = vsub.f32 %v2566, %v2590
        %v2595 = vsub.f32 %v2567, %v2589
        %v2596 = vsub.f32 %v2568, %v2590
        %v2597 = vsub.f32 %v2569, %v2589
        %v2598 = vsub.f32 %v2570, %v2590
        %v2599 = vmul.f32 %v2591, %v2591
        %v2600 = vmul.f32 %v2592, %v2592
        %v2601 = vmul.f32 %v2593, %v2593
        %v2602 = vmul.f32 %v2594, %v2594
        %v2603 = vmul.f32 %v2595, %v2595
        %v2604 = vmul.f32 %v2596, %v2596
        %v2605 = vmul.f32 %v2597, %v2597
        %v2606 = vmul.f32 %v2598, %v2598
        %v2607 = vadd.f32 %v2599, %v2601
        %v2608 = vadd.f32 %v2607, %v2603
        %v2609 = vadd.f32 %v2608, %v2605
        %v2610 = vrot.slane %v2609, 4
        %v2611 = vadd.f32 %v2609, %v2610
        %v2612 = vrot.slane %v2611, 2
        %v2613 = vadd.f32 %v2611, %v2612
        %v2614 = vrot.slane %v2613, 1
        %v2615 = vadd.f32 %v2613, %v2614
        %v2616 = vadd.f32 %v2600, %v2602
        %v2617 = vadd.f32 %v2616, %v2604
        %v2618 = vadd.f32 %v2617, %v2606
        %v2619 = vrot.slane %v2618, 4
        %v2620 = vadd.f32 %v2618, %v2619
        %v2621 = vrot.slane %v2620, 2
        %v2622 = vadd.f32 %v2620, %v2621
        %v2623 = vrot.slane %v2622, 1
        %v2624 = vadd.f32 %v2622, %v2623
        %v2625 = vmul.f32 %v2615, %v954
        %v2626 = vmul.f32 %v2624, %v954
        %v2627 = vadd.f32 %v2625, 1e-05
        %v2628 = vadd.f32 %v2626, 1e-05
        %v2629 = vrsqrt.pop %v2627
        %v2630 = vmul.f32 %v2629, %v2627
        %v2631 = vmul.f32 %v2630, %v2629
        %v2632 = vmul.f32 0.5, %v2631
        %v2633 = vsub.f32 1.5, %v2632
        %v2634 = vmul.f32 %v2629, %v2633
        %vm2635 = vweird.f32 %v2627
        %vm2636 = vweird.f32 %v2629
        %vm2637 = vmor %vm2635, %vm2636
        %v2638 = vsel %vm2637, %v2629, %v2634
        %v2639 = vrsqrt.pop %v2628
        %v2640 = vmul.f32 %v2639, %v2628
        %v2641 = vmul.f32 %v2640, %v2639
        %v2642 = vmul.f32 0.5, %v2641
        %v2643 = vsub.f32 1.5, %v2642
        %v2644 = vmul.f32 %v2639, %v2643
        %vm2645 = vweird.f32 %v2628
        %vm2646 = vweird.f32 %v2639
        %vm2647 = vmor %vm2645, %vm2646
        %v2648 = vsel %vm2647, %v2639, %v2644
        %v2649 = vmul.f32 %v2591, %v2638
        %v2650 = vmul.f32 %v2592, %v2648
        %v2651 = vmul.f32 %v2593, %v2638
        %v2652 = vmul.f32 %v2594, %v2648
        %v2653 = vmul.f32 %v2595, %v2638
        %v2654 = vmul.f32 %v2596, %v2648
        %v2655 = vmul.f32 %v2597, %v2638
        %v2656 = vmul.f32 %v2598, %v2648
        %2658 = vset.pattern.permute.xlu0 0
        %2659 = vperm.xlu0 %2658, %v809
        %v2660 = vpop.permute.xlu0 %2659
        %2663 = vset.pattern.permute.xlu0 0
        %2664 = vperm.xlu0 %2663, %v810
        %v2665 = vpop.permute.xlu0 %2664
        %2668 = vset.pattern.permute.xlu0 0
        %2669 = vperm.xlu0 %2668, %v811
        %v2670 = vpop.permute.xlu0 %2669
        %2673 = vset.pattern.permute.xlu0 0
        %2674 = vperm.xlu0 %2673, %v812
        %v2675 = vpop.permute.xlu0 %2674
        %v2677 = vmul.f32 %v2649, %v2660
        %v2678 = vmul.f32 %v2650, %v2660
        %v2679 = vmul.f32 %v2651, %v2665
        %v2680 = vmul.f32 %v2652, %v2665
        %v2681 = vmul.f32 %v2653, %v2670
        %v2682 = vmul.f32 %v2654, %v2670
        %v2683 = vmul.f32 %v2655, %v2675
        %v2684 = vmul.f32 %v2656, %v2675
        %2685 = vset.pattern.permute.xlu0 1
        %2686 = vperm.xlu0 %2685, %v809
        %v2687 = vpop.permute.xlu0 %2686
        %2689 = vset.pattern.permute.xlu0 1
        %2690 = vperm.xlu0 %2689, %v810
        %v2691 = vpop.permute.xlu0 %2690
        %2693 = vset.pattern.permute.xlu0 1
        %2694 = vperm.xlu0 %2693, %v811
        %v2695 = vpop.permute.xlu0 %2694
        %2697 = vset.pattern.permute.xlu0 1
        %2698 = vperm.xlu0 %2697, %v812
        %v2699 = vpop.permute.xlu0 %2698
        %v2701 = vadd.f32 %v2677, %v2687
        %v2702 = vadd.f32 %v2678, %v2687
        %v2703 = vadd.f32 %v2679, %v2691
        %v2704 = vadd.f32 %v2680, %v2691
        %v2705 = vadd.f32 %v2681, %v2695
        %v2706 = vadd.f32 %v2682, %v2695
        %v2707 = vadd.f32 %v2683, %v2699
        %v2708 = vadd.f32 %v2684, %v2699
        %v2709 = vld [vmem:[%s18] sm:$0xf]
        %v2710 = vld [vmem:[%s18 + $0x4] sm:$0xf]
        %v2711 = vld [vmem:[%s18 + $0x8] sm:$0xf]
        %v2712 = vld [vmem:[%s18 + $0xc] sm:$0xf]
        %v2713 = vpack.c.bf16 %v2703, %v2701
        %v2714 = vpack.c.bf16 %v2704, %v2702
        %v2715 = vpack.c.bf16 %v2707, %v2705
        %v2716 = vpack.c.bf16 %v2708, %v2706
        %v2721 = vunpack.c.l.b16 %v2709
        %v2722 = vunpack.c.l.b16 %v2710
        %v2723 = vunpack.c.l.b16 %v2711
        %v2724 = vunpack.c.l.b16 %v2712
        %v2725 = vpack.c.b16 %v2722, %v2721
        %v2726 = vpack.c.b16 %v2724, %v2723
        %v2728 = vsel %vm865, %v2725, 0
        %v2731 = vsel %vm865, %v2726, 0
        %2733 = vmatpush.bf16.msra.mxu0 0
        %2734 = vmatpush.bf16.msra.mxu0 0
        %2735 = vmatpush.bf16.msra.mxu0 0
        %2736 = vmatpush.bf16.msra.mxu0 0
        %2737 = vmatpush.bf16.msra.mxu0 0
        %2738 = vmatpush.bf16.msra.mxu0 0
        %2739 = vmatpush.bf16.msra.mxu0 %v2715
        %2740 = vmatpush.bf16.msra.mxu0 %v2713
        %2741 = vmatmul.bf16.gmra.mxu0 %v2728
        %v2742 = vpop.f32.mrf.mxu0
        %v2743 = vadd.f32 0.0, %v2742
        %v2744 = vpop.f32.mrf.mxu0
        %v2745 = vadd.f32 0.0, %v2744
        %2746 = vmatmul.bf16.gmra.mxu0 %v2731
        %v2747 = vpop.f32.mrf.mxu0
        %v2748 = vadd.f32 0.0, %v2747
        %v2749 = vpop.f32.mrf.mxu0
        %v2750 = vadd.f32 0.0, %v2749
        %2751 = vdwg.mxu0
        %2752 = vmatpush.bf16.msra.mxu0 0
        %2753 = vmatpush.bf16.msra.mxu0 0
        %2754 = vmatpush.bf16.msra.mxu0 0
        %2755 = vmatpush.bf16.msra.mxu0 0
        %2756 = vmatpush.bf16.msra.mxu0 0
        %2757 = vmatpush.bf16.msra.mxu0 0
        %2758 = vmatpush.bf16.msra.mxu0 %v2716
        %2759 = vmatpush.bf16.msra.mxu0 %v2714
        %2760 = vmatmul.bf16.gmra.mxu0 %v2728
        %v2761 = vpop.f32.mrf.mxu0
        %v2762 = vadd.f32 0.0, %v2761
        %v2763 = vpop.f32.mrf.mxu0
        %v2764 = vadd.f32 0.0, %v2763
        %2765 = vmatmul.bf16.gmra.mxu0 %v2731
        %v2766 = vpop.f32.mrf.mxu0
        %v2767 = vadd.f32 0.0, %v2766
        %v2768 = vpop.f32.mrf.mxu0
        %v2769 = vadd.f32 0.0, %v2768
        %2770 = vdwg.mxu0
        %v2771 = vmul.f32 %v2743, %v2537
        %v2772 = vmul.f32 %v2762, %v2537
        %v2773 = vmul.f32 %v2745, %v2540
        %v2774 = vmul.f32 %v2764, %v2540
        %v2775 = vmul.f32 %v2748, %v2543
        %v2776 = vmul.f32 %v2767, %v2543
        %v2777 = vmul.f32 %v2750, %v2546
        %v2778 = vmul.f32 %v2769, %v2546
        %v2779 = vmax.f32 %v2771, %v2775
        %v2780 = vmax.f32 %v2773, %v2777
        %v2781 = vmax.f32 %v2779, %v2780
        %v2782 = vrot.slane %v2781, 4
        %v2783 = vmax.f32 %v2781, %v2782
        %v2784 = vrot.slane %v2783, 2
        %v2785 = vmax.f32 %v2783, %v2784
        %v2786 = vrot.slane %v2785, 1
        %v2787 = vmax.f32 %v2785, %v2786
        %v2788 = vmax.f32 %v2772, %v2776
        %v2789 = vmax.f32 %v2774, %v2778
        %v2790 = vmax.f32 %v2788, %v2789
        %v2791 = vrot.slane %v2790, 4
        %v2792 = vmax.f32 %v2790, %v2791
        %v2793 = vrot.slane %v2792, 2
        %v2794 = vmax.f32 %v2792, %v2793
        %v2795 = vrot.slane %v2794, 1
        %v2796 = vmax.f32 %v2794, %v2795
        %v2797 = vsub.f32 %v2771, %v2787
        %v2798 = vsub.f32 %v2772, %v2796
        %v2799 = vsub.f32 %v2773, %v2787
        %v2800 = vsub.f32 %v2774, %v2796
        %v2801 = vsub.f32 %v2775, %v2787
        %v2802 = vsub.f32 %v2776, %v2796
        %v2803 = vsub.f32 %v2777, %v2787
        %v2804 = vsub.f32 %v2778, %v2796
        %v2805 = vmul.f32 %v2797, 1.442695
        %v2806 = vpow.pop %v2805
        %v2807 = vmul.f32 %v2798, 1.442695
        %v2808 = vpow.pop %v2807
        %v2809 = vmul.f32 %v2799, 1.442695
        %v2810 = vpow.pop %v2809
        %v2811 = vmul.f32 %v2800, 1.442695
        %v2812 = vpow.pop %v2811
        %v2813 = vmul.f32 %v2801, 1.442695
        %v2814 = vpow.pop %v2813
        %v2815 = vmul.f32 %v2802, 1.442695
        %v2816 = vpow.pop %v2815
        %v2817 = vmul.f32 %v2803, 1.442695
        %v2818 = vpow.pop %v2817
        %v2819 = vmul.f32 %v2804, 1.442695
        %v2820 = vpow.pop %v2819
        %v2822 = vsel %vm865, %v834, 0
        %v2825 = vsel %vm865, %v835, 0
        %v2828 = vsel %vm865, %v836, 0
        %v2831 = vsel %vm865, %v837, 0
        %2833 = vmatpush.msra.mxu0 0.0
        %2834 = vmatpush.msra.mxu0 0.0
        %2835 = vmatpush.msra.mxu0 0.0
        %2836 = vmatpush.msra.mxu0 0.0
        %2837 = vmatpush.msra.mxu0 0.0
        %2838 = vmatpush.msra.mxu0 0.0
        %2839 = vmatpush.msra.mxu0 0.0
        %2840 = vmatpush.msra.mxu0 0.0
        %2841 = vmatpush.msra.mxu0 0.0
        %2842 = vmatpush.msra.mxu0 0.0
        %2843 = vmatpush.msra.mxu0 0.0
        %2844 = vmatpush.msra.mxu0 0.0
        %2845 = vmatpush.msra.mxu0 %v2818
        %2846 = vmatpush.msra.mxu0 %v2814
        %2847 = vmatpush.msra.mxu0 %v2810
        %2848 = vmatpush.msra.mxu0 %v2806
        %2849 = vmatmul.f32.gmra.mxu0 %v2822
        %v2850 = vpop.f32.mrf.mxu0
        %v2851 = vadd.f32 0.0, %v2850
        %2852 = vmatmul.f32.gmra.mxu0 %v2825
        %v2853 = vpop.f32.mrf.mxu0
        %v2854 = vadd.f32 0.0, %v2853
        %2855 = vmatmul.f32.gmra.mxu0 %v2828
        %v2856 = vpop.f32.mrf.mxu0
        %v2857 = vadd.f32 0.0, %v2856
        %2858 = vmatmul.f32.gmra.mxu0 %v2831
        %v2859 = vpop.f32.mrf.mxu0
        %v2860 = vadd.f32 0.0, %v2859
        %2861 = vdwg.mxu0
        %2862 = vmatpush.msra.mxu0 0.0
        %2863 = vmatpush.msra.mxu0 0.0
        %2864 = vmatpush.msra.mxu0 0.0
        %2865 = vmatpush.msra.mxu0 0.0
        %2866 = vmatpush.msra.mxu0 0.0
        %2867 = vmatpush.msra.mxu0 0.0
        %2868 = vmatpush.msra.mxu0 0.0
        %2869 = vmatpush.msra.mxu0 0.0
        %2870 = vmatpush.msra.mxu0 0.0
        %2871 = vmatpush.msra.mxu0 0.0
        %2872 = vmatpush.msra.mxu0 0.0
        %2873 = vmatpush.msra.mxu0 0.0
        %2874 = vmatpush.msra.mxu0 %v2820
        %2875 = vmatpush.msra.mxu0 %v2816
        %2876 = vmatpush.msra.mxu0 %v2812
        %2877 = vmatpush.msra.mxu0 %v2808
        %2878 = vmatmul.f32.gmra.mxu0 %v2822
        %v2879 = vpop.f32.mrf.mxu0
        %v2880 = vadd.f32 0.0, %v2879
        %2881 = vmatmul.f32.gmra.mxu0 %v2825
        %v2882 = vpop.f32.mrf.mxu0
        %v2883 = vadd.f32 0.0, %v2882
        %2884 = vmatmul.f32.gmra.mxu0 %v2828
        %v2885 = vpop.f32.mrf.mxu0
        %v2886 = vadd.f32 0.0, %v2885
        %2887 = vmatmul.f32.gmra.mxu0 %v2831
        %v2888 = vpop.f32.mrf.mxu0
        %v2889 = vadd.f32 0.0, %v2888
        %2890 = vdwg.mxu0
        %v2891 = vmul.f32 %v2806, %v2553
        %v2892 = vmul.f32 %v2808, %v2553
        %v2893 = vmul.f32 %v2810, %v2556
        %v2894 = vmul.f32 %v2812, %v2556
        %v2895 = vmul.f32 %v2814, %v2559
        %v2896 = vmul.f32 %v2816, %v2559
        %v2897 = vmul.f32 %v2818, %v2562
        %v2898 = vmul.f32 %v2820, %v2562
        %v2899 = vrcp.pop %v2851
        %v2900 = vrcp.pop %v2880
        %v2901 = vrcp.pop %v2854
        %v2902 = vrcp.pop %v2883
        %v2903 = vrcp.pop %v2857
        %v2904 = vrcp.pop %v2886
        %v2905 = vrcp.pop %v2860
        %v2906 = vrcp.pop %v2889
        %v2907 = vmul.f32 %v2891, %v2899
        %v2908 = vmul.f32 %v2892, %v2900
        %v2909 = vmul.f32 %v2893, %v2901
        %v2910 = vmul.f32 %v2894, %v2902
        %v2911 = vmul.f32 %v2895, %v2903
        %v2912 = vmul.f32 %v2896, %v2904
        %v2913 = vmul.f32 %v2897, %v2905
        %v2914 = vmul.f32 %v2898, %v2906
        %v2915 = vld [vmem:[%s20] sm:$0xf]
        %v2916 = vld [vmem:[%s20 + $0x4] sm:$0xf]
        %v2917 = vld [vmem:[%s20 + $0x8] sm:$0xf]
        %v2918 = vld [vmem:[%s20 + $0xc] sm:$0xf]
        %v2919 = vpack.c.bf16 %v2909, %v2907
        %v2920 = vpack.c.bf16 %v2910, %v2908
        %v2921 = vpack.c.bf16 %v2913, %v2911
        %v2922 = vpack.c.bf16 %v2914, %v2912
        %v2927 = vunpack.c.l.b16 %v2915
        %v2928 = vunpack.c.l.b16 %v2916
        %v2929 = vunpack.c.l.b16 %v2917
        %v2930 = vunpack.c.l.b16 %v2918
        %v2931 = vpack.c.b16 %v2928, %v2927
        %v2932 = vpack.c.b16 %v2930, %v2929
        %v2934 = vsel %vm865, %v2931, 0
        %v2937 = vsel %vm865, %v2932, 0
        %2939 = vmatpush.bf16.msra.mxu0 0
        %2940 = vmatpush.bf16.msra.mxu0 0
        %2941 = vmatpush.bf16.msra.mxu0 0
        %2942 = vmatpush.bf16.msra.mxu0 0
        %2943 = vmatpush.bf16.msra.mxu0 0
        %2944 = vmatpush.bf16.msra.mxu0 0
        %2945 = vmatpush.bf16.msra.mxu0 %v2921
        %2946 = vmatpush.bf16.msra.mxu0 %v2919
        %2947 = vmatmul.bf16.gmra.mxu0 %v2934
        %v2948 = vpop.f32.mrf.mxu0
        %v2949 = vadd.f32 0.0, %v2948
        %v2950 = vpop.f32.mrf.mxu0
        %v2951 = vadd.f32 0.0, %v2950
        %2952 = vmatmul.bf16.gmra.mxu0 %v2937
        %v2953 = vpop.f32.mrf.mxu0
        %v2954 = vadd.f32 0.0, %v2953
        %v2955 = vpop.f32.mrf.mxu0
        %v2956 = vadd.f32 0.0, %v2955
        %2957 = vdwg.mxu0
        %2958 = vmatpush.bf16.msra.mxu0 0
        %2959 = vmatpush.bf16.msra.mxu0 0
        %2960 = vmatpush.bf16.msra.mxu0 0
        %2961 = vmatpush.bf16.msra.mxu0 0
        %2962 = vmatpush.bf16.msra.mxu0 0
        %2963 = vmatpush.bf16.msra.mxu0 0
        %2964 = vmatpush.bf16.msra.mxu0 %v2922
        %2965 = vmatpush.bf16.msra.mxu0 %v2920
        %2966 = vmatmul.bf16.gmra.mxu0 %v2934
        %v2967 = vpop.f32.mrf.mxu0
        %v2968 = vadd.f32 0.0, %v2967
        %v2969 = vpop.f32.mrf.mxu0
        %v2970 = vadd.f32 0.0, %v2969
        %2971 = vmatmul.bf16.gmra.mxu0 %v2937
        %v2972 = vpop.f32.mrf.mxu0
        %v2973 = vadd.f32 0.0, %v2972
        %v2974 = vpop.f32.mrf.mxu0
        %v2975 = vadd.f32 0.0, %v2974
        %2976 = vdwg.mxu0
        %v2977 = vadd.f32 %v2563, %v2949
        %v2978 = vadd.f32 %v2564, %v2968
        %v2979 = vadd.f32 %v2565, %v2951
        %v2980 = vadd.f32 %v2566, %v2970
        %v2981 = vadd.f32 %v2567, %v2954
        %v2982 = vadd.f32 %v2568, %v2973
        %v2983 = vadd.f32 %v2569, %v2956
        %v2984 = vadd.f32 %v2570, %v2975
        %v2985 = vld [vmem:[%s21] sm:$0xff]
        %v2986 = vld [vmem:[%s21 + $0x8] sm:$0xff]
        %v2987 = vld [vmem:[%s21 + $0x10] sm:$0xff]
        %v2988 = vld [vmem:[%s21 + $0x18] sm:$0xff]
        %2990 = vset.pattern.permute.xlu0 0
        %2991 = vperm.xlu0 %2990, %v2985
        %v2992 = vpop.permute.xlu0 %2991
        %2995 = vset.pattern.permute.xlu0 0
        %2996 = vperm.xlu0 %2995, %v2986
        %v2997 = vpop.permute.xlu0 %2996
        %3000 = vset.pattern.permute.xlu0 0
        %3001 = vperm.xlu0 %3000, %v2987
        %v3002 = vpop.permute.xlu0 %3001
        %3005 = vset.pattern.permute.xlu0 0
        %3006 = vperm.xlu0 %3005, %v2988
        %v3007 = vpop.permute.xlu0 %3006
        %v3009 = vadd.f32 %v2977, %v2992
        %v3010 = vadd.f32 %v2978, %v2992
        %v3011 = vadd.f32 %v2979, %v2997
        %v3012 = vadd.f32 %v2980, %v2997
        %v3013 = vadd.f32 %v2981, %v3002
        %v3014 = vadd.f32 %v2982, %v3002
        %v3015 = vadd.f32 %v2983, %v3007
        %v3016 = vadd.f32 %v2984, %v3007
        %v3017 = vadd.f32 %v3009, %v3011
        %v3018 = vadd.f32 %v3017, %v3013
        %v3019 = vadd.f32 %v3018, %v3015
        %v3020 = vrot.slane %v3019, 4
        %v3021 = vadd.f32 %v3019, %v3020
        %v3022 = vrot.slane %v3021, 2
        %v3023 = vadd.f32 %v3021, %v3022
        %v3024 = vrot.slane %v3023, 1
        %v3025 = vadd.f32 %v3023, %v3024
        %v3026 = vadd.f32 %v3010, %v3012
        %v3027 = vadd.f32 %v3026, %v3014
        %v3028 = vadd.f32 %v3027, %v3016
        %v3029 = vrot.slane %v3028, 4
        %v3030 = vadd.f32 %v3028, %v3029
        %v3031 = vrot.slane %v3030, 2
        %v3032 = vadd.f32 %v3030, %v3031
        %v3033 = vrot.slane %v3032, 1
        %v3034 = vadd.f32 %v3032, %v3033
        %v3035 = vmul.f32 %v3025, %v954
        %v3036 = vmul.f32 %v3034, %v954
        %v3037 = vsub.f32 %v3009, %v3035
        %v3038 = vsub.f32 %v3010, %v3036
        %v3039 = vsub.f32 %v3011, %v3035
        %v3040 = vsub.f32 %v3012, %v3036
        %v3041 = vsub.f32 %v3013, %v3035
        %v3042 = vsub.f32 %v3014, %v3036
        %v3043 = vsub.f32 %v3015, %v3035
        %v3044 = vsub.f32 %v3016, %v3036
        %v3045 = vmul.f32 %v3037, %v3037
        %v3046 = vmul.f32 %v3038, %v3038
        %v3047 = vmul.f32 %v3039, %v3039
        %v3048 = vmul.f32 %v3040, %v3040
        %v3049 = vmul.f32 %v3041, %v3041
        %v3050 = vmul.f32 %v3042, %v3042
        %v3051 = vmul.f32 %v3043, %v3043
        %v3052 = vmul.f32 %v3044, %v3044
        %v3053 = vadd.f32 %v3045, %v3047
        %v3054 = vadd.f32 %v3053, %v3049
        %v3055 = vadd.f32 %v3054, %v3051
        %v3056 = vrot.slane %v3055, 4
        %v3057 = vadd.f32 %v3055, %v3056
        %v3058 = vrot.slane %v3057, 2
        %v3059 = vadd.f32 %v3057, %v3058
        %v3060 = vrot.slane %v3059, 1
        %v3061 = vadd.f32 %v3059, %v3060
        %v3062 = vadd.f32 %v3046, %v3048
        %v3063 = vadd.f32 %v3062, %v3050
        %v3064 = vadd.f32 %v3063, %v3052
        %v3065 = vrot.slane %v3064, 4
        %v3066 = vadd.f32 %v3064, %v3065
        %v3067 = vrot.slane %v3066, 2
        %v3068 = vadd.f32 %v3066, %v3067
        %v3069 = vrot.slane %v3068, 1
        %v3070 = vadd.f32 %v3068, %v3069
        %v3071 = vmul.f32 %v3061, %v954
        %v3072 = vmul.f32 %v3070, %v954
        %v3073 = vadd.f32 %v3071, 1e-05
        %v3074 = vadd.f32 %v3072, 1e-05
        %v3075 = vrsqrt.pop %v3073
        %v3076 = vmul.f32 %v3075, %v3073
        %v3077 = vmul.f32 %v3076, %v3075
        %v3078 = vmul.f32 0.5, %v3077
        %v3079 = vsub.f32 1.5, %v3078
        %v3080 = vmul.f32 %v3075, %v3079
        %vm3081 = vweird.f32 %v3073
        %vm3082 = vweird.f32 %v3075
        %vm3083 = vmor %vm3081, %vm3082
        %v3084 = vsel %vm3083, %v3075, %v3080
        %v3085 = vrsqrt.pop %v3074
        %v3086 = vmul.f32 %v3085, %v3074
        %v3087 = vmul.f32 %v3086, %v3085
        %v3088 = vmul.f32 0.5, %v3087
        %v3089 = vsub.f32 1.5, %v3088
        %v3090 = vmul.f32 %v3085, %v3089
        %vm3091 = vweird.f32 %v3074
        %vm3092 = vweird.f32 %v3085
        %vm3093 = vmor %vm3091, %vm3092
        %v3094 = vsel %vm3093, %v3085, %v3090
        %v3095 = vmul.f32 %v3037, %v3084
        %v3096 = vmul.f32 %v3038, %v3094
        %v3097 = vmul.f32 %v3039, %v3084
        %v3098 = vmul.f32 %v3040, %v3094
        %v3099 = vmul.f32 %v3041, %v3084
        %v3100 = vmul.f32 %v3042, %v3094
        %v3101 = vmul.f32 %v3043, %v3084
        %v3102 = vmul.f32 %v3044, %v3094
        %3103 = vset.pattern.permute.xlu0 2
        %3104 = vperm.xlu0 %3103, %v809
        %v3105 = vpop.permute.xlu0 %3104
        %3107 = vset.pattern.permute.xlu0 2
        %3108 = vperm.xlu0 %3107, %v810
        %v3109 = vpop.permute.xlu0 %3108
        %3111 = vset.pattern.permute.xlu0 2
        %3112 = vperm.xlu0 %3111, %v811
        %v3113 = vpop.permute.xlu0 %3112
        %3115 = vset.pattern.permute.xlu0 2
        %3116 = vperm.xlu0 %3115, %v812
        %v3117 = vpop.permute.xlu0 %3116
        %v3119 = vmul.f32 %v3095, %v3105
        %v3120 = vmul.f32 %v3096, %v3105
        %v3121 = vmul.f32 %v3097, %v3109
        %v3122 = vmul.f32 %v3098, %v3109
        %v3123 = vmul.f32 %v3099, %v3113
        %v3124 = vmul.f32 %v3100, %v3113
        %v3125 = vmul.f32 %v3101, %v3117
        %v3126 = vmul.f32 %v3102, %v3117
        %3127 = vset.pattern.permute.xlu0 3
        %3128 = vperm.xlu0 %3127, %v809
        %v3129 = vpop.permute.xlu0 %3128
        %3131 = vset.pattern.permute.xlu0 3
        %3132 = vperm.xlu0 %3131, %v810
        %v3133 = vpop.permute.xlu0 %3132
        %3135 = vset.pattern.permute.xlu0 3
        %3136 = vperm.xlu0 %3135, %v811
        %v3137 = vpop.permute.xlu0 %3136
        %3139 = vset.pattern.permute.xlu0 3
        %3140 = vperm.xlu0 %3139, %v812
        %v3141 = vpop.permute.xlu0 %3140
        %v3143 = vadd.f32 %v3119, %v3129
        %v3144 = vadd.f32 %v3120, %v3129
        %v3145 = vadd.f32 %v3121, %v3133
        %v3146 = vadd.f32 %v3122, %v3133
        %v3147 = vadd.f32 %v3123, %v3137
        %v3148 = vadd.f32 %v3124, %v3137
        %v3149 = vadd.f32 %v3125, %v3141
        %v3150 = vadd.f32 %v3126, %v3141
        %v3151 = vld [vmem:[%s22] sm:$0xf]
        %v3152 = vld [vmem:[%s22 + $0x4] sm:$0xf]
        %v3153 = vld [vmem:[%s22 + $0x8] sm:$0xf]
        %v3154 = vld [vmem:[%s22 + $0xc] sm:$0xf]
        %v3155 = vld [vmem:[%s22 + $0x10] sm:$0xf]
        %v3156 = vld [vmem:[%s22 + $0x14] sm:$0xf]
        %v3157 = vld [vmem:[%s22 + $0x18] sm:$0xf]
        %v3158 = vld [vmem:[%s22 + $0x1c] sm:$0xf]
        %v3159 = vpack.c.bf16 %v3145, %v3143
        %v3160 = vpack.c.bf16 %v3146, %v3144
        %v3161 = vpack.c.bf16 %v3149, %v3147
        %v3162 = vpack.c.bf16 %v3150, %v3148
        %v3163 = vld [vmem:[%s23] sm:$0xff]
        %v3164 = vld [vmem:[%s23 + $0x8] sm:$0xff]
        %v3165 = vld [vmem:[%s23 + $0x10] sm:$0xff]
        %v3166 = vld [vmem:[%s23 + $0x18] sm:$0xff]
        %v3167 = vld [vmem:[%s23 + $0x20] sm:$0xff]
        %v3168 = vld [vmem:[%s23 + $0x28] sm:$0xff]
        %v3169 = vld [vmem:[%s23 + $0x30] sm:$0xff]
        %v3170 = vld [vmem:[%s23 + $0x38] sm:$0xff]
        %3172 = vset.pattern.permute.xlu0 0
        %3173 = vperm.xlu0 %3172, %v3163
        %v3174 = vpop.permute.xlu0 %3173
        %3177 = vset.pattern.permute.xlu0 0
        %3178 = vperm.xlu0 %3177, %v3164
        %v3179 = vpop.permute.xlu0 %3178
        %3182 = vset.pattern.permute.xlu0 0
        %3183 = vperm.xlu0 %3182, %v3165
        %v3184 = vpop.permute.xlu0 %3183
        %3187 = vset.pattern.permute.xlu0 0
        %3188 = vperm.xlu0 %3187, %v3166
        %v3189 = vpop.permute.xlu0 %3188
        %3192 = vset.pattern.permute.xlu0 0
        %3193 = vperm.xlu0 %3192, %v3167
        %v3194 = vpop.permute.xlu0 %3193
        %3197 = vset.pattern.permute.xlu0 0
        %3198 = vperm.xlu0 %3197, %v3168
        %v3199 = vpop.permute.xlu0 %3198
        %3202 = vset.pattern.permute.xlu0 0
        %3203 = vperm.xlu0 %3202, %v3169
        %v3204 = vpop.permute.xlu0 %3203
        %3207 = vset.pattern.permute.xlu0 0
        %3208 = vperm.xlu0 %3207, %v3170
        %v3209 = vpop.permute.xlu0 %3208
        %v3219 = vunpack.c.l.b16 %v3151
        %v3220 = vunpack.c.l.b16 %v3152
        %v3221 = vunpack.c.l.b16 %v3153
        %v3222 = vunpack.c.l.b16 %v3154
        %v3223 = vunpack.c.l.b16 %v3155
        %v3224 = vunpack.c.l.b16 %v3156
        %v3225 = vunpack.c.l.b16 %v3157
        %v3226 = vunpack.c.l.b16 %v3158
        %v3227 = vpack.c.b16 %v3220, %v3219
        %v3228 = vpack.c.b16 %v3222, %v3221
        %v3229 = vpack.c.b16 %v3224, %v3223
        %v3230 = vpack.c.b16 %v3226, %v3225
        %v3232 = vsel %vm865, %v3227, 0
        %v3235 = vsel %vm865, %v3228, 0
        %v3238 = vsel %vm865, %v3229, 0
        %v3241 = vsel %vm865, %v3230, 0
        %3243 = vmatpush.bf16.msra.mxu0 0
        %3244 = vmatpush.bf16.msra.mxu0 0
        %3245 = vmatpush.bf16.msra.mxu0 0
        %3246 = vmatpush.bf16.msra.mxu0 0
        %3247 = vmatpush.bf16.msra.mxu0 0
        %3248 = vmatpush.bf16.msra.mxu0 0
        %3249 = vmatpush.bf16.msra.mxu0 %v3161
        %3250 = vmatpush.bf16.msra.mxu0 %v3159
        %3251 = vmatmul.bf16.gmra.mxu0 %v3232
        %v3252 = vpop.f32.mrf.mxu0
        %v3253 = vadd.f32 %v3174, %v3252
        %v3254 = vpop.f32.mrf.mxu0
        %v3255 = vadd.f32 %v3179, %v3254
        %3256 = vmatmul.bf16.gmra.mxu0 %v3235
        %v3257 = vpop.f32.mrf.mxu0
        %v3258 = vadd.f32 %v3184, %v3257
        %v3259 = vpop.f32.mrf.mxu0
        %v3260 = vadd.f32 %v3189, %v3259
        %3261 = vmatmul.bf16.gmra.mxu0 %v3238
        %v3262 = vpop.f32.mrf.mxu0
        %v3263 = vadd.f32 %v3194, %v3262
        %v3264 = vpop.f32.mrf.mxu0
        %v3265 = vadd.f32 %v3199, %v3264
        %3266 = vmatmul.bf16.gmra.mxu0 %v3241
        %v3267 = vpop.f32.mrf.mxu0
        %v3268 = vadd.f32 %v3204, %v3267
        %v3269 = vpop.f32.mrf.mxu0
        %v3270 = vadd.f32 %v3209, %v3269
        %3271 = vdwg.mxu0
        %3272 = vmatpush.bf16.msra.mxu0 0
        %3273 = vmatpush.bf16.msra.mxu0 0
        %3274 = vmatpush.bf16.msra.mxu0 0
        %3275 = vmatpush.bf16.msra.mxu0 0
        %3276 = vmatpush.bf16.msra.mxu0 0
        %3277 = vmatpush.bf16.msra.mxu0 0
        %3278 = vmatpush.bf16.msra.mxu0 %v3162
        %3279 = vmatpush.bf16.msra.mxu0 %v3160
        %3280 = vmatmul.bf16.gmra.mxu0 %v3232
        %v3281 = vpop.f32.mrf.mxu0
        %v3282 = vadd.f32 %v3174, %v3281
        %v3283 = vpop.f32.mrf.mxu0
        %v3284 = vadd.f32 %v3179, %v3283
        %3285 = vmatmul.bf16.gmra.mxu0 %v3235
        %v3286 = vpop.f32.mrf.mxu0
        %v3287 = vadd.f32 %v3184, %v3286
        %v3288 = vpop.f32.mrf.mxu0
        %v3289 = vadd.f32 %v3189, %v3288
        %3290 = vmatmul.bf16.gmra.mxu0 %v3238
        %v3291 = vpop.f32.mrf.mxu0
        %v3292 = vadd.f32 %v3194, %v3291
        %v3293 = vpop.f32.mrf.mxu0
        %v3294 = vadd.f32 %v3199, %v3293
        %3295 = vmatmul.bf16.gmra.mxu0 %v3241
        %v3296 = vpop.f32.mrf.mxu0
        %v3297 = vadd.f32 %v3204, %v3296
        %v3298 = vpop.f32.mrf.mxu0
        %v3299 = vadd.f32 %v3209, %v3298
        %3300 = vdwg.mxu0
        %v3301 = vmul.f32 %v3253, %v3253
        %v3302 = vmul.f32 %v3282, %v3282
        %v3303 = vmul.f32 %v3255, %v3255
        %v3304 = vmul.f32 %v3284, %v3284
        %v3305 = vmul.f32 %v3258, %v3258
        %v3306 = vmul.f32 %v3287, %v3287
        %v3307 = vmul.f32 %v3260, %v3260
        %v3308 = vmul.f32 %v3289, %v3289
        %v3309 = vmul.f32 %v3263, %v3263
        %v3310 = vmul.f32 %v3292, %v3292
        %v3311 = vmul.f32 %v3265, %v3265
        %v3312 = vmul.f32 %v3294, %v3294
        %v3313 = vmul.f32 %v3268, %v3268
        %v3314 = vmul.f32 %v3297, %v3297
        %v3315 = vmul.f32 %v3270, %v3270
        %v3316 = vmul.f32 %v3299, %v3299
        %v3317 = vmul.f32 %v3253, %v3301
        %v3318 = vmul.f32 %v3282, %v3302
        %v3319 = vmul.f32 %v3255, %v3303
        %v3320 = vmul.f32 %v3284, %v3304
        %v3321 = vmul.f32 %v3258, %v3305
        %v3322 = vmul.f32 %v3287, %v3306
        %v3323 = vmul.f32 %v3260, %v3307
        %v3324 = vmul.f32 %v3289, %v3308
        %v3325 = vmul.f32 %v3263, %v3309
        %v3326 = vmul.f32 %v3292, %v3310
        %v3327 = vmul.f32 %v3265, %v3311
        %v3328 = vmul.f32 %v3294, %v3312
        %v3329 = vmul.f32 %v3268, %v3313
        %v3330 = vmul.f32 %v3297, %v3314
        %v3331 = vmul.f32 %v3270, %v3315
        %v3332 = vmul.f32 %v3299, %v3316
        %v3333 = vmul.f32 %v3317, 0.044715
        %v3334 = vmul.f32 %v3318, 0.044715
        %v3335 = vmul.f32 %v3319, 0.044715
        %v3336 = vmul.f32 %v3320, 0.044715
        %v3337 = vmul.f32 %v3321, 0.044715
        %v3338 = vmul.f32 %v3322, 0.044715
        %v3339 = vmul.f32 %v3323, 0.044715
        %v3340 = vmul.f32 %v3324, 0.044715
        %v3341 = vmul.f32 %v3325, 0.044715
        %v3342 = vmul.f32 %v3326, 0.044715
        %v3343 = vmul.f32 %v3327, 0.044715
        %v3344 = vmul.f32 %v3328, 0.044715
        %v3345 = vmul.f32 %v3329, 0.044715
        %v3346 = vmul.f32 %v3330, 0.044715
        %v3347 = vmul.f32 %v3331, 0.044715
        %v3348 = vmul.f32 %v3332, 0.044715
        %v3349 = vadd.f32 %v3253, %v3333
        %v3350 = vadd.f32 %v3282, %v3334
        %v3351 = vadd.f32 %v3255, %v3335
        %v3352 = vadd.f32 %v3284, %v3336
        %v3353 = vadd.f32 %v3258, %v3337
        %v3354 = vadd.f32 %v3287, %v3338
        %v3355 = vadd.f32 %v3260, %v3339
        %v3356 = vadd.f32 %v3289, %v3340
        %v3357 = vadd.f32 %v3263, %v3341
        %v3358 = vadd.f32 %v3292, %v3342
        %v3359 = vadd.f32 %v3265, %v3343
        %v3360 = vadd.f32 %v3294, %v3344
        %v3361 = vadd.f32 %v3268, %v3345
        %v3362 = vadd.f32 %v3297, %v3346
        %v3363 = vadd.f32 %v3270, %v3347
        %v3364 = vadd.f32 %v3299, %v3348
        %v3365 = vmul.f32 %v3349, 0.7978846
        %v3366 = vmul.f32 %v3350, 0.7978846
        %v3367 = vmul.f32 %v3351, 0.7978846
        %v3368 = vmul.f32 %v3352, 0.7978846
        %v3369 = vmul.f32 %v3353, 0.7978846
        %v3370 = vmul.f32 %v3354, 0.7978846
        %v3371 = vmul.f32 %v3355, 0.7978846
        %v3372 = vmul.f32 %v3356, 0.7978846
        %v3373 = vmul.f32 %v3357, 0.7978846
        %v3374 = vmul.f32 %v3358, 0.7978846
        %v3375 = vmul.f32 %v3359, 0.7978846
        %v3376 = vmul.f32 %v3360, 0.7978846
        %v3377 = vmul.f32 %v3361, 0.7978846
        %v3378 = vmul.f32 %v3362, 0.7978846
        %v3379 = vmul.f32 %v3363, 0.7978846
        %v3380 = vmul.f32 %v3364, 0.7978846
        %v3381 = vtanh.pop %v3365
        %v3382 = vtanh.pop %v3366
        %v3383 = vtanh.pop %v3367
        %v3384 = vtanh.pop %v3368
        %v3385 = vtanh.pop %v3369
        %v3386 = vtanh.pop %v3370
        %v3387 = vtanh.pop %v3371
        %v3388 = vtanh.pop %v3372
        %v3389 = vtanh.pop %v3373
        %v3390 = vtanh.pop %v3374
        %v3391 = vtanh.pop %v3375
        %v3392 = vtanh.pop %v3376
        %v3393 = vtanh.pop %v3377
        %v3394 = vtanh.pop %v3378
        %v3395 = vtanh.pop %v3379
        %v3396 = vtanh.pop %v3380
        %v3397 = vadd.f32 %v3381, 1.0
        %v3398 = vadd.f32 %v3382, 1.0
        %v3399 = vadd.f32 %v3383, 1.0
        %v3400 = vadd.f32 %v3384, 1.0
        %v3401 = vadd.f32 %v3385, 1.0
        %v3402 = vadd.f32 %v3386, 1.0
        %v3403 = vadd.f32 %v3387, 1.0
        %v3404 = vadd.f32 %v3388, 1.0
        %v3405 = vadd.f32 %v3389, 1.0
        %v3406 = vadd.f32 %v3390, 1.0
        %v3407 = vadd.f32 %v3391, 1.0
        %v3408 = vadd.f32 %v3392, 1.0
        %v3409 = vadd.f32 %v3393, 1.0
        %v3410 = vadd.f32 %v3394, 1.0
        %v3411 = vadd.f32 %v3395, 1.0
        %v3412 = vadd.f32 %v3396, 1.0
        %v3413 = vmul.f32 %v3397, 0.5
        %v3414 = vmul.f32 %v3398, 0.5
        %v3415 = vmul.f32 %v3399, 0.5
        %v3416 = vmul.f32 %v3400, 0.5
        %v3417 = vmul.f32 %v3401, 0.5
        %v3418 = vmul.f32 %v3402, 0.5
        %v3419 = vmul.f32 %v3403, 0.5
        %v3420 = vmul.f32 %v3404, 0.5
        %v3421 = vmul.f32 %v3405, 0.5
        %v3422 = vmul.f32 %v3406, 0.5
        %v3423 = vmul.f32 %v3407, 0.5
        %v3424 = vmul.f32 %v3408, 0.5
        %v3425 = vmul.f32 %v3409, 0.5
        %v3426 = vmul.f32 %v3410, 0.5
        %v3427 = vmul.f32 %v3411, 0.5
        %v3428 = vmul.f32 %v3412, 0.5
        %v3429 = vmul.f32 %v3253, %v3413
        %v3430 = vmul.f32 %v3282, %v3414
        %v3431 = vmul.f32 %v3255, %v3415
        %v3432 = vmul.f32 %v3284, %v3416
        %v3433 = vmul.f32 %v3258, %v3417
        %v3434 = vmul.f32 %v3287, %v3418
        %v3435 = vmul.f32 %v3260, %v3419
        %v3436 = vmul.f32 %v3289, %v3420
        %v3437 = vmul.f32 %v3263, %v3421
        %v3438 = vmul.f32 %v3292, %v3422
        %v3439 = vmul.f32 %v3265, %v3423
        %v3440 = vmul.f32 %v3294, %v3424
        %v3441 = vmul.f32 %v3268, %v3425
        %v3442 = vmul.f32 %v3297, %v3426
        %v3443 = vmul.f32 %v3270, %v3427
        %v3444 = vmul.f32 %v3299, %v3428
        %v3445 = vld [vmem:[%s24] sm:$0xf]
        %v3446 = vld [vmem:[%s24 + $0x4] sm:$0xf]
        %v3447 = vld [vmem:[%s24 + $0x8] sm:$0xf]
        %v3448 = vld [vmem:[%s24 + $0xc] sm:$0xf]
        %v3449 = vpack.c.bf16 %v3431, %v3429
        %v3450 = vpack.c.bf16 %v3432, %v3430
        %v3451 = vpack.c.bf16 %v3435, %v3433
        %v3452 = vpack.c.bf16 %v3436, %v3434
        %v3453 = vpack.c.bf16 %v3439, %v3437
        %v3454 = vpack.c.bf16 %v3440, %v3438
        %v3455 = vpack.c.bf16 %v3443, %v3441
        %v3456 = vpack.c.bf16 %v3444, %v3442
        %v3461 = vunpack.c.l.b16 %v3445
        %v3462 = vunpack.c.l.b16 %v3446
        %v3463 = vunpack.c.l.b16 %v3447
        %v3464 = vunpack.c.l.b16 %v3448
        %v3465 = vpack.c.b16 %v3462, %v3461
        %v3466 = vpack.c.b16 %v3464, %v3463
        %v3468 = vsel %vm2409, %v3465, 0
        %v3471 = vsel %vm2409, %v3466, 0
        %3473 = vmatpush.bf16.msra.mxu0 0
        %3474 = vmatpush.bf16.msra.mxu0 0
        %3475 = vmatpush.bf16.msra.mxu0 0
        %3476 = vmatpush.bf16.msra.mxu0 0
        %3477 = vmatpush.bf16.msra.mxu0 %v3455
        %3478 = vmatpush.bf16.msra.mxu0 %v3453
        %3479 = vmatpush.bf16.msra.mxu0 %v3451
        %3480 = vmatpush.bf16.msra.mxu0 %v3449
        %3481 = vmatmul.bf16.gmra.mxu0 %v3468
        %v3482 = vpop.f32.mrf.mxu0
        %v3483 = vadd.f32 0.0, %v3482
        %v3484 = vpop.f32.mrf.mxu0
        %v3485 = vadd.f32 0.0, %v3484
        %3486 = vmatmul.bf16.gmra.mxu0 %v3471
        %v3487 = vpop.f32.mrf.mxu0
        %v3488 = vadd.f32 0.0, %v3487
        %v3489 = vpop.f32.mrf.mxu0
        %v3490 = vadd.f32 0.0, %v3489
        %3491 = vdwg.mxu0
        %3492 = vmatpush.bf16.msra.mxu0 0
        %3493 = vmatpush.bf16.msra.mxu0 0
        %3494 = vmatpush.bf16.msra.mxu0 0
        %3495 = vmatpush.bf16.msra.mxu0 0
        %3496 = vmatpush.bf16.msra.mxu0 %v3456
        %3497 = vmatpush.bf16.msra.mxu0 %v3454
        %3498 = vmatpush.bf16.msra.mxu0 %v3452
        %3499 = vmatpush.bf16.msra.mxu0 %v3450
        %3500 = vmatmul.bf16.gmra.mxu0 %v3468
        %v3501 = vpop.f32.mrf.mxu0
        %v3502 = vadd.f32 0.0, %v3501
        %v3503 = vpop.f32.mrf.mxu0
        %v3504 = vadd.f32 0.0, %v3503
        %3505 = vmatmul.bf16.gmra.mxu0 %v3471
        %v3506 = vpop.f32.mrf.mxu0
        %v3507 = vadd.f32 0.0, %v3506
        %v3508 = vpop.f32.mrf.mxu0
        %v3509 = vadd.f32 0.0, %v3508
        %3510 = vdwg.mxu0
        %v3511 = vadd.f32 %v3009, %v3483
        %v3512 = vadd.f32 %v3010, %v3502
        %v3513 = vadd.f32 %v3011, %v3485
        %v3514 = vadd.f32 %v3012, %v3504
        %v3515 = vadd.f32 %v3013, %v3488
        %v3516 = vadd.f32 %v3014, %v3507
        %v3517 = vadd.f32 %v3015, %v3490
        %v3518 = vadd.f32 %v3016, %v3509
        %v3519 = vld [vmem:[%s25] sm:$0xff]
        %v3520 = vld [vmem:[%s25 + $0x8] sm:$0xff]
        %v3521 = vld [vmem:[%s25 + $0x10] sm:$0xff]
        %v3522 = vld [vmem:[%s25 + $0x18] sm:$0xff]
        %3524 = vset.pattern.permute.xlu0 0
        %3525 = vperm.xlu0 %3524, %v3519
        %v3526 = vpop.permute.xlu0 %3525
        %3529 = vset.pattern.permute.xlu0 0
        %3530 = vperm.xlu0 %3529, %v3520
        %v3531 = vpop.permute.xlu0 %3530
        %3534 = vset.pattern.permute.xlu0 0
        %3535 = vperm.xlu0 %3534, %v3521
        %v3536 = vpop.permute.xlu0 %3535
        %3539 = vset.pattern.permute.xlu0 0
        %3540 = vperm.xlu0 %3539, %v3522
        %v3541 = vpop.permute.xlu0 %3540
        %v3543 = vadd.f32 %v3511, %v3526
        %v3544 = vadd.f32 %v3512, %v3526
        %v3545 = vadd.f32 %v3513, %v3531
        %v3546 = vadd.f32 %v3514, %v3531
        %v3547 = vadd.f32 %v3515, %v3536
        %v3548 = vadd.f32 %v3516, %v3536
        %v3549 = vadd.f32 %v3517, %v3541
        %v3550 = vadd.f32 %v3518, %v3541
        %3551 = vst [vmem:[%s801] sm:$0xff] %v3543
        %3552 = vst [vmem:[%s801 + $0x8] sm:$0xff] %v3544
        %3553 = vst [vmem:[%s801 + $0x10] sm:$0xff] %v3545
        %3554 = vst [vmem:[%s801 + $0x18] sm:$0xff] %v3546
        %3555 = vst [vmem:[%s801 + $0x20] sm:$0xff] %v3547
        %3556 = vst [vmem:[%s801 + $0x28] sm:$0xff] %v3548
        %3557 = vst [vmem:[%s801 + $0x30] sm:$0xff] %v3549
        %3558 = vst [vmem:[%s801 + $0x38] sm:$0xff] %v3550
        %s3559 = sand.u32 %s600, 1
        %s3560 = scalar_lea.sflag [#allocation4], %s3559
        %s3561 = sand.u32 %s600, 1
        %s3562 = smul.addr %s3561, 64
        %s3563 = scalar_lea.vmem [#allocation5], %s3562
        // Predicated region
        $region129: #{tpu_custom_call.1} parent=123 // pred_check
          %p3564 = pneg %p610
        $region130: #{tpu_custom_call.1} parent=123 // pred_check_branch
          %3566 = sbr.rel (%p3564) target = $region132
        $region131: #{tpu_custom_call.1} parent=123 // pred_region
          %3568 = vsyncadd %s3560, 0
          %s3569 = smul.addr %s41, 8
          %s3570 = smul.addr %s3569, 8
          %s3571 = scalar_lea.hbm %s26, %s3570
          %s3572 = sshll.u32 %s3563, 4
          %s3573 = int_to_ptr.vmem [resolvable:$true] %s3572
          %s3574 = sshll.u32 %s3571, 4
          %s3575 = int_to_ptr.hbm [resolvable:$true] %s3574
          %3580 = dma.vmem_to_hbm [thread:$0]  %s3573, 1024, %s3575, %s3560, 256, 256, 16
        $region132: #{tpu_custom_call.1} parent=123 // pred_fallthru
          _
      $region124: #{tpu_custom_call.1} parent=5 // pred_fallthru
        _
      %p3581 = scmp.le.s32.totalorder 2, %s36
      // Predicated region
      $region133: #{tpu_custom_call.1} parent=5 // pred_check
        %p3582 = pneg %p3581
      $region134: #{tpu_custom_call.1} parent=5 // pred_check_branch
        %3584 = sbr.rel (%p3582) target = $region136
      $region135: #{tpu_custom_call.1} parent=5 // pred_region
        %s3585 = ssub.s32 %s36, 2
        // Predicated region
        $region137: #{tpu_custom_call.1} parent=135 // pred_check
          %p3586 = pneg %p616
        $region138: #{tpu_custom_call.1} parent=135 // pred_check_branch
          %3588 = sbr.rel (%p3586) target = $region140
        $region139: #{tpu_custom_call.1} parent=135 // pred_region
          %s3589 = sand.u32 %s601, 1
          %s3590 = scalar_lea.sflag [#allocation4], %s3589
          %s3591 = sand.u32 %s601, 1
          %s3592 = smul.addr %s3591, 64
          %s3593 = scalar_lea.vmem [#allocation5], %s3592
          %3595 = dma.done %s3590, 1024
        $region140: #{tpu_custom_call.1} parent=135 // pred_fallthru
          _
      $region136: #{tpu_custom_call.1} parent=5 // pred_fallthru
        _
    $region6: #{tpu_custom_call.1} parent=1 // loop_footer
      %s40 = sadd.s32 1, %s36
    $region7: #{tpu_custom_call.1} parent=1 // loop_footer_branch
      %35 = sbr.rel target = $region3
    $region8: #{tpu_custom_call.1} parent=1 // loop_exit
      _
    %3596 = vsyncpa [#allocation3], 1
    %s3597 = scalar_lea.sflag [#allocation3], 1
    %3598 = vsyncpa %s3597, 1
    %3599 = vsyncpa [#allocation4], 1
    %s3600 = scalar_lea.sflag [#allocation4], 1
    %3601 = vsyncpa %s3600, 1

</llo_original>
